<compile_context>
chip_gen: v6e
topology: v6e:2x2x1
jax: 0.10.0
libtpu: 0.0.40
codegen_flags: <defaults>
</compile_context>

<pallas_src>
import math

import jax
import jax.numpy as jnp
from jax.experimental import pallas as pl
from jax.experimental.pallas import tpu as pltpu

EPS = 1e-5
LEAKY_SLOPE = 0.01  # TODO(synk): layers.my_leaky_relu slope unknown; using F.leaky_relu default 0.01

WEIGHT_ORDER = ["ln_g_conv", "ln_b_conv", "w_dw", "b_dw", "w_pw", "b_pw",
                "ln_g_att", "ln_b_att", "w_qkv", "w_out",
                "ln_g_ff", "ln_b_ff", "w_ff"]
MM_WEIGHTS = frozenset({"w_pw", "w_qkv", "w_out", "w_ff"})  # fed to the MXU


def _layer_norm(v, g, b):
    mu = jnp.mean(v, axis=-1, keepdims=True)
    var = jnp.mean((v - mu) ** 2, axis=-1, keepdims=True)
    return (v - mu) * jax.lax.rsqrt(var + EPS) * g + b


def _shift_seq(v, d, axis):
    """Reference helper: shifted[l] = v[l + d] along `axis`, zero outside [0, L)."""
    if d == 0:
        return v
    L = v.shape[axis]
    zshape = list(v.shape)
    zshape[axis] = abs(d)
    z = jnp.zeros(zshape, v.dtype)
    if d > 0:
        sl = jax.lax.slice_in_dim(v, d, L, axis=axis)
        return jnp.concatenate([sl, z], axis=axis)
    sl = jax.lax.slice_in_dim(v, 0, L + d, axis=axis)
    return jnp.concatenate([z, sl], axis=axis)


# ---------------------------------------------------------------------------
# Pallas kernel: one QANet encoder block for `block_b` sequences per grid step.
# ---------------------------------------------------------------------------
def make_encoder_block_kernel(L, H, K, num_conv, nh, drop_probs, block_b, mm_dtype):
    dh = H // nh
    pad = (K - 1) // 2
    scale = 1.0 / math.sqrt(dh)
    btl = block_b * L

    def mm(a, w):  # MXU matmul with f32 accumulation; operands in mm_dtype
        return jnp.dot(a.astype(mm_dtype), w.astype(mm_dtype),
                       preferred_element_type=jnp.float32)

    def kernel(x_ref, m_ref, kbias_ref, pe_ref,
               ln_g_conv_ref, ln_b_conv_ref, w_dw_ref, b_dw_ref,
               w_pw_ref, b_pw_ref,
               ln_g_att_ref, ln_b_att_ref, w_qkv_ref, w_out_ref,
               ln_g_ff_ref, ln_b_ff_ref, w_ff_ref,
               out_ref, ctx_ref):
        m = m_ref[...]                                  # (btl, 1) 0/1 mask
        x = (x_ref[...] + pe_ref[...]) * m              # (btl, H) f32

        # within-sequence position of each flattened row (conv boundary masking)
        pos = jax.lax.broadcasted_iota(jnp.int32, (btl, 1), 0) % L

        # ---- depthwise-separable conv sub-layers ----
        for i in range(num_conv):
            xt = _layer_norm(x, ln_g_conv_ref[i:i + 1, :], ln_b_conv_ref[i:i + 1, :]) * m
            w_dw = w_dw_ref[i]                          # (K, H) f32
            acc = jnp.zeros((btl, H), jnp.float32) + b_dw_ref[i:i + 1, :]
            for j in range(K):
                d = j - pad
                if d == 0:
                    shifted = xt
                else:
                    # rotate on the XLU, then zero rows whose tap falls outside
                    # this row's own sequence (also kills cross-sequence leakage).
                    rolled = pltpu.roll(xt, shift=(-d) % btl, axis=0)
                    valid = jnp.logical_and(pos + d >= 0, pos + d < L)
                    shifted = jnp.where(valid, rolled, 0.0)
                acc = acc + w_dw[j:j + 1, :] * shifted
            y = acc * m
            y = (mm(y, w_pw_ref[i]) + b_pw_ref[i:i + 1, :]) * m   # pointwise conv
            # F.dropout identity in eval; stochastic-depth eval: x + (1-p)*y
            x = x + (1.0 - drop_probs[i]) * y

        # ---- multi-head self-attention sub-layer ----
        xt = _layer_norm(x, ln_g_att_ref[...], ln_b_att_ref[...]) * m
        qkv = mm(xt, w_qkv_ref[...])                    # (btl, 3H) fused QKV projection
        kb3 = kbias_ref[...]                            # (block_b, 1, L) additive key bias
        for bi in range(block_b):
            r0 = bi * L
            kb = kb3[bi]                                # (1, L)
            for h in range(nh):
                c0 = h * dh
                qh = qkv[r0:r0 + L, c0:c0 + dh]
                kh = qkv[r0:r0 + L, H + c0:H + c0 + dh]
                vh = qkv[r0:r0 + L, 2 * H + c0:2 * H + c0 + dh]
                s = jax.lax.dot_general(
                    qh.astype(mm_dtype), kh.astype(mm_dtype),
                    (((1,), (1,)), ((), ())),
                    preferred_element_type=jnp.float32) * scale + kb
                s = s - jnp.max(s, axis=-1, keepdims=True)
                e = jnp.exp(s)
                pa = e * pl.reciprocal(jnp.sum(e, axis=-1, keepdims=True), approx=True)
                ctx = jnp.dot(pa.astype(mm_dtype), vh.astype(mm_dtype),
                              preferred_element_type=jnp.float32)
                ctx_ref[r0:r0 + L, c0:c0 + dh] = ctx.astype(ctx_ref.dtype)
        # single full-width output projection over all heads / sequences;
        # the module's `out*mask_qry` then `*x_mask` collapses to one multiply (0/1 mask).
        att = mm(ctx_ref[...], w_out_ref[...]) * m
        x = x + (1.0 - drop_probs[num_conv]) * att

        # ---- feed-forward sub-layer (same Linear applied twice, bias=False) ----
        xt = _layer_norm(x, ln_g_ff_ref[...], ln_b_ff_ref[...]) * m
        w_ff = w_ff_ref[...]
        y = mm(xt, w_ff)
        y = jnp.where(y > 0.0, y, LEAKY_SLOPE * y) * m
        y = mm(y, w_ff) * m
        x = x + (1.0 - drop_probs[num_conv + 1]) * y

        out_ref[...] = x

    return kernel


# ---------------------------------------------------------------------------
# pallas_call wrapper for one encoder block (activations pre-flattened to (B*L, H)).
# ---------------------------------------------------------------------------
def _pick_block_b(B, L):
    # smallest divisor of B whose row block reaches >=128 sublanes, else all of B.
    for bb in range(1, B + 1):
        if B % bb == 0 and bb * L >= 128:
            return bb
    return B


def encoder_block_pallas(x2, m2, kbias, pe, params, drop_probs, K, nh, L,
                         block_b=None, mm_dtype=jnp.float32):
    BL, H = x2.shape
    B = kbias.shape[0]
    num_conv = params["ln_g_conv"].shape[0]
    if block_b is None:
        block_b = _pick_block_b(B, L)
    assert B % block_b == 0, "batch must be divisible by block_b"
    btl = block_b * L

    kernel = make_encoder_block_kernel(L, H, K, num_conv, nh, drop_probs,
                                       block_b, mm_dtype)

    # Pre-cast MXU weights host-side (halves weight DMA/VMEM in bf16 mode).
    weights = [params[k].astype(mm_dtype) if k in MM_WEIGHTS else params[k]
               for k in WEIGHT_ORDER]
    pe_t = jnp.tile(pe, (block_b, 1))        # (btl, H), same tile every grid step

    # TODO(synk): at production H, mark the grid-invariant weight specs
    #             pipeline_mode=pl.Buffered(1) (and set vmem_limit_bytes) so they
    #             are not double-buffered against v7x's 64 MiB VMEM.
    def full_spec(a):
        n = a.ndim
        return pl.BlockSpec(a.shape, lambda g, _n=n: (0,) * _n)

    in_specs = [
        pl.BlockSpec((btl, H), lambda g: (g, 0)),            # x rows for this block
        pl.BlockSpec((btl, 1), lambda g: (g, 0)),            # 0/1 mask column
        pl.BlockSpec((block_b, 1, L), lambda g: (g, 0, 0)),  # additive key-padding bias
        pl.BlockSpec((btl, H), lambda g: (0, 0)),            # tiled positional encoding
    ] + [full_spec(w) for w in weights]

    # Advisory cost estimate for the XLA scheduler.
    def nbytes(a):
        return int(a.size) * a.dtype.itemsize
    flops_per_elem = (num_conv * (2 * L * H * K + 2 * L * H * H)   # dw + pw conv
                      + 2 * L * H * 3 * H                          # fused QKV
                      + 4 * L * L * H                              # scores + ctx
                      + 2 * L * H * H                              # Wo
                      + 4 * L * H * H)                             # FF (twice)
    cost = pl.CostEstimate(
        flops=int(B * flops_per_elem),
        transcendentals=int(B * (nh * L * L + nh * L + (num_conv + 2) * L)),
        bytes_accessed=int(2 * nbytes(x2) + nbytes(m2) + nbytes(kbias)
                           + nbytes(pe_t) + sum(nbytes(w) for w in weights)),
    )

    return pl.pallas_call(
        kernel,
        out_shape=jax.ShapeDtypeStruct((BL, H), jnp.float32),
        grid=(B // block_b,),
        in_specs=in_specs,
        out_specs=pl.BlockSpec((btl, H), lambda g: (g, 0)),
        scratch_shapes=[pltpu.VMEM((btl, H), mm_dtype)],      # concatenated head contexts
        compiler_params=pltpu.CompilerParams(
            dimension_semantics=("parallel",)),               # batch blocks are independent
        cost_estimate=cost,
    )(x2, m2, kbias, pe_t, *weights)


# ---------------------------------------------------------------------------
# Pure-JAX reference (same math, batched) for verification.
# ---------------------------------------------------------------------------
def encoder_block_ref(x, mcol, kbias, pe, params, drop_probs, K, nh, mm_dtype):
    B, L, H = x.shape
    num_conv = params["ln_g_conv"].shape[0]
    dh = H // nh
    pad = (K - 1) // 2
    scale = 1.0 / math.sqrt(dh)

    def mm(a, w):
        return jnp.matmul(a.astype(mm_dtype), w.astype(mm_dtype),
                          preferred_element_type=jnp.float32)

    x = (x + pe[None]) * mcol
    for i in range(num_conv):
        xt = _layer_norm(x, params["ln_g_conv"][i], params["ln_b_conv"][i]) * mcol
        acc = jnp.zeros_like(xt) + params["b_dw"][i]
        for j in range(K):
            d = j - pad
            acc = acc + params["w_dw"][i, j] * _shift_seq(xt, d, axis=1)
        y = acc * mcol
        y = (mm(y, params["w_pw"][i]) + params["b_pw"][i]) * mcol
        x = x + (1.0 - drop_probs[i]) * y

    xt = _layer_norm(x, params["ln_g_att"][0], params["ln_b_att"][0]) * mcol
    qkv = mm(xt, params["w_qkv"])                       # (B, L, 3H)
    q = qkv[..., :H].reshape(B, L, nh, dh)
    k = qkv[..., H:2 * H].reshape(B, L, nh, dh)
    v = qkv[..., 2 * H:].reshape(B, L, nh, dh)
    s = jnp.einsum("blhd,bmhd->bhlm", q.astype(mm_dtype), k.astype(mm_dtype),
                   preferred_element_type=jnp.float32) * scale
    s = s + kbias[:, :, None, :]
    a = jax.nn.softmax(s, axis=-1)
    ctx = jnp.einsum("bhlm,bmhd->blhd", a.astype(mm_dtype), v.astype(mm_dtype),
                     preferred_element_type=jnp.float32).reshape(B, L, H)
    att = mm(ctx, params["w_out"]) * mcol
    x = x + (1.0 - drop_probs[num_conv]) * att

    xt = _layer_norm(x, params["ln_g_ff"][0], params["ln_b_ff"][0]) * mcol
    y = mm(xt, params["w_ff"])
    y = jnp.where(y > 0.0, y, LEAKY_SLOPE * y) * mcol
    y = mm(y, params["w_ff"]) * mcol
    x = x + (1.0 - drop_probs[num_conv + 1]) * y
    return x


# ---------------------------------------------------------------------------
# Parameter init / positional encoding / full transformer.
# ---------------------------------------------------------------------------
def positional_encoding(L, H):
    pos = jnp.arange(L, dtype=jnp.float32)[:, None]
    div = jnp.exp(jnp.arange(0, H, 2, dtype=jnp.float32) * (-math.log(10000.0) / H))
    pe = jnp.zeros((L, H), jnp.float32)
    pe = pe.at[:, 0::2].set(jnp.sin(pos * div))
    pe = pe.at[:, 1::2].set(jnp.cos(pos * div))
    return pe


def init_block_params(key, H, K, num_conv, nh):
    ks = jax.random.split(key, 7)

    def rnd(k, shape, s=0.1):
        return jax.random.normal(k, shape, jnp.float32) * s

    return {
        "ln_g_conv": jnp.ones((num_conv, H), jnp.float32),
        "ln_b_conv": jnp.zeros((num_conv, H), jnp.float32),
        "w_dw": rnd(ks[0], (num_conv, K, H)),          # depthwise conv taps (per channel)
        "b_dw": rnd(ks[1], (num_conv, H), 0.02),
        "w_pw": rnd(ks[2], (num_conv, H, H)),          # pointwise conv, stored as W^T
        "b_pw": rnd(ks[3], (num_conv, H), 0.02),
        "ln_g_att": jnp.ones((1, H), jnp.float32),
        "ln_b_att": jnp.zeros((1, H), jnp.float32),
        "w_qkv": rnd(ks[4], (H, 3 * H)),               # fused in_proj_weight^T (q|k|v columns)
        "w_out": rnd(ks[5], (H, H)),                   # out_proj.weight^T
        "ln_g_ff": jnp.ones((1, H), jnp.float32),
        "ln_b_ff": jnp.zeros((1, H), jnp.float32),
        "w_ff": rnd(ks[6], (H, H)),                    # feed_fwd Linear (bias=False), W^T
    }


def qanet_transformer(x, x_mask, params_list, K, nh, num_conv, stoch_drop,
                      use_ref=False, block_b=None, mm_dtype=jnp.float32):
    B, L, H = x.shape
    num_blocks = len(params_list)
    tot_sub = (num_conv + 2) * num_blocks
    mcol = x_mask[:, :, None].astype(jnp.float32)                           # (B, L, 1)
    kbias = jnp.where(x_mask > 0, 0.0, -1e30)[:, None, :].astype(jnp.float32)  # (B, 1, L)
    pe = positional_encoding(L, H)

    if use_ref:
        for bnum, params in enumerate(params_list):
            base = (num_conv + 2) * bnum
            dps = tuple(stoch_drop * float(base + j) / tot_sub
                        for j in range(num_conv + 2))
            x = encoder_block_ref(x, mcol, kbias, pe, params, dps, K, nh, mm_dtype)
        return x

    # Flatten once wrapper-side so the kernel works on a lane/sublane-dense slab.
    x2 = x.reshape(B * L, H)
    m2 = mcol.reshape(B * L, 1)
    for bnum, params in enumerate(params_list):
        base = (num_conv + 2) * bnum
        dps = tuple(stoch_drop * float(base + j) / tot_sub
                    for j in range(num_conv + 2))
        x2 = encoder_block_pallas(x2, m2, kbias, pe, params, dps, K, nh, L,
                                  block_b=block_b, mm_dtype=mm_dtype)
    return x2.reshape(B, L, H)


if __name__ == "__main__":
    # small shapes consistent with the module's forward
    B, L, H = 4, 16, 32
    K = 5                 # conv kernel size
    num_conv = 2          # conv layers per encoder block
    num_blocks = 2        # encoder blocks
    nh = 4                # attention heads
    stoch_drop = 0.1      # stochastic depth drop prob (eval-mode formula used)

    key = jax.random.PRNGKey(0)
    kx, kp = jax.random.split(key, 2)
    x = jax.random.normal(kx, (B, L, H), jnp.float32)
    lengths = jnp.array([L, 11, 16, 7], jnp.int32)
    x_mask = (jnp.arange(L)[None, :] < lengths[:, None]).astype(jnp.float32)  # (B, L)

    params_list = [init_block_params(jax.random.fold_in(kp, blk), H, K, num_conv, nh)
                   for blk in range(num_blocks)]

    # f32 reference
    ref = qanet_transformer(x, x_mask, params_list, K, nh, num_conv, stoch_drop,
                            use_ref=True)
    ref = jax.block_until_ready(ref)

    # f32 Pallas kernel, 2 sequences per grid step (grid=(2,), "parallel" axis).
    out = qanet_transformer(x, x_mask, params_list, K, nh, num_conv, stoch_drop,
                            block_b=2, mm_dtype=jnp.float32)
    out = jax.block_until_ready(out)
    assert out.shape == (B, L, H)
    # tolerance covers the EUP approximate reciprocal in the softmax
    assert bool(jnp.allclose(out, ref, atol=5e-3, rtol=5e-3)), "f32 kernel mismatch"

    # bf16-matmul path (MXU-friendly on v5e/v6e/v7x), checked vs a bf16 reference.
    out_bf16 = qanet_transformer(x, x_mask, params_list, K, nh, num_conv, stoch_drop,
                                 block_b=2, mm_dtype=jnp.bfloat16)
    out_bf16 = jax.block_until_ready(out_bf16)
    ref_bf16 = qanet_transformer(x, x_mask, params_list, K, nh, num_conv, stoch_drop,
                                 use_ref=True, mm_dtype=jnp.bfloat16)
    ref_bf16 = jax.block_until_ready(ref_bf16)
    assert bool(jnp.allclose(out_bf16, ref_bf16, atol=2e-2, rtol=2e-2)), "bf16 kernel mismatch"

    print("KERNEL_OK")
</pallas_src>

<mosaic_0001>
module attributes {stable_mosaic.version = 11 : i64} {
  func.func @kernel(%arg0: i32, %arg1: memref<32x32xf32, #tpu.memory_space<vmem>>, %arg2: memref<32x1xf32, #tpu.memory_space<vmem>>, %arg3: memref<2x1x16xf32, #tpu.memory_space<vmem>>, %arg4: memref<32x32xf32, #tpu.memory_space<vmem>>, %arg5: memref<2x32xf32, #tpu.memory_space<vmem>>, %arg6: memref<2x32xf32, #tpu.memory_space<vmem>>, %arg7: memref<2x5x32xf32, #tpu.memory_space<vmem>>, %arg8: memref<2x32xf32, #tpu.memory_space<vmem>>, %arg9: memref<2x32x32xf32, #tpu.memory_space<vmem>>, %arg10: memref<2x32xf32, #tpu.memory_space<vmem>>, %arg11: memref<1x32xf32, #tpu.memory_space<vmem>>, %arg12: memref<1x32xf32, #tpu.memory_space<vmem>>, %arg13: memref<32x96xf32, #tpu.memory_space<vmem>>, %arg14: memref<32x32xf32, #tpu.memory_space<vmem>>, %arg15: memref<1x32xf32, #tpu.memory_space<vmem>>, %arg16: memref<1x32xf32, #tpu.memory_space<vmem>>, %arg17: memref<32x32xf32, #tpu.memory_space<vmem>>, %arg18: memref<32x32xf32, #tpu.memory_space<vmem>>, %arg19: memref<32x32xf32, #tpu.memory_space<vmem>>) attributes {dimension_semantics = [#tpu.dimension_semantics<parallel>], iteration_bounds = array<i64: 2>, scalar_prefetch = 0 : i64, scratch_operands = 1 : i64, tpu.core_type = #tpu.core_type<tc>, window_params = [{transform_indices = @transform_0, window_bounds = array<i64: 32, 32>}, {transform_indices = @transform_1, window_bounds = array<i64: 32, 1>}, {transform_indices = @transform_2, window_bounds = array<i64: 2, 1, 16>}, {pipeline_mode = #tpu.pipeline_mode<synchronous>, transform_indices = @transform_3, window_bounds = array<i64: 32, 32>}, {pipeline_mode = #tpu.pipeline_mode<synchronous>, transform_indices = @transform_4, window_bounds = array<i64: 2, 32>}, {pipeline_mode = #tpu.pipeline_mode<synchronous>, transform_indices = @transform_5, window_bounds = array<i64: 2, 32>}, {pipeline_mode = #tpu.pipeline_mode<synchronous>, transform_indices = @transform_6, window_bounds = array<i64: 2, 5, 32>}, {pipeline_mode = #tpu.pipeline_mode<synchronous>, transform_indices = @transform_7, window_bounds = array<i64: 2, 32>}, {pipeline_mode = #tpu.pipeline_mode<synchronous>, transform_indices = @transform_8, window_bounds = array<i64: 2, 32, 32>}, {pipeline_mode = #tpu.pipeline_mode<synchronous>, transform_indices = @transform_9, window_bounds = array<i64: 2, 32>}, {pipeline_mode = #tpu.pipeline_mode<synchronous>, transform_indices = @transform_10, window_bounds = array<i64: 1, 32>}, {pipeline_mode = #tpu.pipeline_mode<synchronous>, transform_indices = @transform_11, window_bounds = array<i64: 1, 32>}, {pipeline_mode = #tpu.pipeline_mode<synchronous>, transform_indices = @transform_12, window_bounds = array<i64: 32, 96>}, {pipeline_mode = #tpu.pipeline_mode<synchronous>, transform_indices = @transform_13, window_bounds = array<i64: 32, 32>}, {pipeline_mode = #tpu.pipeline_mode<synchronous>, transform_indices = @transform_14, window_bounds = array<i64: 1, 32>}, {pipeline_mode = #tpu.pipeline_mode<synchronous>, transform_indices = @transform_15, window_bounds = array<i64: 1, 32>}, {pipeline_mode = #tpu.pipeline_mode<synchronous>, transform_indices = @transform_16, window_bounds = array<i64: 32, 32>}, {transform_indices = @transform_17, window_bounds = array<i64: 32, 32>}]} {
    %c0 = arith.constant 0 : index
    %c0_0 = arith.constant 0 : index
    %0 = vector.load %arg2[%c0, %c0_0] : memref<32x1xf32, #tpu.memory_space<vmem>>, vector<32x1xf32>
    %c0_1 = arith.constant 0 : index
    %c0_2 = arith.constant 0 : index
    %1 = vector.load %arg1[%c0_1, %c0_2] : memref<32x32xf32, #tpu.memory_space<vmem>>, vector<32x32xf32>
    %c0_3 = arith.constant 0 : index
    %c0_4 = arith.constant 0 : index
    %2 = vector.load %arg4[%c0_3, %c0_4] : memref<32x32xf32, #tpu.memory_space<vmem>>, vector<32x32xf32>
    %3 = arith.addf %1, %2 : vector<32x32xf32>
    %4 = vector.broadcast %0 : vector<32x1xf32> to vector<32x32xf32>
    %5 = arith.mulf %3, %4 : vector<32x32xf32>
    %6 = tpu.iota {dimensions = array<i32: 0>} : vector<32x1xi32>
    %c16_i32 = arith.constant 16 : i32
    %c0_i32 = arith.constant 0 : i32
    %7 = arith.cmpi eq, %c16_i32, %c0_i32 : i32
    %c1_i32 = arith.constant 1 : i32
    %8 = arith.select %7, %c1_i32, %c16_i32 : i32
    %9 = vector.broadcast %8 : i32 to vector<32x1xi32>
    %10 = arith.remsi %6, %9 : vector<32x1xi32>
    %c0_i32_5 = arith.constant 0 : i32
    %11 = vector.broadcast %c0_i32_5 : i32 to vector<32x1xi32>
    %12 = arith.cmpi ne, %10, %11 : vector<32x1xi32>
    %c0_i32_6 = arith.constant 0 : i32
    %13 = vector.broadcast %c0_i32_6 : i32 to vector<32x1xi32>
    %14 = arith.cmpi slt, %10, %13 : vector<32x1xi32>
    %c0_i32_7 = arith.constant 0 : i32
    %15 = arith.cmpi slt, %8, %c0_i32_7 : i32
    %16 = vector.broadcast %15 : i1 to vector<32x1xi1>
    %17 = vector.broadcast %16 : vector<32x1xi1> to vector<32x1xi1>
    %18 = arith.xori %14, %17 : vector<32x1xi1>
    %19 = arith.andi %18, %12 : vector<32x1xi1>
    %20 = vector.broadcast %8 : i32 to vector<32x1xi32>
    %21 = arith.addi %10, %20 : vector<32x1xi32>
    %22 = arith.select %19, %21, %10 : vector<32x1xi1>, vector<32x1xi32>
    %c0_8 = arith.constant 0 : index
    %c0_9 = arith.constant 0 : index
    %23 = vector.load %arg5[%c0_8, %c0_9] : memref<2x32xf32, #tpu.memory_space<vmem>>, vector<1x32xf32>
    %c0_10 = arith.constant 0 : index
    %c0_11 = arith.constant 0 : index
    %24 = vector.load %arg6[%c0_10, %c0_11] : memref<2x32xf32, #tpu.memory_space<vmem>>, vector<1x32xf32>
    %cst = arith.constant dense<0.000000e+00> : vector<32xf32>
    %25 = vector.multi_reduction <add>, %5, %cst [1] : vector<32x32xf32> to vector<32xf32>
    %26 = vector.shape_cast %25 : vector<32xf32> to vector<32x1xf32>
    %cst_12 = arith.constant 3.200000e+01 : f32
    %27 = vector.broadcast %cst_12 : f32 to vector<32x1xf32>
    %28 = arith.divf %26, %27 : vector<32x1xf32>
    %29 = vector.broadcast %28 : vector<32x1xf32> to vector<32x32xf32>
    %30 = arith.subf %5, %29 : vector<32x32xf32>
    %31 = arith.mulf %30, %30 : vector<32x32xf32>
    %cst_13 = arith.constant dense<0.000000e+00> : vector<32xf32>
    %32 = vector.multi_reduction <add>, %31, %cst_13 [1] : vector<32x32xf32> to vector<32xf32>
    %33 = vector.shape_cast %32 : vector<32xf32> to vector<32x1xf32>
    %cst_14 = arith.constant 3.200000e+01 : f32
    %34 = vector.broadcast %cst_14 : f32 to vector<32x1xf32>
    %35 = arith.divf %33, %34 : vector<32x1xf32>
    %36 = vector.broadcast %28 : vector<32x1xf32> to vector<32x32xf32>
    %37 = arith.subf %5, %36 : vector<32x32xf32>
    %cst_15 = arith.constant 9.99999974E-6 : f32
    %38 = vector.broadcast %cst_15 : f32 to vector<32x1xf32>
    %39 = arith.addf %35, %38 : vector<32x1xf32>
    %40 = math.rsqrt %39 : vector<32x1xf32>
    %41 = vector.broadcast %40 : vector<32x1xf32> to vector<32x32xf32>
    %42 = arith.mulf %37, %41 : vector<32x32xf32>
    %43 = vector.broadcast %23 : vector<1x32xf32> to vector<32x32xf32>
    %44 = arith.mulf %42, %43 : vector<32x32xf32>
    %45 = vector.broadcast %24 : vector<1x32xf32> to vector<32x32xf32>
    %46 = arith.addf %44, %45 : vector<32x32xf32>
    %47 = vector.broadcast %0 : vector<32x1xf32> to vector<32x32xf32>
    %48 = arith.mulf %46, %47 : vector<32x32xf32>
    %c0_16 = arith.constant 0 : index
    %c0_17 = arith.constant 0 : index
    %c0_18 = arith.constant 0 : index
    %49 = vector.load %arg7[%c0_16, %c0_17, %c0_18] : memref<2x5x32xf32, #tpu.memory_space<vmem>>, vector<1x5x32xf32>
    %50 = vector.shape_cast %49 : vector<1x5x32xf32> to vector<5x32xf32>
    %cst_19 = arith.constant 0.000000e+00 : f32
    %51 = vector.broadcast %cst_19 : f32 to vector<32x32xf32>
    %c0_20 = arith.constant 0 : index
    %c0_21 = arith.constant 0 : index
    %52 = vector.load %arg8[%c0_20, %c0_21] : memref<2x32xf32, #tpu.memory_space<vmem>>, vector<1x32xf32>
    %53 = vector.broadcast %52 : vector<1x32xf32> to vector<32x32xf32>
    %54 = arith.addf %51, %53 : vector<32x32xf32>
    %c2_i32 = arith.constant 2 : i32
    %55 = tpu.dynamic_rotate %48 by %c2_i32 dim 0 : vector<32x32xf32>, i32 -> vector<32x32xf32>
    %c-2_i32 = arith.constant -2 : i32
    %56 = vector.broadcast %c-2_i32 : i32 to vector<32x1xi32>
    %57 = arith.addi %22, %56 : vector<32x1xi32>
    %c0_i32_22 = arith.constant 0 : i32
    %58 = vector.broadcast %c0_i32_22 : i32 to vector<32x1xi32>
    %59 = arith.cmpi sge, %57, %58 : vector<32x1xi32>
    %c-2_i32_23 = arith.constant -2 : i32
    %60 = vector.broadcast %c-2_i32_23 : i32 to vector<32x1xi32>
    %61 = arith.addi %22, %60 : vector<32x1xi32>
    %c16_i32_24 = arith.constant 16 : i32
    %62 = vector.broadcast %c16_i32_24 : i32 to vector<32x1xi32>
    %63 = arith.cmpi slt, %61, %62 : vector<32x1xi32>
    %64 = arith.andi %59, %63 : vector<32x1xi1>
    %cst_25 = arith.constant 0.000000e+00 : f32
    %65 = vector.shape_cast %64 : vector<32x1xi1> to vector<32x1xi1>
    %66 = vector.broadcast %65 : vector<32x1xi1> to vector<32x32xi1>
    %67 = vector.broadcast %cst_25 : f32 to vector<32x32xf32>
    %68 = arith.select %66, %55, %67 : vector<32x32xi1>, vector<32x32xf32>
    %69 = vector.extract_strided_slice %50 {offsets = [0, 0], sizes = [1, 32], strides = [1, 1]} : vector<5x32xf32> to vector<1x32xf32>
    %70 = vector.broadcast %69 : vector<1x32xf32> to vector<32x32xf32>
    %71 = arith.mulf %70, %68 : vector<32x32xf32>
    %72 = arith.addf %54, %71 : vector<32x32xf32>
    %c1_i32_26 = arith.constant 1 : i32
    %73 = tpu.dynamic_rotate %48 by %c1_i32_26 dim 0 : vector<32x32xf32>, i32 -> vector<32x32xf32>
    %c-1_i32 = arith.constant -1 : i32
    %74 = vector.broadcast %c-1_i32 : i32 to vector<32x1xi32>
    %75 = arith.addi %22, %74 : vector<32x1xi32>
    %c0_i32_27 = arith.constant 0 : i32
    %76 = vector.broadcast %c0_i32_27 : i32 to vector<32x1xi32>
    %77 = arith.cmpi sge, %75, %76 : vector<32x1xi32>
    %c-1_i32_28 = arith.constant -1 : i32
    %78 = vector.broadcast %c-1_i32_28 : i32 to vector<32x1xi32>
    %79 = arith.addi %22, %78 : vector<32x1xi32>
    %c16_i32_29 = arith.constant 16 : i32
    %80 = vector.broadcast %c16_i32_29 : i32 to vector<32x1xi32>
    %81 = arith.cmpi slt, %79, %80 : vector<32x1xi32>
    %82 = arith.andi %77, %81 : vector<32x1xi1>
    %cst_30 = arith.constant 0.000000e+00 : f32
    %83 = vector.shape_cast %82 : vector<32x1xi1> to vector<32x1xi1>
    %84 = vector.broadcast %83 : vector<32x1xi1> to vector<32x32xi1>
    %85 = vector.broadcast %cst_30 : f32 to vector<32x32xf32>
    %86 = arith.select %84, %73, %85 : vector<32x32xi1>, vector<32x32xf32>
    %87 = vector.extract_strided_slice %50 {offsets = [1, 0], sizes = [1, 32], strides = [1, 1]} : vector<5x32xf32> to vector<1x32xf32>
    %88 = vector.broadcast %87 : vector<1x32xf32> to vector<32x32xf32>
    %89 = arith.mulf %88, %86 : vector<32x32xf32>
    %90 = arith.addf %72, %89 : vector<32x32xf32>
    %91 = vector.extract_strided_slice %50 {offsets = [2, 0], sizes = [1, 32], strides = [1, 1]} : vector<5x32xf32> to vector<1x32xf32>
    %92 = vector.broadcast %91 : vector<1x32xf32> to vector<32x32xf32>
    %93 = arith.mulf %92, %48 : vector<32x32xf32>
    %94 = arith.addf %90, %93 : vector<32x32xf32>
    %c31_i32 = arith.constant 31 : i32
    %95 = tpu.dynamic_rotate %48 by %c31_i32 dim 0 : vector<32x32xf32>, i32 -> vector<32x32xf32>
    %c1_i32_31 = arith.constant 1 : i32
    %96 = vector.broadcast %c1_i32_31 : i32 to vector<32x1xi32>
    %97 = arith.addi %22, %96 : vector<32x1xi32>
    %c0_i32_32 = arith.constant 0 : i32
    %98 = vector.broadcast %c0_i32_32 : i32 to vector<32x1xi32>
    %99 = arith.cmpi sge, %97, %98 : vector<32x1xi32>
    %c1_i32_33 = arith.constant 1 : i32
    %100 = vector.broadcast %c1_i32_33 : i32 to vector<32x1xi32>
    %101 = arith.addi %22, %100 : vector<32x1xi32>
    %c16_i32_34 = arith.constant 16 : i32
    %102 = vector.broadcast %c16_i32_34 : i32 to vector<32x1xi32>
    %103 = arith.cmpi slt, %101, %102 : vector<32x1xi32>
    %104 = arith.andi %99, %103 : vector<32x1xi1>
    %cst_35 = arith.constant 0.000000e+00 : f32
    %105 = vector.shape_cast %104 : vector<32x1xi1> to vector<32x1xi1>
    %106 = vector.broadcast %105 : vector<32x1xi1> to vector<32x32xi1>
    %107 = vector.broadcast %cst_35 : f32 to vector<32x32xf32>
    %108 = arith.select %106, %95, %107 : vector<32x32xi1>, vector<32x32xf32>
    %109 = vector.extract_strided_slice %50 {offsets = [3, 0], sizes = [1, 32], strides = [1, 1]} : vector<5x32xf32> to vector<1x32xf32>
    %110 = vector.broadcast %109 : vector<1x32xf32> to vector<32x32xf32>
    %111 = arith.mulf %110, %108 : vector<32x32xf32>
    %112 = arith.addf %94, %111 : vector<32x32xf32>
    %c30_i32 = arith.constant 30 : i32
    %113 = tpu.dynamic_rotate %48 by %c30_i32 dim 0 : vector<32x32xf32>, i32 -> vector<32x32xf32>
    %c2_i32_36 = arith.constant 2 : i32
    %114 = vector.broadcast %c2_i32_36 : i32 to vector<32x1xi32>
    %115 = arith.addi %22, %114 : vector<32x1xi32>
    %c0_i32_37 = arith.constant 0 : i32
    %116 = vector.broadcast %c0_i32_37 : i32 to vector<32x1xi32>
    %117 = arith.cmpi sge, %115, %116 : vector<32x1xi32>
    %c2_i32_38 = arith.constant 2 : i32
    %118 = vector.broadcast %c2_i32_38 : i32 to vector<32x1xi32>
    %119 = arith.addi %22, %118 : vector<32x1xi32>
    %c16_i32_39 = arith.constant 16 : i32
    %120 = vector.broadcast %c16_i32_39 : i32 to vector<32x1xi32>
    %121 = arith.cmpi slt, %119, %120 : vector<32x1xi32>
    %122 = arith.andi %117, %121 : vector<32x1xi1>
    %cst_40 = arith.constant 0.000000e+00 : f32
    %123 = vector.shape_cast %122 : vector<32x1xi1> to vector<32x1xi1>
    %124 = vector.broadcast %123 : vector<32x1xi1> to vector<32x32xi1>
    %125 = vector.broadcast %cst_40 : f32 to vector<32x32xf32>
    %126 = arith.select %124, %113, %125 : vector<32x32xi1>, vector<32x32xf32>
    %127 = vector.extract_strided_slice %50 {offsets = [4, 0], sizes = [1, 32], strides = [1, 1]} : vector<5x32xf32> to vector<1x32xf32>
    %128 = vector.broadcast %127 : vector<1x32xf32> to vector<32x32xf32>
    %129 = arith.mulf %128, %126 : vector<32x32xf32>
    %130 = arith.addf %112, %129 : vector<32x32xf32>
    %131 = vector.broadcast %0 : vector<32x1xf32> to vector<32x32xf32>
    %132 = arith.mulf %130, %131 : vector<32x32xf32>
    %c0_41 = arith.constant 0 : index
    %c0_42 = arith.constant 0 : index
    %c0_43 = arith.constant 0 : index
    %133 = vector.load %arg9[%c0_41, %c0_42, %c0_43] : memref<2x32x32xf32, #tpu.memory_space<vmem>>, vector<1x32x32xf32>
    %134 = vector.shape_cast %133 : vector<1x32x32xf32> to vector<32x32xf32>
    %cst_44 = arith.constant dense<0.000000e+00> : vector<32x32xf32>
    %135 = tpu.matmul %132, %134, %cst_44 {dimension_numbers = #tpu.dot_dimension_numbers<[1], [0], [0], [1], [0, 0, 1, 1], [], []>} : vector<32x32xf32>, vector<32x32xf32>, vector<32x32xf32> -> vector<32x32xf32>
    %c0_45 = arith.constant 0 : index
    %c0_46 = arith.constant 0 : index
    %136 = vector.load %arg10[%c0_45, %c0_46] : memref<2x32xf32, #tpu.memory_space<vmem>>, vector<1x32xf32>
    %137 = vector.broadcast %136 : vector<1x32xf32> to vector<32x32xf32>
    %138 = arith.addf %135, %137 : vector<32x32xf32>
    %139 = vector.broadcast %0 : vector<32x1xf32> to vector<32x32xf32>
    %140 = arith.mulf %138, %139 : vector<32x32xf32>
    %cst_47 = arith.constant 1.000000e+00 : f32
    %141 = vector.broadcast %cst_47 : f32 to vector<32x32xf32>
    %142 = arith.mulf %141, %140 : vector<32x32xf32>
    %143 = arith.addf %5, %142 : vector<32x32xf32>
    %c1 = arith.constant 1 : index
    %c0_48 = arith.constant 0 : index
    %144 = vector.load %arg5[%c1, %c0_48] : memref<2x32xf32, #tpu.memory_space<vmem>>, vector<1x32xf32>
    %c1_49 = arith.constant 1 : index
    %c0_50 = arith.constant 0 : index
    %145 = vector.load %arg6[%c1_49, %c0_50] : memref<2x32xf32, #tpu.memory_space<vmem>>, vector<1x32xf32>
    %cst_51 = arith.constant dense<0.000000e+00> : vector<32xf32>
    %146 = vector.multi_reduction <add>, %143, %cst_51 [1] : vector<32x32xf32> to vector<32xf32>
    %147 = vector.shape_cast %146 : vector<32xf32> to vector<32x1xf32>
    %cst_52 = arith.constant 3.200000e+01 : f32
    %148 = vector.broadcast %cst_52 : f32 to vector<32x1xf32>
    %149 = arith.divf %147, %148 : vector<32x1xf32>
    %150 = vector.broadcast %149 : vector<32x1xf32> to vector<32x32xf32>
    %151 = arith.subf %143, %150 : vector<32x32xf32>
    %152 = arith.mulf %151, %151 : vector<32x32xf32>
    %cst_53 = arith.constant dense<0.000000e+00> : vector<32xf32>
    %153 = vector.multi_reduction <add>, %152, %cst_53 [1] : vector<32x32xf32> to vector<32xf32>
    %154 = vector.shape_cast %153 : vector<32xf32> to vector<32x1xf32>
    %cst_54 = arith.constant 3.200000e+01 : f32
    %155 = vector.broadcast %cst_54 : f32 to vector<32x1xf32>
    %156 = arith.divf %154, %155 : vector<32x1xf32>
    %157 = vector.broadcast %149 : vector<32x1xf32> to vector<32x32xf32>
    %158 = arith.subf %143, %157 : vector<32x32xf32>
    %cst_55 = arith.constant 9.99999974E-6 : f32
    %159 = vector.broadcast %cst_55 : f32 to vector<32x1xf32>
    %160 = arith.addf %156, %159 : vector<32x1xf32>
    %161 = math.rsqrt %160 : vector<32x1xf32>
    %162 = vector.broadcast %161 : vector<32x1xf32> to vector<32x32xf32>
    %163 = arith.mulf %158, %162 : vector<32x32xf32>
    %164 = vector.broadcast %144 : vector<1x32xf32> to vector<32x32xf32>
    %165 = arith.mulf %163, %164 : vector<32x32xf32>
    %166 = vector.broadcast %145 : vector<1x32xf32> to vector<32x32xf32>
    %167 = arith.addf %165, %166 : vector<32x32xf32>
    %168 = vector.broadcast %0 : vector<32x1xf32> to vector<32x32xf32>
    %169 = arith.mulf %167, %168 : vector<32x32xf32>
    %c1_56 = arith.constant 1 : index
    %c0_57 = arith.constant 0 : index
    %c0_58 = arith.constant 0 : index
    %170 = vector.load %arg7[%c1_56, %c0_57, %c0_58] : memref<2x5x32xf32, #tpu.memory_space<vmem>>, vector<1x5x32xf32>
    %171 = vector.shape_cast %170 : vector<1x5x32xf32> to vector<5x32xf32>
    %cst_59 = arith.constant 0.000000e+00 : f32
    %172 = vector.broadcast %cst_59 : f32 to vector<32x32xf32>
    %c1_60 = arith.constant 1 : index
    %c0_61 = arith.constant 0 : index
    %173 = vector.load %arg8[%c1_60, %c0_61] : memref<2x32xf32, #tpu.memory_space<vmem>>, vector<1x32xf32>
    %174 = vector.broadcast %173 : vector<1x32xf32> to vector<32x32xf32>
    %175 = arith.addf %172, %174 : vector<32x32xf32>
    %c2_i32_62 = arith.constant 2 : i32
    %176 = tpu.dynamic_rotate %169 by %c2_i32_62 dim 0 : vector<32x32xf32>, i32 -> vector<32x32xf32>
    %c-2_i32_63 = arith.constant -2 : i32
    %177 = vector.broadcast %c-2_i32_63 : i32 to vector<32x1xi32>
    %178 = arith.addi %22, %177 : vector<32x1xi32>
    %c0_i32_64 = arith.constant 0 : i32
    %179 = vector.broadcast %c0_i32_64 : i32 to vector<32x1xi32>
    %180 = arith.cmpi sge, %178, %179 : vector<32x1xi32>
    %c-2_i32_65 = arith.constant -2 : i32
    %181 = vector.broadcast %c-2_i32_65 : i32 to vector<32x1xi32>
    %182 = arith.addi %22, %181 : vector<32x1xi32>
    %c16_i32_66 = arith.constant 16 : i32
    %183 = vector.broadcast %c16_i32_66 : i32 to vector<32x1xi32>
    %184 = arith.cmpi slt, %182, %183 : vector<32x1xi32>
    %185 = arith.andi %180, %184 : vector<32x1xi1>
    %cst_67 = arith.constant 0.000000e+00 : f32
    %186 = vector.shape_cast %185 : vector<32x1xi1> to vector<32x1xi1>
    %187 = vector.broadcast %186 : vector<32x1xi1> to vector<32x32xi1>
    %188 = vector.broadcast %cst_67 : f32 to vector<32x32xf32>
    %189 = arith.select %187, %176, %188 : vector<32x32xi1>, vector<32x32xf32>
    %190 = vector.extract_strided_slice %171 {offsets = [0, 0], sizes = [1, 32], strides = [1, 1]} : vector<5x32xf32> to vector<1x32xf32>
    %191 = vector.broadcast %190 : vector<1x32xf32> to vector<32x32xf32>
    %192 = arith.mulf %191, %189 : vector<32x32xf32>
    %193 = arith.addf %175, %192 : vector<32x32xf32>
    %c1_i32_68 = arith.constant 1 : i32
    %194 = tpu.dynamic_rotate %169 by %c1_i32_68 dim 0 : vector<32x32xf32>, i32 -> vector<32x32xf32>
    %c-1_i32_69 = arith.constant -1 : i32
    %195 = vector.broadcast %c-1_i32_69 : i32 to vector<32x1xi32>
    %196 = arith.addi %22, %195 : vector<32x1xi32>
    %c0_i32_70 = arith.constant 0 : i32
    %197 = vector.broadcast %c0_i32_70 : i32 to vector<32x1xi32>
    %198 = arith.cmpi sge, %196, %197 : vector<32x1xi32>
    %c-1_i32_71 = arith.constant -1 : i32
    %199 = vector.broadcast %c-1_i32_71 : i32 to vector<32x1xi32>
    %200 = arith.addi %22, %199 : vector<32x1xi32>
    %c16_i32_72 = arith.constant 16 : i32
    %201 = vector.broadcast %c16_i32_72 : i32 to vector<32x1xi32>
    %202 = arith.cmpi slt, %200, %201 : vector<32x1xi32>
    %203 = arith.andi %198, %202 : vector<32x1xi1>
    %cst_73 = arith.constant 0.000000e+00 : f32
    %204 = vector.shape_cast %203 : vector<32x1xi1> to vector<32x1xi1>
    %205 = vector.broadcast %204 : vector<32x1xi1> to vector<32x32xi1>
    %206 = vector.broadcast %cst_73 : f32 to vector<32x32xf32>
    %207 = arith.select %205, %194, %206 : vector<32x32xi1>, vector<32x32xf32>
    %208 = vector.extract_strided_slice %171 {offsets = [1, 0], sizes = [1, 32], strides = [1, 1]} : vector<5x32xf32> to vector<1x32xf32>
    %209 = vector.broadcast %208 : vector<1x32xf32> to vector<32x32xf32>
    %210 = arith.mulf %209, %207 : vector<32x32xf32>
    %211 = arith.addf %193, %210 : vector<32x32xf32>
    %212 = vector.extract_strided_slice %171 {offsets = [2, 0], sizes = [1, 32], strides = [1, 1]} : vector<5x32xf32> to vector<1x32xf32>
    %213 = vector.broadcast %212 : vector<1x32xf32> to vector<32x32xf32>
    %214 = arith.mulf %213, %169 : vector<32x32xf32>
    %215 = arith.addf %211, %214 : vector<32x32xf32>
    %c31_i32_74 = arith.constant 31 : i32
    %216 = tpu.dynamic_rotate %169 by %c31_i32_74 dim 0 : vector<32x32xf32>, i32 -> vector<32x32xf32>
    %c1_i32_75 = arith.constant 1 : i32
    %217 = vector.broadcast %c1_i32_75 : i32 to vector<32x1xi32>
    %218 = arith.addi %22, %217 : vector<32x1xi32>
    %c0_i32_76 = arith.constant 0 : i32
    %219 = vector.broadcast %c0_i32_76 : i32 to vector<32x1xi32>
    %220 = arith.cmpi sge, %218, %219 : vector<32x1xi32>
    %c1_i32_77 = arith.constant 1 : i32
    %221 = vector.broadcast %c1_i32_77 : i32 to vector<32x1xi32>
    %222 = arith.addi %22, %221 : vector<32x1xi32>
    %c16_i32_78 = arith.constant 16 : i32
    %223 = vector.broadcast %c16_i32_78 : i32 to vector<32x1xi32>
    %224 = arith.cmpi slt, %222, %223 : vector<32x1xi32>
    %225 = arith.andi %220, %224 : vector<32x1xi1>
    %cst_79 = arith.constant 0.000000e+00 : f32
    %226 = vector.shape_cast %225 : vector<32x1xi1> to vector<32x1xi1>
    %227 = vector.broadcast %226 : vector<32x1xi1> to vector<32x32xi1>
    %228 = vector.broadcast %cst_79 : f32 to vector<32x32xf32>
    %229 = arith.select %227, %216, %228 : vector<32x32xi1>, vector<32x32xf32>
    %230 = vector.extract_strided_slice %171 {offsets = [3, 0], sizes = [1, 32], strides = [1, 1]} : vector<5x32xf32> to vector<1x32xf32>
    %231 = vector.broadcast %230 : vector<1x32xf32> to vector<32x32xf32>
    %232 = arith.mulf %231, %229 : vector<32x32xf32>
    %233 = arith.addf %215, %232 : vector<32x32xf32>
    %c30_i32_80 = arith.constant 30 : i32
    %234 = tpu.dynamic_rotate %169 by %c30_i32_80 dim 0 : vector<32x32xf32>, i32 -> vector<32x32xf32>
    %c2_i32_81 = arith.constant 2 : i32
    %235 = vector.broadcast %c2_i32_81 : i32 to vector<32x1xi32>
    %236 = arith.addi %22, %235 : vector<32x1xi32>
    %c0_i32_82 = arith.constant 0 : i32
    %237 = vector.broadcast %c0_i32_82 : i32 to vector<32x1xi32>
    %238 = arith.cmpi sge, %236, %237 : vector<32x1xi32>
    %c2_i32_83 = arith.constant 2 : i32
    %239 = vector.broadcast %c2_i32_83 : i32 to vector<32x1xi32>
    %240 = arith.addi %22, %239 : vector<32x1xi32>
    %c16_i32_84 = arith.constant 16 : i32
    %241 = vector.broadcast %c16_i32_84 : i32 to vector<32x1xi32>
    %242 = arith.cmpi slt, %240, %241 : vector<32x1xi32>
    %243 = arith.andi %238, %242 : vector<32x1xi1>
    %cst_85 = arith.constant 0.000000e+00 : f32
    %244 = vector.shape_cast %243 : vector<32x1xi1> to vector<32x1xi1>
    %245 = vector.broadcast %244 : vector<32x1xi1> to vector<32x32xi1>
    %246 = vector.broadcast %cst_85 : f32 to vector<32x32xf32>
    %247 = arith.select %245, %234, %246 : vector<32x32xi1>, vector<32x32xf32>
    %248 = vector.extract_strided_slice %171 {offsets = [4, 0], sizes = [1, 32], strides = [1, 1]} : vector<5x32xf32> to vector<1x32xf32>
    %249 = vector.broadcast %248 : vector<1x32xf32> to vector<32x32xf32>
    %250 = arith.mulf %249, %247 : vector<32x32xf32>
    %251 = arith.addf %233, %250 : vector<32x32xf32>
    %252 = vector.broadcast %0 : vector<32x1xf32> to vector<32x32xf32>
    %253 = arith.mulf %251, %252 : vector<32x32xf32>
    %c1_86 = arith.constant 1 : index
    %c0_87 = arith.constant 0 : index
    %c0_88 = arith.constant 0 : index
    %254 = vector.load %arg9[%c1_86, %c0_87, %c0_88] : memref<2x32x32xf32, #tpu.memory_space<vmem>>, vector<1x32x32xf32>
    %255 = vector.shape_cast %254 : vector<1x32x32xf32> to vector<32x32xf32>
    %cst_89 = arith.constant dense<0.000000e+00> : vector<32x32xf32>
    %256 = tpu.matmul %253, %255, %cst_89 {dimension_numbers = #tpu.dot_dimension_numbers<[1], [0], [0], [1], [0, 0, 1, 1], [], []>} : vector<32x32xf32>, vector<32x32xf32>, vector<32x32xf32> -> vector<32x32xf32>
    %c1_90 = arith.constant 1 : index
    %c0_91 = arith.constant 0 : index
    %257 = vector.load %arg10[%c1_90, %c0_91] : memref<2x32xf32, #tpu.memory_space<vmem>>, vector<1x32xf32>
    %258 = vector.broadcast %257 : vector<1x32xf32> to vector<32x32xf32>
    %259 = arith.addf %256, %258 : vector<32x32xf32>
    %260 = vector.broadcast %0 : vector<32x1xf32> to vector<32x32xf32>
    %261 = arith.mulf %259, %260 : vector<32x32xf32>
    %cst_92 = arith.constant 9.875000e-01 : f32
    %262 = vector.broadcast %cst_92 : f32 to vector<32x32xf32>
    %263 = arith.mulf %262, %261 : vector<32x32xf32>
    %264 = arith.addf %143, %263 : vector<32x32xf32>
    %c0_93 = arith.constant 0 : index
    %c0_94 = arith.constant 0 : index
    %265 = vector.load %arg11[%c0_93, %c0_94] : memref<1x32xf32, #tpu.memory_space<vmem>>, vector<1x32xf32>
    %c0_95 = arith.constant 0 : index
    %c0_96 = arith.constant 0 : index
    %266 = vector.load %arg12[%c0_95, %c0_96] : memref<1x32xf32, #tpu.memory_space<vmem>>, vector<1x32xf32>
    %cst_97 = arith.constant dense<0.000000e+00> : vector<32xf32>
    %267 = vector.multi_reduction <add>, %264, %cst_97 [1] : vector<32x32xf32> to vector<32xf32>
    %268 = vector.shape_cast %267 : vector<32xf32> to vector<32x1xf32>
    %cst_98 = arith.constant 3.200000e+01 : f32
    %269 = vector.broadcast %cst_98 : f32 to vector<32x1xf32>
    %270 = arith.divf %268, %269 : vector<32x1xf32>
    %271 = vector.broadcast %270 : vector<32x1xf32> to vector<32x32xf32>
    %272 = arith.subf %264, %271 : vector<32x32xf32>
    %273 = arith.mulf %272, %272 : vector<32x32xf32>
    %cst_99 = arith.constant dense<0.000000e+00> : vector<32xf32>
    %274 = vector.multi_reduction <add>, %273, %cst_99 [1] : vector<32x32xf32> to vector<32xf32>
    %275 = vector.shape_cast %274 : vector<32xf32> to vector<32x1xf32>
    %cst_100 = arith.constant 3.200000e+01 : f32
    %276 = vector.broadcast %cst_100 : f32 to vector<32x1xf32>
    %277 = arith.divf %275, %276 : vector<32x1xf32>
    %278 = vector.broadcast %270 : vector<32x1xf32> to vector<32x32xf32>
    %279 = arith.subf %264, %278 : vector<32x32xf32>
    %cst_101 = arith.constant 9.99999974E-6 : f32
    %280 = vector.broadcast %cst_101 : f32 to vector<32x1xf32>
    %281 = arith.addf %277, %280 : vector<32x1xf32>
    %282 = math.rsqrt %281 : vector<32x1xf32>
    %283 = vector.broadcast %282 : vector<32x1xf32> to vector<32x32xf32>
    %284 = arith.mulf %279, %283 : vector<32x32xf32>
    %285 = vector.broadcast %265 : vector<1x32xf32> to vector<32x32xf32>
    %286 = arith.mulf %284, %285 : vector<32x32xf32>
    %287 = vector.broadcast %266 : vector<1x32xf32> to vector<32x32xf32>
    %288 = arith.addf %286, %287 : vector<32x32xf32>
    %289 = vector.broadcast %0 : vector<32x1xf32> to vector<32x32xf32>
    %290 = arith.mulf %288, %289 : vector<32x32xf32>
    %c0_102 = arith.constant 0 : index
    %c0_103 = arith.constant 0 : index
    %291 = vector.load %arg13[%c0_102, %c0_103] : memref<32x96xf32, #tpu.memory_space<vmem>>, vector<32x96xf32>
    %cst_104 = arith.constant dense<0.000000e+00> : vector<32x96xf32>
    %292 = tpu.matmul %290, %291, %cst_104 {dimension_numbers = #tpu.dot_dimension_numbers<[1], [0], [0], [1], [0, 0, 1, 1], [], []>} : vector<32x32xf32>, vector<32x96xf32>, vector<32x96xf32> -> vector<32x96xf32>
    %c0_105 = arith.constant 0 : index
    %c0_106 = arith.constant 0 : index
    %c0_107 = arith.constant 0 : index
    %293 = vector.load %arg3[%c0_105, %c0_106, %c0_107] : memref<2x1x16xf32, #tpu.memory_space<vmem>>, vector<2x1x16xf32>
    %294 = vector.extract_strided_slice %293 {offsets = [0, 0, 0], sizes = [1, 1, 16], strides = [1, 1, 1]} : vector<2x1x16xf32> to vector<1x1x16xf32>
    %295 = vector.shape_cast %294 : vector<1x1x16xf32> to vector<1x16xf32>
    %296 = vector.extract_strided_slice %292 {offsets = [0, 0], sizes = [16, 8], strides = [1, 1]} : vector<32x96xf32> to vector<16x8xf32>
    %297 = vector.extract_strided_slice %292 {offsets = [0, 32], sizes = [16, 8], strides = [1, 1]} : vector<32x96xf32> to vector<16x8xf32>
    %298 = vector.extract_strided_slice %292 {offsets = [0, 64], sizes = [16, 8], strides = [1, 1]} : vector<32x96xf32> to vector<16x8xf32>
    %cst_108 = arith.constant dense<0.000000e+00> : vector<16x16xf32>
    %299 = tpu.matmul %296, %297, %cst_108 {dimension_numbers = #tpu.dot_dimension_numbers<[1], [1], [0], [0], [0, 0, 1, 0], [], []>} : vector<16x8xf32>, vector<16x8xf32>, vector<16x16xf32> -> vector<16x16xf32>
    %cst_109 = arith.constant 0.353553385 : f32
    %300 = vector.broadcast %cst_109 : f32 to vector<16x16xf32>
    %301 = arith.mulf %299, %300 : vector<16x16xf32>
    %302 = vector.broadcast %295 : vector<1x16xf32> to vector<16x16xf32>
    %303 = arith.addf %301, %302 : vector<16x16xf32>
    %cst_110 = arith.constant dense<0xFF800000> : vector<16xf32>
    %304 = vector.multi_reduction <maximumf>, %303, %cst_110 [1] : vector<16x16xf32> to vector<16xf32>
    %305 = vector.shape_cast %304 : vector<16xf32> to vector<16x1xf32>
    %306 = vector.broadcast %305 : vector<16x1xf32> to vector<16x16xf32>
    %307 = arith.subf %303, %306 : vector<16x16xf32>
    %308 = math.exp %307 : vector<16x16xf32>
    %cst_111 = arith.constant dense<0.000000e+00> : vector<16xf32>
    %309 = vector.multi_reduction <add>, %308, %cst_111 [1] : vector<16x16xf32> to vector<16xf32>
    %310 = vector.shape_cast %309 : vector<16xf32> to vector<16x1xf32>
    %311 = tpu.reciprocal %310 {approx = true} : vector<16x1xf32> -> vector<16x1xf32>
    %312 = vector.broadcast %311 : vector<16x1xf32> to vector<16x16xf32>
    %313 = arith.mulf %308, %312 : vector<16x16xf32>
    %cst_112 = arith.constant dense<0.000000e+00> : vector<16x8xf32>
    %314 = tpu.matmul %313, %298, %cst_112 {dimension_numbers = #tpu.dot_dimension_numbers<[1], [0], [0], [1], [0, 0, 1, 1], [], []>} : vector<16x16xf32>, vector<16x8xf32>, vector<16x8xf32> -> vector<16x8xf32>
    %c0_113 = arith.constant 0 : index
    %c0_114 = arith.constant 0 : index
    %315 = vector.load %arg19[%c0_113, %c0_114] : memref<32x32xf32, #tpu.memory_space<vmem>>, vector<16x8xf32>
    tpu.vector_store %arg19[%c0_113, %c0_114], %314 {strides = array<i32>} : memref<32x32xf32, #tpu.memory_space<vmem>>, vector<16x8xf32>,
    %316 = vector.extract_strided_slice %292 {offsets = [0, 8], sizes = [16, 8], strides = [1, 1]} : vector<32x96xf32> to vector<16x8xf32>
    %317 = vector.extract_strided_slice %292 {offsets = [0, 40], sizes = [16, 8], strides = [1, 1]} : vector<32x96xf32> to vector<16x8xf32>
    %318 = vector.extract_strided_slice %292 {offsets = [0, 72], sizes = [16, 8], strides = [1, 1]} : vector<32x96xf32> to vector<16x8xf32>
    %cst_115 = arith.constant dense<0.000000e+00> : vector<16x16xf32>
    %319 = tpu.matmul %316, %317, %cst_115 {dimension_numbers = #tpu.dot_dimension_numbers<[1], [1], [0], [0], [0, 0, 1, 0], [], []>} : vector<16x8xf32>, vector<16x8xf32>, vector<16x16xf32> -> vector<16x16xf32>
    %cst_116 = arith.constant 0.353553385 : f32
    %320 = vector.broadcast %cst_116 : f32 to vector<16x16xf32>
    %321 = arith.mulf %319, %320 : vector<16x16xf32>
    %322 = vector.broadcast %295 : vector<1x16xf32> to vector<16x16xf32>
    %323 = arith.addf %321, %322 : vector<16x16xf32>
    %cst_117 = arith.constant dense<0xFF800000> : vector<16xf32>
    %324 = vector.multi_reduction <maximumf>, %323, %cst_117 [1] : vector<16x16xf32> to vector<16xf32>
    %325 = vector.shape_cast %324 : vector<16xf32> to vector<16x1xf32>
    %326 = vector.broadcast %325 : vector<16x1xf32> to vector<16x16xf32>
    %327 = arith.subf %323, %326 : vector<16x16xf32>
    %328 = math.exp %327 : vector<16x16xf32>
    %cst_118 = arith.constant dense<0.000000e+00> : vector<16xf32>
    %329 = vector.multi_reduction <add>, %328, %cst_118 [1] : vector<16x16xf32> to vector<16xf32>
    %330 = vector.shape_cast %329 : vector<16xf32> to vector<16x1xf32>
    %331 = tpu.reciprocal %330 {approx = true} : vector<16x1xf32> -> vector<16x1xf32>
    %332 = vector.broadcast %331 : vector<16x1xf32> to vector<16x16xf32>
    %333 = arith.mulf %328, %332 : vector<16x16xf32>
    %cst_119 = arith.constant dense<0.000000e+00> : vector<16x8xf32>
    %334 = tpu.matmul %333, %318, %cst_119 {dimension_numbers = #tpu.dot_dimension_numbers<[1], [0], [0], [1], [0, 0, 1, 1], [], []>} : vector<16x16xf32>, vector<16x8xf32>, vector<16x8xf32> -> vector<16x8xf32>
    %c0_120 = arith.constant 0 : index
    %c8 = arith.constant 8 : index
    %335 = vector.load %arg19[%c0_120, %c8] : memref<32x32xf32, #tpu.memory_space<vmem>>, vector<16x8xf32>
    tpu.vector_store %arg19[%c0_120, %c8], %334 {strides = array<i32>} : memref<32x32xf32, #tpu.memory_space<vmem>>, vector<16x8xf32>,
    %336 = vector.extract_strided_slice %292 {offsets = [0, 16], sizes = [16, 8], strides = [1, 1]} : vector<32x96xf32> to vector<16x8xf32>
    %337 = vector.extract_strided_slice %292 {offsets = [0, 48], sizes = [16, 8], strides = [1, 1]} : vector<32x96xf32> to vector<16x8xf32>
    %338 = vector.extract_strided_slice %292 {offsets = [0, 80], sizes = [16, 8], strides = [1, 1]} : vector<32x96xf32> to vector<16x8xf32>
    %cst_121 = arith.constant dense<0.000000e+00> : vector<16x16xf32>
    %339 = tpu.matmul %336, %337, %cst_121 {dimension_numbers = #tpu.dot_dimension_numbers<[1], [1], [0], [0], [0, 0, 1, 0], [], []>} : vector<16x8xf32>, vector<16x8xf32>, vector<16x16xf32> -> vector<16x16xf32>
    %cst_122 = arith.constant 0.353553385 : f32
    %340 = vector.broadcast %cst_122 : f32 to vector<16x16xf32>
    %341 = arith.mulf %339, %340 : vector<16x16xf32>
    %342 = vector.broadcast %295 : vector<1x16xf32> to vector<16x16xf32>
    %343 = arith.addf %341, %342 : vector<16x16xf32>
    %cst_123 = arith.constant dense<0xFF800000> : vector<16xf32>
    %344 = vector.multi_reduction <maximumf>, %343, %cst_123 [1] : vector<16x16xf32> to vector<16xf32>
    %345 = vector.shape_cast %344 : vector<16xf32> to vector<16x1xf32>
    %346 = vector.broadcast %345 : vector<16x1xf32> to vector<16x16xf32>
    %347 = arith.subf %343, %346 : vector<16x16xf32>
    %348 = math.exp %347 : vector<16x16xf32>
    %cst_124 = arith.constant dense<0.000000e+00> : vector<16xf32>
    %349 = vector.multi_reduction <add>, %348, %cst_124 [1] : vector<16x16xf32> to vector<16xf32>
    %350 = vector.shape_cast %349 : vector<16xf32> to vector<16x1xf32>
    %351 = tpu.reciprocal %350 {approx = true} : vector<16x1xf32> -> vector<16x1xf32>
    %352 = vector.broadcast %351 : vector<16x1xf32> to vector<16x16xf32>
    %353 = arith.mulf %348, %352 : vector<16x16xf32>
    %cst_125 = arith.constant dense<0.000000e+00> : vector<16x8xf32>
    %354 = tpu.matmul %353, %338, %cst_125 {dimension_numbers = #tpu.dot_dimension_numbers<[1], [0], [0], [1], [0, 0, 1, 1], [], []>} : vector<16x16xf32>, vector<16x8xf32>, vector<16x8xf32> -> vector<16x8xf32>
    %c0_126 = arith.constant 0 : index
    %c16 = arith.constant 16 : index
    %355 = vector.load %arg19[%c0_126, %c16] : memref<32x32xf32, #tpu.memory_space<vmem>>, vector<16x8xf32>
    tpu.vector_store %arg19[%c0_126, %c16], %354 {strides = array<i32>} : memref<32x32xf32, #tpu.memory_space<vmem>>, vector<16x8xf32>,
    %356 = vector.extract_strided_slice %292 {offsets = [0, 24], sizes = [16, 8], strides = [1, 1]} : vector<32x96xf32> to vector<16x8xf32>
    %357 = vector.extract_strided_slice %292 {offsets = [0, 56], sizes = [16, 8], strides = [1, 1]} : vector<32x96xf32> to vector<16x8xf32>
    %358 = vector.extract_strided_slice %292 {offsets = [0, 88], sizes = [16, 8], strides = [1, 1]} : vector<32x96xf32> to vector<16x8xf32>
    %cst_127 = arith.constant dense<0.000000e+00> : vector<16x16xf32>
    %359 = tpu.matmul %356, %357, %cst_127 {dimension_numbers = #tpu.dot_dimension_numbers<[1], [1], [0], [0], [0, 0, 1, 0], [], []>} : vector<16x8xf32>, vector<16x8xf32>, vector<16x16xf32> -> vector<16x16xf32>
    %cst_128 = arith.constant 0.353553385 : f32
    %360 = vector.broadcast %cst_128 : f32 to vector<16x16xf32>
    %361 = arith.mulf %359, %360 : vector<16x16xf32>
    %362 = vector.broadcast %295 : vector<1x16xf32> to vector<16x16xf32>
    %363 = arith.addf %361, %362 : vector<16x16xf32>
    %cst_129 = arith.constant dense<0xFF800000> : vector<16xf32>
    %364 = vector.multi_reduction <maximumf>, %363, %cst_129 [1] : vector<16x16xf32> to vector<16xf32>
    %365 = vector.shape_cast %364 : vector<16xf32> to vector<16x1xf32>
    %366 = vector.broadcast %365 : vector<16x1xf32> to vector<16x16xf32>
    %367 = arith.subf %363, %366 : vector<16x16xf32>
    %368 = math.exp %367 : vector<16x16xf32>
    %cst_130 = arith.constant dense<0.000000e+00> : vector<16xf32>
    %369 = vector.multi_reduction <add>, %368, %cst_130 [1] : vector<16x16xf32> to vector<16xf32>
    %370 = vector.shape_cast %369 : vector<16xf32> to vector<16x1xf32>
    %371 = tpu.reciprocal %370 {approx = true} : vector<16x1xf32> -> vector<16x1xf32>
    %372 = vector.broadcast %371 : vector<16x1xf32> to vector<16x16xf32>
    %373 = arith.mulf %368, %372 : vector<16x16xf32>
    %cst_131 = arith.constant dense<0.000000e+00> : vector<16x8xf32>
    %374 = tpu.matmul %373, %358, %cst_131 {dimension_numbers = #tpu.dot_dimension_numbers<[1], [0], [0], [1], [0, 0, 1, 1], [], []>} : vector<16x16xf32>, vector<16x8xf32>, vector<16x8xf32> -> vector<16x8xf32>
    %c0_132 = arith.constant 0 : index
    %c24 = arith.constant 24 : index
    %375 = vector.load %arg19[%c0_132, %c24] : memref<32x32xf32, #tpu.memory_space<vmem>>, vector<16x8xf32>
    tpu.vector_store %arg19[%c0_132, %c24], %374 {strides = array<i32>} : memref<32x32xf32, #tpu.memory_space<vmem>>, vector<16x8xf32>,
    %376 = vector.extract_strided_slice %293 {offsets = [1, 0, 0], sizes = [1, 1, 16], strides = [1, 1, 1]} : vector<2x1x16xf32> to vector<1x1x16xf32>
    %377 = vector.shape_cast %376 : vector<1x1x16xf32> to vector<1x16xf32>
    %378 = vector.extract_strided_slice %292 {offsets = [16, 0], sizes = [16, 8], strides = [1, 1]} : vector<32x96xf32> to vector<16x8xf32>
    %379 = vector.extract_strided_slice %292 {offsets = [16, 32], sizes = [16, 8], strides = [1, 1]} : vector<32x96xf32> to vector<16x8xf32>
    %380 = vector.extract_strided_slice %292 {offsets = [16, 64], sizes = [16, 8], strides = [1, 1]} : vector<32x96xf32> to vector<16x8xf32>
    %cst_133 = arith.constant dense<0.000000e+00> : vector<16x16xf32>
    %381 = tpu.matmul %378, %379, %cst_133 {dimension_numbers = #tpu.dot_dimension_numbers<[1], [1], [0], [0], [0, 0, 1, 0], [], []>} : vector<16x8xf32>, vector<16x8xf32>, vector<16x16xf32> -> vector<16x16xf32>
    %cst_134 = arith.constant 0.353553385 : f32
    %382 = vector.broadcast %cst_134 : f32 to vector<16x16xf32>
    %383 = arith.mulf %381, %382 : vector<16x16xf32>
    %384 = vector.broadcast %377 : vector<1x16xf32> to vector<16x16xf32>
    %385 = arith.addf %383, %384 : vector<16x16xf32>
    %cst_135 = arith.constant dense<0xFF800000> : vector<16xf32>
    %386 = vector.multi_reduction <maximumf>, %385, %cst_135 [1] : vector<16x16xf32> to vector<16xf32>
    %387 = vector.shape_cast %386 : vector<16xf32> to vector<16x1xf32>
    %388 = vector.broadcast %387 : vector<16x1xf32> to vector<16x16xf32>
    %389 = arith.subf %385, %388 : vector<16x16xf32>
    %390 = math.exp %389 : vector<16x16xf32>
    %cst_136 = arith.constant dense<0.000000e+00> : vector<16xf32>
    %391 = vector.multi_reduction <add>, %390, %cst_136 [1] : vector<16x16xf32> to vector<16xf32>
    %392 = vector.shape_cast %391 : vector<16xf32> to vector<16x1xf32>
    %393 = tpu.reciprocal %392 {approx = true} : vector<16x1xf32> -> vector<16x1xf32>
    %394 = vector.broadcast %393 : vector<16x1xf32> to vector<16x16xf32>
    %395 = arith.mulf %390, %394 : vector<16x16xf32>
    %cst_137 = arith.constant dense<0.000000e+00> : vector<16x8xf32>
    %396 = tpu.matmul %395, %380, %cst_137 {dimension_numbers = #tpu.dot_dimension_numbers<[1], [0], [0], [1], [0, 0, 1, 1], [], []>} : vector<16x16xf32>, vector<16x8xf32>, vector<16x8xf32> -> vector<16x8xf32>
    %c16_138 = arith.constant 16 : index
    %c0_139 = arith.constant 0 : index
    %397 = vector.load %arg19[%c16_138, %c0_139] : memref<32x32xf32, #tpu.memory_space<vmem>>, vector<16x8xf32>
    tpu.vector_store %arg19[%c16_138, %c0_139], %396 {strides = array<i32>} : memref<32x32xf32, #tpu.memory_space<vmem>>, vector<16x8xf32>,
    %398 = vector.extract_strided_slice %292 {offsets = [16, 8], sizes = [16, 8], strides = [1, 1]} : vector<32x96xf32> to vector<16x8xf32>
    %399 = vector.extract_strided_slice %292 {offsets = [16, 40], sizes = [16, 8], strides = [1, 1]} : vector<32x96xf32> to vector<16x8xf32>
    %400 = vector.extract_strided_slice %292 {offsets = [16, 72], sizes = [16, 8], strides = [1, 1]} : vector<32x96xf32> to vector<16x8xf32>
    %cst_140 = arith.constant dense<0.000000e+00> : vector<16x16xf32>
    %401 = tpu.matmul %398, %399, %cst_140 {dimension_numbers = #tpu.dot_dimension_numbers<[1], [1], [0], [0], [0, 0, 1, 0], [], []>} : vector<16x8xf32>, vector<16x8xf32>, vector<16x16xf32> -> vector<16x16xf32>
    %cst_141 = arith.constant 0.353553385 : f32
    %402 = vector.broadcast %cst_141 : f32 to vector<16x16xf32>
    %403 = arith.mulf %401, %402 : vector<16x16xf32>
    %404 = vector.broadcast %377 : vector<1x16xf32> to vector<16x16xf32>
    %405 = arith.addf %403, %404 : vector<16x16xf32>
    %cst_142 = arith.constant dense<0xFF800000> : vector<16xf32>
    %406 = vector.multi_reduction <maximumf>, %405, %cst_142 [1] : vector<16x16xf32> to vector<16xf32>
    %407 = vector.shape_cast %406 : vector<16xf32> to vector<16x1xf32>
    %408 = vector.broadcast %407 : vector<16x1xf32> to vector<16x16xf32>
    %409 = arith.subf %405, %408 : vector<16x16xf32>
    %410 = math.exp %409 : vector<16x16xf32>
    %cst_143 = arith.constant dense<0.000000e+00> : vector<16xf32>
    %411 = vector.multi_reduction <add>, %410, %cst_143 [1] : vector<16x16xf32> to vector<16xf32>
    %412 = vector.shape_cast %411 : vector<16xf32> to vector<16x1xf32>
    %413 = tpu.reciprocal %412 {approx = true} : vector<16x1xf32> -> vector<16x1xf32>
    %414 = vector.broadcast %413 : vector<16x1xf32> to vector<16x16xf32>
    %415 = arith.mulf %410, %414 : vector<16x16xf32>
    %cst_144 = arith.constant dense<0.000000e+00> : vector<16x8xf32>
    %416 = tpu.matmul %415, %400, %cst_144 {dimension_numbers = #tpu.dot_dimension_numbers<[1], [0], [0], [1], [0, 0, 1, 1], [], []>} : vector<16x16xf32>, vector<16x8xf32>, vector<16x8xf32> -> vector<16x8xf32>
    %c16_145 = arith.constant 16 : index
    %c8_146 = arith.constant 8 : index
    %417 = vector.load %arg19[%c16_145, %c8_146] : memref<32x32xf32, #tpu.memory_space<vmem>>, vector<16x8xf32>
    tpu.vector_store %arg19[%c16_145, %c8_146], %416 {strides = array<i32>} : memref<32x32xf32, #tpu.memory_space<vmem>>, vector<16x8xf32>,
    %418 = vector.extract_strided_slice %292 {offsets = [16, 16], sizes = [16, 8], strides = [1, 1]} : vector<32x96xf32> to vector<16x8xf32>
    %419 = vector.extract_strided_slice %292 {offsets = [16, 48], sizes = [16, 8], strides = [1, 1]} : vector<32x96xf32> to vector<16x8xf32>
    %420 = vector.extract_strided_slice %292 {offsets = [16, 80], sizes = [16, 8], strides = [1, 1]} : vector<32x96xf32> to vector<16x8xf32>
    %cst_147 = arith.constant dense<0.000000e+00> : vector<16x16xf32>
    %421 = tpu.matmul %418, %419, %cst_147 {dimension_numbers = #tpu.dot_dimension_numbers<[1], [1], [0], [0], [0, 0, 1, 0], [], []>} : vector<16x8xf32>, vector<16x8xf32>, vector<16x16xf32> -> vector<16x16xf32>
    %cst_148 = arith.constant 0.353553385 : f32
    %422 = vector.broadcast %cst_148 : f32 to vector<16x16xf32>
    %423 = arith.mulf %421, %422 : vector<16x16xf32>
    %424 = vector.broadcast %377 : vector<1x16xf32> to vector<16x16xf32>
    %425 = arith.addf %423, %424 : vector<16x16xf32>
    %cst_149 = arith.constant dense<0xFF800000> : vector<16xf32>
    %426 = vector.multi_reduction <maximumf>, %425, %cst_149 [1] : vector<16x16xf32> to vector<16xf32>
    %427 = vector.shape_cast %426 : vector<16xf32> to vector<16x1xf32>
    %428 = vector.broadcast %427 : vector<16x1xf32> to vector<16x16xf32>
    %429 = arith.subf %425, %428 : vector<16x16xf32>
    %430 = math.exp %429 : vector<16x16xf32>
    %cst_150 = arith.constant dense<0.000000e+00> : vector<16xf32>
    %431 = vector.multi_reduction <add>, %430, %cst_150 [1] : vector<16x16xf32> to vector<16xf32>
    %432 = vector.shape_cast %431 : vector<16xf32> to vector<16x1xf32>
    %433 = tpu.reciprocal %432 {approx = true} : vector<16x1xf32> -> vector<16x1xf32>
    %434 = vector.broadcast %433 : vector<16x1xf32> to vector<16x16xf32>
    %435 = arith.mulf %430, %434 : vector<16x16xf32>
    %cst_151 = arith.constant dense<0.000000e+00> : vector<16x8xf32>
    %436 = tpu.matmul %435, %420, %cst_151 {dimension_numbers = #tpu.dot_dimension_numbers<[1], [0], [0], [1], [0, 0, 1, 1], [], []>} : vector<16x16xf32>, vector<16x8xf32>, vector<16x8xf32> -> vector<16x8xf32>
    %c16_152 = arith.constant 16 : index
    %c16_153 = arith.constant 16 : index
    %437 = vector.load %arg19[%c16_152, %c16_153] : memref<32x32xf32, #tpu.memory_space<vmem>>, vector<16x8xf32>
    tpu.vector_store %arg19[%c16_152, %c16_153], %436 {strides = array<i32>} : memref<32x32xf32, #tpu.memory_space<vmem>>, vector<16x8xf32>,
    %438 = vector.extract_strided_slice %292 {offsets = [16, 24], sizes = [16, 8], strides = [1, 1]} : vector<32x96xf32> to vector<16x8xf32>
    %439 = vector.extract_strided_slice %292 {offsets = [16, 56], sizes = [16, 8], strides = [1, 1]} : vector<32x96xf32> to vector<16x8xf32>
    %440 = vector.extract_strided_slice %292 {offsets = [16, 88], sizes = [16, 8], strides = [1, 1]} : vector<32x96xf32> to vector<16x8xf32>
    %cst_154 = arith.constant dense<0.000000e+00> : vector<16x16xf32>
    %441 = tpu.matmul %438, %439, %cst_154 {dimension_numbers = #tpu.dot_dimension_numbers<[1], [1], [0], [0], [0, 0, 1, 0], [], []>} : vector<16x8xf32>, vector<16x8xf32>, vector<16x16xf32> -> vector<16x16xf32>
    %cst_155 = arith.constant 0.353553385 : f32
    %442 = vector.broadcast %cst_155 : f32 to vector<16x16xf32>
    %443 = arith.mulf %441, %442 : vector<16x16xf32>
    %444 = vector.broadcast %377 : vector<1x16xf32> to vector<16x16xf32>
    %445 = arith.addf %443, %444 : vector<16x16xf32>
    %cst_156 = arith.constant dense<0xFF800000> : vector<16xf32>
    %446 = vector.multi_reduction <maximumf>, %445, %cst_156 [1] : vector<16x16xf32> to vector<16xf32>
    %447 = vector.shape_cast %446 : vector<16xf32> to vector<16x1xf32>
    %448 = vector.broadcast %447 : vector<16x1xf32> to vector<16x16xf32>
    %449 = arith.subf %445, %448 : vector<16x16xf32>
    %450 = math.exp %449 : vector<16x16xf32>
    %cst_157 = arith.constant dense<0.000000e+00> : vector<16xf32>
    %451 = vector.multi_reduction <add>, %450, %cst_157 [1] : vector<16x16xf32> to vector<16xf32>
    %452 = vector.shape_cast %451 : vector<16xf32> to vector<16x1xf32>
    %453 = tpu.reciprocal %452 {approx = true} : vector<16x1xf32> -> vector<16x1xf32>
    %454 = vector.broadcast %453 : vector<16x1xf32> to vector<16x16xf32>
    %455 = arith.mulf %450, %454 : vector<16x16xf32>
    %cst_158 = arith.constant dense<0.000000e+00> : vector<16x8xf32>
    %456 = tpu.matmul %455, %440, %cst_158 {dimension_numbers = #tpu.dot_dimension_numbers<[1], [0], [0], [1], [0, 0, 1, 1], [], []>} : vector<16x16xf32>, vector<16x8xf32>, vector<16x8xf32> -> vector<16x8xf32>
    %c16_159 = arith.constant 16 : index
    %c24_160 = arith.constant 24 : index
    %457 = vector.load %arg19[%c16_159, %c24_160] : memref<32x32xf32, #tpu.memory_space<vmem>>, vector<16x8xf32>
    tpu.vector_store %arg19[%c16_159, %c24_160], %456 {strides = array<i32>} : memref<32x32xf32, #tpu.memory_space<vmem>>, vector<16x8xf32>,
    %c0_161 = arith.constant 0 : index
    %c0_162 = arith.constant 0 : index
    %458 = vector.load %arg19[%c0_161, %c0_162] : memref<32x32xf32, #tpu.memory_space<vmem>>, vector<32x32xf32>
    %c0_163 = arith.constant 0 : index
    %c0_164 = arith.constant 0 : index
    %459 = vector.load %arg14[%c0_163, %c0_164] : memref<32x32xf32, #tpu.memory_space<vmem>>, vector<32x32xf32>
    %cst_165 = arith.constant dense<0.000000e+00> : vector<32x32xf32>
    %460 = tpu.matmul %458, %459, %cst_165 {dimension_numbers = #tpu.dot_dimension_numbers<[1], [0], [0], [1], [0, 0, 1, 1], [], []>} : vector<32x32xf32>, vector<32x32xf32>, vector<32x32xf32> -> vector<32x32xf32>
    %461 = vector.broadcast %0 : vector<32x1xf32> to vector<32x32xf32>
    %462 = arith.mulf %460, %461 : vector<32x32xf32>
    %cst_166 = arith.constant 9.750000e-01 : f32
    %463 = vector.broadcast %cst_166 : f32 to vector<32x32xf32>
    %464 = arith.mulf %463, %462 : vector<32x32xf32>
    %465 = arith.addf %264, %464 : vector<32x32xf32>
    %c0_167 = arith.constant 0 : index
    %c0_168 = arith.constant 0 : index
    %466 = vector.load %arg15[%c0_167, %c0_168] : memref<1x32xf32, #tpu.memory_space<vmem>>, vector<1x32xf32>
    %c0_169 = arith.constant 0 : index
    %c0_170 = arith.constant 0 : index
    %467 = vector.load %arg16[%c0_169, %c0_170] : memref<1x32xf32, #tpu.memory_space<vmem>>, vector<1x32xf32>
    %cst_171 = arith.constant dense<0.000000e+00> : vector<32xf32>
    %468 = vector.multi_reduction <add>, %465, %cst_171 [1] : vector<32x32xf32> to vector<32xf32>
    %469 = vector.shape_cast %468 : vector<32xf32> to vector<32x1xf32>
    %cst_172 = arith.constant 3.200000e+01 : f32
    %470 = vector.broadcast %cst_172 : f32 to vector<32x1xf32>
    %471 = arith.divf %469, %470 : vector<32x1xf32>
    %472 = vector.broadcast %471 : vector<32x1xf32> to vector<32x32xf32>
    %473 = arith.subf %465, %472 : vector<32x32xf32>
    %474 = arith.mulf %473, %473 : vector<32x32xf32>
    %cst_173 = arith.constant dense<0.000000e+00> : vector<32xf32>
    %475 = vector.multi_reduction <add>, %474, %cst_173 [1] : vector<32x32xf32> to vector<32xf32>
    %476 = vector.shape_cast %475 : vector<32xf32> to vector<32x1xf32>
    %cst_174 = arith.constant 3.200000e+01 : f32
    %477 = vector.broadcast %cst_174 : f32 to vector<32x1xf32>
    %478 = arith.divf %476, %477 : vector<32x1xf32>
    %479 = vector.broadcast %471 : vector<32x1xf32> to vector<32x32xf32>
    %480 = arith.subf %465, %479 : vector<32x32xf32>
    %cst_175 = arith.constant 9.99999974E-6 : f32
    %481 = vector.broadcast %cst_175 : f32 to vector<32x1xf32>
    %482 = arith.addf %478, %481 : vector<32x1xf32>
    %483 = math.rsqrt %482 : vector<32x1xf32>
    %484 = vector.broadcast %483 : vector<32x1xf32> to vector<32x32xf32>
    %485 = arith.mulf %480, %484 : vector<32x32xf32>
    %486 = vector.broadcast %466 : vector<1x32xf32> to vector<32x32xf32>
    %487 = arith.mulf %485, %486 : vector<32x32xf32>
    %488 = vector.broadcast %467 : vector<1x32xf32> to vector<32x32xf32>
    %489 = arith.addf %487, %488 : vector<32x32xf32>
    %490 = vector.broadcast %0 : vector<32x1xf32> to vector<32x32xf32>
    %491 = arith.mulf %489, %490 : vector<32x32xf32>
    %c0_176 = arith.constant 0 : index
    %c0_177 = arith.constant 0 : index
    %492 = vector.load %arg17[%c0_176, %c0_177] : memref<32x32xf32, #tpu.memory_space<vmem>>, vector<32x32xf32>
    %cst_178 = arith.constant dense<0.000000e+00> : vector<32x32xf32>
    %493 = tpu.matmul %491, %492, %cst_178 {dimension_numbers = #tpu.dot_dimension_numbers<[1], [0], [0], [1], [0, 0, 1, 1], [], []>} : vector<32x32xf32>, vector<32x32xf32>, vector<32x32xf32> -> vector<32x32xf32>
    %cst_179 = arith.constant 0.000000e+00 : f32
    %494 = vector.broadcast %cst_179 : f32 to vector<32x32xf32>
    %495 = arith.cmpf ogt, %493, %494 : vector<32x32xf32>
    %cst_180 = arith.constant 0.00999999977 : f32
    %496 = vector.broadcast %cst_180 : f32 to vector<32x32xf32>
    %497 = arith.mulf %496, %493 : vector<32x32xf32>
    %498 = arith.select %495, %493, %497 : vector<32x32xi1>, vector<32x32xf32>
    %499 = vector.broadcast %0 : vector<32x1xf32> to vector<32x32xf32>
    %500 = arith.mulf %498, %499 : vector<32x32xf32>
    %cst_181 = arith.constant dense<0.000000e+00> : vector<32x32xf32>
    %501 = tpu.matmul %500, %492, %cst_181 {dimension_numbers = #tpu.dot_dimension_numbers<[1], [0], [0], [1], [0, 0, 1, 1], [], []>} : vector<32x32xf32>, vector<32x32xf32>, vector<32x32xf32> -> vector<32x32xf32>
    %502 = vector.broadcast %0 : vector<32x1xf32> to vector<32x32xf32>
    %503 = arith.mulf %501, %502 : vector<32x32xf32>
    %cst_182 = arith.constant 0.962499976 : f32
    %504 = vector.broadcast %cst_182 : f32 to vector<32x32xf32>
    %505 = arith.mulf %504, %503 : vector<32x32xf32>
    %506 = arith.addf %465, %505 : vector<32x32xf32>
    %c0_183 = arith.constant 0 : index
    %c0_184 = arith.constant 0 : index
    %507 = vector.load %arg18[%c0_183, %c0_184] : memref<32x32xf32, #tpu.memory_space<vmem>>, vector<32x32xf32>
    tpu.vector_store %arg18[%c0_183, %c0_184], %506 {strides = array<i32>} : memref<32x32xf32, #tpu.memory_space<vmem>>, vector<32x32xf32>,
    return
  }
  func.func @transform_0(%arg0: i32) -> (i32, i32) {
    %c0_i32 = arith.constant 0 : i32
    %c0_i32_0 = arith.constant 0 : i32
    return %arg0, %c0_i32 : i32, i32
  }
  func.func @transform_1(%arg0: i32) -> (i32, i32) {
    %c0_i32 = arith.constant 0 : i32
    %c0_i32_0 = arith.constant 0 : i32
    return %arg0, %c0_i32 : i32, i32
  }
  func.func @transform_2(%arg0: i32) -> (i32, i32, i32) {
    %c0_i32 = arith.constant 0 : i32
    %c0_i32_0 = arith.constant 0 : i32
    %c0_i32_1 = arith.constant 0 : i32
    return %arg0, %c0_i32, %c0_i32_0 : i32, i32, i32
  }
  func.func @transform_3(%arg0: i32) -> (i32, i32) {
    %c0_i32 = arith.constant 0 : i32
    %c0_i32_0 = arith.constant 0 : i32
    %c0_i32_1 = arith.constant 0 : i32
    return %c0_i32, %c0_i32_0 : i32, i32
  }
  func.func @transform_4(%arg0: i32) -> (i32, i32) {
    %c0_i32 = arith.constant 0 : i32
    %c0_i32_0 = arith.constant 0 : i32
    %c0_i32_1 = arith.constant 0 : i32
    return %c0_i32, %c0_i32_0 : i32, i32
  }
  func.func @transform_5(%arg0: i32) -> (i32, i32) {
    %c0_i32 = arith.constant 0 : i32
    %c0_i32_0 = arith.constant 0 : i32
    %c0_i32_1 = arith.constant 0 : i32
    return %c0_i32, %c0_i32_0 : i32, i32
  }
  func.func @transform_6(%arg0: i32) -> (i32, i32, i32) {
    %c0_i32 = arith.constant 0 : i32
    %c0_i32_0 = arith.constant 0 : i32
    %c0_i32_1 = arith.constant 0 : i32
    %c0_i32_2 = arith.constant 0 : i32
    return %c0_i32, %c0_i32_0, %c0_i32_1 : i32, i32, i32
  }
  func.func @transform_7(%arg0: i32) -> (i32, i32) {
    %c0_i32 = arith.constant 0 : i32
    %c0_i32_0 = arith.constant 0 : i32
    %c0_i32_1 = arith.constant 0 : i32
    return %c0_i32, %c0_i32_0 : i32, i32
  }
  func.func @transform_8(%arg0: i32) -> (i32, i32, i32) {
    %c0_i32 = arith.constant 0 : i32
    %c0_i32_0 = arith.constant 0 : i32
    %c0_i32_1 = arith.constant 0 : i32
    %c0_i32_2 = arith.constant 0 : i32
    return %c0_i32, %c0_i32_0, %c0_i32_1 : i32, i32, i32
  }
  func.func @transform_9(%arg0: i32) -> (i32, i32) {
    %c0_i32 = arith.constant 0 : i32
    %c0_i32_0 = arith.constant 0 : i32
    %c0_i32_1 = arith.constant 0 : i32
    return %c0_i32, %c0_i32_0 : i32, i32
  }
  func.func @transform_10(%arg0: i32) -> (i32, i32) {
    %c0_i32 = arith.constant 0 : i32
    %c0_i32_0 = arith.constant 0 : i32
    %c0_i32_1 = arith.constant 0 : i32
    return %c0_i32, %c0_i32_0 : i32, i32
  }
  func.func @transform_11(%arg0: i32) -> (i32, i32) {
    %c0_i32 = arith.constant 0 : i32
    %c0_i32_0 = arith.constant 0 : i32
    %c0_i32_1 = arith.constant 0 : i32
    return %c0_i32, %c0_i32_0 : i32, i32
  }
  func.func @transform_12(%arg0: i32) -> (i32, i32) {
    %c0_i32 = arith.constant 0 : i32
    %c0_i32_0 = arith.constant 0 : i32
    %c0_i32_1 = arith.constant 0 : i32
    return %c0_i32, %c0_i32_0 : i32, i32
  }
  func.func @transform_13(%arg0: i32) -> (i32, i32) {
    %c0_i32 = arith.constant 0 : i32
    %c0_i32_0 = arith.constant 0 : i32
    %c0_i32_1 = arith.constant 0 : i32
    return %c0_i32, %c0_i32_0 : i32, i32
  }
  func.func @transform_14(%arg0: i32) -> (i32, i32) {
    %c0_i32 = arith.constant 0 : i32
    %c0_i32_0 = arith.constant 0 : i32
    %c0_i32_1 = arith.constant 0 : i32
    return %c0_i32, %c0_i32_0 : i32, i32
  }
  func.func @transform_15(%arg0: i32) -> (i32, i32) {
    %c0_i32 = arith.constant 0 : i32
    %c0_i32_0 = arith.constant 0 : i32
    %c0_i32_1 = arith.constant 0 : i32
    return %c0_i32, %c0_i32_0 : i32, i32
  }
  func.func @transform_16(%arg0: i32) -> (i32, i32) {
    %c0_i32 = arith.constant 0 : i32
    %c0_i32_0 = arith.constant 0 : i32
    %c0_i32_1 = arith.constant 0 : i32
    return %c0_i32, %c0_i32_0 : i32, i32
  }
  func.func @transform_17(%arg0: i32) -> (i32, i32) {
    %c0_i32 = arith.constant 0 : i32
    %c0_i32_0 = arith.constant 0 : i32
    return %arg0, %c0_i32 : i32, i32
  }
}

</mosaic_0001>

<llo_original>
// kernel: tpu_custom_call.1
$region0: #{tpu_custom_call.1}
  #allocation0 [shape = 'u32[]', space=smem, size = 0x4, offset = 0x4, fixed_abs, tag = 'smem constant byte address 0x4 - core index']
  #allocation1 [shape = 'u32[144,128]{1,0:T(1,128)}', space=vmem, size = 0x12000, scoped, tag = 'internal scratch']
  #allocation2 [shape = 'f32[32,32]{1,0:T(8,128)}', space=vmem, size = 0x4000, scoped, tag = 'scratch operand']
  %s0 = inlined_call_operand.vmem [shape: f32[64,32], index: 0, kind: input, shape index: {}]
  %s1 = inlined_call_operand.vmem [shape: f32[64,1], index: 1, kind: input, shape index: {}]
  %s2 = inlined_call_operand.hbm [shape: f32[4,1,16], index: 2, kind: input, shape index: {}]
  %s3 = inlined_call_operand.vmem [shape: f32[32,32], index: 3, kind: input, shape index: {}]
  %s4 = inlined_call_operand.vmem [shape: f32[2,32], index: 4, kind: input, shape index: {}]
  %s5 = inlined_call_operand.hbm [shape: f32[2,32], index: 5, kind: input, shape index: {}]
  %s6 = inlined_call_operand.vmem [shape: f32[2,5,32], index: 6, kind: input, shape index: {}]
  %s7 = inlined_call_operand.vmem [shape: f32[2,32], index: 7, kind: input, shape index: {}]
  %s8 = inlined_call_operand.vmem [shape: f32[2,32,32], index: 8, kind: input, shape index: {}]
  %s9 = inlined_call_operand.vmem [shape: f32[2,32], index: 9, kind: input, shape index: {}]
  %s10 = inlined_call_operand.vmem [shape: f32[1,32], index: 10, kind: input, shape index: {}]
  %s11 = inlined_call_operand.vmem [shape: f32[1,32], index: 11, kind: input, shape index: {}]
  %s12 = inlined_call_operand.vmem [shape: f32[32,96], index: 12, kind: input, shape index: {}]
  %s13 = inlined_call_operand.vmem [shape: f32[32,32], index: 13, kind: input, shape index: {}]
  %s14 = inlined_call_operand.vmem [shape: f32[1,32], index: 14, kind: input, shape index: {}]
  %s15 = inlined_call_operand.vmem [shape: f32[1,32], index: 15, kind: input, shape index: {}]
  %s16 = inlined_call_operand.vmem [shape: f32[32,32], index: 16, kind: input, shape index: {}]
  %s17 = inlined_call_operand.vmem [shape: f32[64,32], index: 17, kind: output, shape index: {}]
  %s18 = sld [smem:[#allocation0]]
  $region109: #{tpu_custom_call.1} parent=0
    _
  %s20 = ssub.s32 1, %s18
  %s21 = scalar_select 0, %s20, %s18
  $region1: #{tpu_custom_call.1} parent=0
    #allocation3 [shape = 'u8[2048]{0}', space=vmem, size = 0x800, scoped, tag = 'input window, operand 2']
    #allocation4 [shape = 's32[2]{0}', space=sflag, size = 0x8, scoped, tag = 'scoped memory for tpu_custom_call.1']
    #allocation5 [shape = 'u8[1024]{0}', space=vmem, size = 0x400, scoped, tag = 'input window, operand 5, single buffered']
    #allocation6 [shape = 's32[1]{0}', space=sflag, size = 0x4, scoped, tag = 'scoped memory for tpu_custom_call.1']
    %22 = vsyncpa [#allocation4], 0
    %s23 = scalar_lea.sflag [#allocation4], 1
    %24 = vsyncpa %s23, 0
    %25 = vsyncpa [#allocation6], 0
    loop: start=0, step=1, limit=4
    $region2: #{tpu_custom_call.1} parent=1 // loop_pre_header
      _
    $region3: #{tpu_custom_call.1} parent=1 // loop_header
      %s27 = sphi 0, %s31
      %p28 = scmp.ge.s32.totalorder %s27, 4
      %s37 = sphi 0, %s39
      %s40 = sphi 0, %s37
      %s41 = sphi 0, %s40
      %s57 = sphi 0, %s41
      %s63 = sphi 0, %s65
      %s66 = sphi 0, %s63
      %s67 = sphi 0, %s66
      %s83 = sphi 0, %s67
      %s89 = sphi 0, %s91
      %s92 = sphi 0, %s89
      %s93 = sphi 0, %s92
      %s109 = sphi 0, %s93
      %s113 = sphi 0, %s113
      %s115 = sphi 0, %s113
      %s116 = sphi 0, %s115
      %s130 = sphi 0, %s116
      %s134 = sphi 0, %s134
      %s136 = sphi 0, %s134
      %s137 = sphi 0, %s136
      %s151 = sphi 0, %s137
      %s155 = sphi 0, %s155
      %s157 = sphi 0, %s155
      %s158 = sphi 0, %s157
      %s172 = sphi 0, %s158
      %s176 = sphi 0, %s176
      %s178 = sphi 0, %s176
      %s179 = sphi 0, %s178
      %s193 = sphi 0, %s179
      %s197 = sphi 0, %s197
      %s199 = sphi 0, %s197
      %s200 = sphi 0, %s199
      %s214 = sphi 0, %s200
      %s218 = sphi 0, %s218
      %s220 = sphi 0, %s218
      %s221 = sphi 0, %s220
      %s235 = sphi 0, %s221
      %s239 = sphi 0, %s239
      %s241 = sphi 0, %s239
      %s242 = sphi 0, %s241
      %s256 = sphi 0, %s242
      %s260 = sphi 0, %s260
      %s262 = sphi 0, %s260
      %s263 = sphi 0, %s262
      %s277 = sphi 0, %s263
      %s281 = sphi 0, %s281
      %s283 = sphi 0, %s281
      %s284 = sphi 0, %s283
      %s298 = sphi 0, %s284
      %s302 = sphi 0, %s302
      %s304 = sphi 0, %s302
      %s305 = sphi 0, %s304
      %s319 = sphi 0, %s305
      %s323 = sphi 0, %s323
      %s325 = sphi 0, %s323
      %s326 = sphi 0, %s325
      %s340 = sphi 0, %s326
      %s344 = sphi 0, %s344
      %s346 = sphi 0, %s344
      %s347 = sphi 0, %s346
      %s361 = sphi 0, %s347
      %s365 = sphi 0, %s365
      %s367 = sphi 0, %s365
      %s368 = sphi 0, %s367
      %s382 = sphi 0, %s368
      %s386 = sphi 0, %s386
      %s388 = sphi 0, %s386
      %s389 = sphi 0, %s388
      %s403 = sphi 0, %s389
      %s409 = sphi 0, %s411
      %s412 = sphi 0, %s409
      %s413 = sphi 0, %s412
      %s429 = sphi 0, %s413
    $region4: #{tpu_custom_call.1} parent=1 // loop_header_branch
      %30 = sbr.rel (%p28) target = $region8
    $region5: #{tpu_custom_call.1} parent=1 // loop_body
      %s32 = ssub.s32 %s27, 1
      %s33 = ssub.s32 %s27, 2
      %s34 = sadd.s32 %s27, 1
      %s35 = ssub.s32 %s27, %s34
      %p36 = scmp.eq.s32.totalorder %s35, 0
      %s38 = sadd.s32 %s37, 1
      %s39 = scalar_select %p36, %s37, %s38
      %p42 = pneg %p36
      %p43 = scmp.eq.s32.totalorder %s27, 1
      %p44 = por %p42, %p43
      %p45 = scmp.ne.s32.totalorder %s37, %s40
      %p46 = scmp.eq.s32.totalorder %s27, 0
      %p47 = por %p45, %p46
      %p48 = scmp.ne.s32.totalorder %s37, %s40
      %p49 = scmp.eq.s32.totalorder %s32, 1
      %p50 = por %p48, %p49
      %p51 = scmp.ne.s32.totalorder %s40, %s41
      %p52 = scmp.eq.s32.totalorder %s32, 0
      %p53 = por %p51, %p52
      %p54 = scmp.ne.s32.totalorder %s40, %s41
      %p55 = scmp.eq.s32.totalorder %s33, 1
      %p56 = por %p54, %p55
      %p58 = scmp.ne.s32.totalorder %s41, %s57
      %p59 = scmp.eq.s32.totalorder %s33, 0
      %p60 = por %p58, %p59
      %s61 = ssub.s32 %s27, %s34
      %p62 = scmp.eq.s32.totalorder %s61, 0
      %s64 = sadd.s32 %s63, 1
      %s65 = scalar_select %p62, %s63, %s64
      %p68 = pneg %p62
      %p69 = scmp.eq.s32.totalorder %s27, 1
      %p70 = por %p68, %p69
      %p71 = scmp.ne.s32.totalorder %s63, %s66
      %p72 = scmp.eq.s32.totalorder %s27, 0
      %p73 = por %p71, %p72
      %p74 = scmp.ne.s32.totalorder %s63, %s66
      %p75 = scmp.eq.s32.totalorder %s32, 1
      %p76 = por %p74, %p75
      %p77 = scmp.ne.s32.totalorder %s66, %s67
      %p78 = scmp.eq.s32.totalorder %s32, 0
      %p79 = por %p77, %p78
      %p80 = scmp.ne.s32.totalorder %s66, %s67
      %p81 = scmp.eq.s32.totalorder %s33, 1
      %p82 = por %p80, %p81
      %p84 = scmp.ne.s32.totalorder %s67, %s83
      %p85 = scmp.eq.s32.totalorder %s33, 0
      %p86 = por %p84, %p85
      %s87 = ssub.s32 %s27, %s34
      %p88 = scmp.eq.s32.totalorder %s87, 0
      %s90 = sadd.s32 %s89, 1
      %s91 = scalar_select %p88, %s89, %s90
      %p94 = pneg %p88
      %p95 = scmp.eq.s32.totalorder %s27, 1
      %p96 = por %p94, %p95
      %p97 = scmp.ne.s32.totalorder %s89, %s92
      %p98 = scmp.eq.s32.totalorder %s27, 0
      %p99 = por %p97, %p98
      %p100 = scmp.ne.s32.totalorder %s89, %s92
      %p101 = scmp.eq.s32.totalorder %s32, 1
      %p102 = por %p100, %p101
      %p103 = scmp.ne.s32.totalorder %s92, %s93
      %p104 = scmp.eq.s32.totalorder %s32, 0
      %p105 = por %p103, %p104
      %p106 = scmp.ne.s32.totalorder %s92, %s93
      %p107 = scmp.eq.s32.totalorder %s33, 1
      %p108 = por %p106, %p107
      %p110 = scmp.ne.s32.totalorder %s93, %s109
      %p111 = scmp.eq.s32.totalorder %s33, 0
      %p112 = por %p110, %p111
      %s114 = sadd.s32 %s113, 1
      %p117 = scmp.eq.s32.totalorder %s27, 1
      %p118 = scmp.ne.s32.totalorder %s113, %s115
      %p119 = scmp.eq.s32.totalorder %s27, 0
      %p120 = por %p118, %p119
      %p121 = scmp.ne.s32.totalorder %s113, %s115
      %p122 = scmp.eq.s32.totalorder %s32, 1
      %p123 = por %p121, %p122
      %p124 = scmp.ne.s32.totalorder %s115, %s116
      %p125 = scmp.eq.s32.totalorder %s32, 0
      %p126 = por %p124, %p125
      %p127 = scmp.ne.s32.totalorder %s115, %s116
      %p128 = scmp.eq.s32.totalorder %s33, 1
      %p129 = por %p127, %p128
      %p131 = scmp.ne.s32.totalorder %s116, %s130
      %p132 = scmp.eq.s32.totalorder %s33, 0
      %p133 = por %p131, %p132
      %s135 = sadd.s32 %s134, 1
      %p138 = scmp.eq.s32.totalorder %s27, 1
      %p139 = scmp.ne.s32.totalorder %s134, %s136
      %p140 = scmp.eq.s32.totalorder %s27, 0
      %p141 = por %p139, %p140
      %p142 = scmp.ne.s32.totalorder %s134, %s136
      %p143 = scmp.eq.s32.totalorder %s32, 1
      %p144 = por %p142, %p143
      %p145 = scmp.ne.s32.totalorder %s136, %s137
      %p146 = scmp.eq.s32.totalorder %s32, 0
      %p147 = por %p145, %p146
      %p148 = scmp.ne.s32.totalorder %s136, %s137
      %p149 = scmp.eq.s32.totalorder %s33, 1
      %p150 = por %p148, %p149
      %p152 = scmp.ne.s32.totalorder %s137, %s151
      %p153 = scmp.eq.s32.totalorder %s33, 0
      %p154 = por %p152, %p153
      %s156 = sadd.s32 %s155, 1
      %p159 = scmp.eq.s32.totalorder %s27, 1
      %p160 = scmp.ne.s32.totalorder %s155, %s157
      %p161 = scmp.eq.s32.totalorder %s27, 0
      %p162 = por %p160, %p161
      %p163 = scmp.ne.s32.totalorder %s155, %s157
      %p164 = scmp.eq.s32.totalorder %s32, 1
      %p165 = por %p163, %p164
      %p166 = scmp.ne.s32.totalorder %s157, %s158
      %p167 = scmp.eq.s32.totalorder %s32, 0
      %p168 = por %p166, %p167
      %p169 = scmp.ne.s32.totalorder %s157, %s158
      %p170 = scmp.eq.s32.totalorder %s33, 1
      %p171 = por %p169, %p170
      %p173 = scmp.ne.s32.totalorder %s158, %s172
      %p174 = scmp.eq.s32.totalorder %s33, 0
      %p175 = por %p173, %p174
      %s177 = sadd.s32 %s176, 1
      %p180 = scmp.eq.s32.totalorder %s27, 1
      %p181 = scmp.ne.s32.totalorder %s176, %s178
      %p182 = scmp.eq.s32.totalorder %s27, 0
      %p183 = por %p181, %p182
      %p184 = scmp.ne.s32.totalorder %s176, %s178
      %p185 = scmp.eq.s32.totalorder %s32, 1
      %p186 = por %p184, %p185
      %p187 = scmp.ne.s32.totalorder %s178, %s179
      %p188 = scmp.eq.s32.totalorder %s32, 0
      %p189 = por %p187, %p188
      %p190 = scmp.ne.s32.totalorder %s178, %s179
      %p191 = scmp.eq.s32.totalorder %s33, 1
      %p192 = por %p190, %p191
      %p194 = scmp.ne.s32.totalorder %s179, %s193
      %p195 = scmp.eq.s32.totalorder %s33, 0
      %p196 = por %p194, %p195
      %s198 = sadd.s32 %s197, 1
      %p201 = scmp.eq.s32.totalorder %s27, 1
      %p202 = scmp.ne.s32.totalorder %s197, %s199
      %p203 = scmp.eq.s32.totalorder %s27, 0
      %p204 = por %p202, %p203
      %p205 = scmp.ne.s32.totalorder %s197, %s199
      %p206 = scmp.eq.s32.totalorder %s32, 1
      %p207 = por %p205, %p206
      %p208 = scmp.ne.s32.totalorder %s199, %s200
      %p209 = scmp.eq.s32.totalorder %s32, 0
      %p210 = por %p208, %p209
      %p211 = scmp.ne.s32.totalorder %s199, %s200
      %p212 = scmp.eq.s32.totalorder %s33, 1
      %p213 = por %p211, %p212
      %p215 = scmp.ne.s32.totalorder %s200, %s214
      %p216 = scmp.eq.s32.totalorder %s33, 0
      %p217 = por %p215, %p216
      %s219 = sadd.s32 %s218, 1
      %p222 = scmp.eq.s32.totalorder %s27, 1
      %p223 = scmp.ne.s32.totalorder %s218, %s220
      %p224 = scmp.eq.s32.totalorder %s27, 0
      %p225 = por %p223, %p224
      %p226 = scmp.ne.s32.totalorder %s218, %s220
      %p227 = scmp.eq.s32.totalorder %s32, 1
      %p228 = por %p226, %p227
      %p229 = scmp.ne.s32.totalorder %s220, %s221
      %p230 = scmp.eq.s32.totalorder %s32, 0
      %p231 = por %p229, %p230
      %p232 = scmp.ne.s32.totalorder %s220, %s221
      %p233 = scmp.eq.s32.totalorder %s33, 1
      %p234 = por %p232, %p233
      %p236 = scmp.ne.s32.totalorder %s221, %s235
      %p237 = scmp.eq.s32.totalorder %s33, 0
      %p238 = por %p236, %p237
      %s240 = sadd.s32 %s239, 1
      %p243 = scmp.eq.s32.totalorder %s27, 1
      %p244 = scmp.ne.s32.totalorder %s239, %s241
      %p245 = scmp.eq.s32.totalorder %s27, 0
      %p246 = por %p244, %p245
      %p247 = scmp.ne.s32.totalorder %s239, %s241
      %p248 = scmp.eq.s32.totalorder %s32, 1
      %p249 = por %p247, %p248
      %p250 = scmp.ne.s32.totalorder %s241, %s242
      %p251 = scmp.eq.s32.totalorder %s32, 0
      %p252 = por %p250, %p251
      %p253 = scmp.ne.s32.totalorder %s241, %s242
      %p254 = scmp.eq.s32.totalorder %s33, 1
      %p255 = por %p253, %p254
      %p257 = scmp.ne.s32.totalorder %s242, %s256
      %p258 = scmp.eq.s32.totalorder %s33, 0
      %p259 = por %p257, %p258
      %s261 = sadd.s32 %s260, 1
      %p264 = scmp.eq.s32.totalorder %s27, 1
      %p265 = scmp.ne.s32.totalorder %s260, %s262
      %p266 = scmp.eq.s32.totalorder %s27, 0
      %p267 = por %p265, %p266
      %p268 = scmp.ne.s32.totalorder %s260, %s262
      %p269 = scmp.eq.s32.totalorder %s32, 1
      %p270 = por %p268, %p269
      %p271 = scmp.ne.s32.totalorder %s262, %s263
      %p272 = scmp.eq.s32.totalorder %s32, 0
      %p273 = por %p271, %p272
      %p274 = scmp.ne.s32.totalorder %s262, %s263
      %p275 = scmp.eq.s32.totalorder %s33, 1
      %p276 = por %p274, %p275
      %p278 = scmp.ne.s32.totalorder %s263, %s277
      %p279 = scmp.eq.s32.totalorder %s33, 0
      %p280 = por %p278, %p279
      %s282 = sadd.s32 %s281, 1
      %p285 = scmp.eq.s32.totalorder %s27, 1
      %p286 = scmp.ne.s32.totalorder %s281, %s283
      %p287 = scmp.eq.s32.totalorder %s27, 0
      %p288 = por %p286, %p287
      %p289 = scmp.ne.s32.totalorder %s281, %s283
      %p290 = scmp.eq.s32.totalorder %s32, 1
      %p291 = por %p289, %p290
      %p292 = scmp.ne.s32.totalorder %s283, %s284
      %p293 = scmp.eq.s32.totalorder %s32, 0
      %p294 = por %p292, %p293
      %p295 = scmp.ne.s32.totalorder %s283, %s284
      %p296 = scmp.eq.s32.totalorder %s33, 1
      %p297 = por %p295, %p296
      %p299 = scmp.ne.s32.totalorder %s284, %s298
      %p300 = scmp.eq.s32.totalorder %s33, 0
      %p301 = por %p299, %p300
      %s303 = sadd.s32 %s302, 1
      %p306 = scmp.eq.s32.totalorder %s27, 1
      %p307 = scmp.ne.s32.totalorder %s302, %s304
      %p308 = scmp.eq.s32.totalorder %s27, 0
      %p309 = por %p307, %p308
      %p310 = scmp.ne.s32.totalorder %s302, %s304
      %p311 = scmp.eq.s32.totalorder %s32, 1
      %p312 = por %p310, %p311
      %p313 = scmp.ne.s32.totalorder %s304, %s305
      %p314 = scmp.eq.s32.totalorder %s32, 0
      %p315 = por %p313, %p314
      %p316 = scmp.ne.s32.totalorder %s304, %s305
      %p317 = scmp.eq.s32.totalorder %s33, 1
      %p318 = por %p316, %p317
      %p320 = scmp.ne.s32.totalorder %s305, %s319
      %p321 = scmp.eq.s32.totalorder %s33, 0
      %p322 = por %p320, %p321
      %s324 = sadd.s32 %s323, 1
      %p327 = scmp.eq.s32.totalorder %s27, 1
      %p328 = scmp.ne.s32.totalorder %s323, %s325
      %p329 = scmp.eq.s32.totalorder %s27, 0
      %p330 = por %p328, %p329
      %p331 = scmp.ne.s32.totalorder %s323, %s325
      %p332 = scmp.eq.s32.totalorder %s32, 1
      %p333 = por %p331, %p332
      %p334 = scmp.ne.s32.totalorder %s325, %s326
      %p335 = scmp.eq.s32.totalorder %s32, 0
      %p336 = por %p334, %p335
      %p337 = scmp.ne.s32.totalorder %s325, %s326
      %p338 = scmp.eq.s32.totalorder %s33, 1
      %p339 = por %p337, %p338
      %p341 = scmp.ne.s32.totalorder %s326, %s340
      %p342 = scmp.eq.s32.totalorder %s33, 0
      %p343 = por %p341, %p342
      %s345 = sadd.s32 %s344, 1
      %p348 = scmp.eq.s32.totalorder %s27, 1
      %p349 = scmp.ne.s32.totalorder %s344, %s346
      %p350 = scmp.eq.s32.totalorder %s27, 0
      %p351 = por %p349, %p350
      %p352 = scmp.ne.s32.totalorder %s344, %s346
      %p353 = scmp.eq.s32.totalorder %s32, 1
      %p354 = por %p352, %p353
      %p355 = scmp.ne.s32.totalorder %s346, %s347
      %p356 = scmp.eq.s32.totalorder %s32, 0
      %p357 = por %p355, %p356
      %p358 = scmp.ne.s32.totalorder %s346, %s347
      %p359 = scmp.eq.s32.totalorder %s33, 1
      %p360 = por %p358, %p359
      %p362 = scmp.ne.s32.totalorder %s347, %s361
      %p363 = scmp.eq.s32.totalorder %s33, 0
      %p364 = por %p362, %p363
      %s366 = sadd.s32 %s365, 1
      %p369 = scmp.eq.s32.totalorder %s27, 1
      %p370 = scmp.ne.s32.totalorder %s365, %s367
      %p371 = scmp.eq.s32.totalorder %s27, 0
      %p372 = por %p370, %p371
      %p373 = scmp.ne.s32.totalorder %s365, %s367
      %p374 = scmp.eq.s32.totalorder %s32, 1
      %p375 = por %p373, %p374
      %p376 = scmp.ne.s32.totalorder %s367, %s368
      %p377 = scmp.eq.s32.totalorder %s32, 0
      %p378 = por %p376, %p377
      %p379 = scmp.ne.s32.totalorder %s367, %s368
      %p380 = scmp.eq.s32.totalorder %s33, 1
      %p381 = por %p379, %p380
      %p383 = scmp.ne.s32.totalorder %s368, %s382
      %p384 = scmp.eq.s32.totalorder %s33, 0
      %p385 = por %p383, %p384
      %s387 = sadd.s32 %s386, 1
      %p390 = scmp.eq.s32.totalorder %s27, 1
      %p391 = scmp.ne.s32.totalorder %s386, %s388
      %p392 = scmp.eq.s32.totalorder %s27, 0
      %p393 = por %p391, %p392
      %p394 = scmp.ne.s32.totalorder %s386, %s388
      %p395 = scmp.eq.s32.totalorder %s32, 1
      %p396 = por %p394, %p395
      %p397 = scmp.ne.s32.totalorder %s388, %s389
      %p398 = scmp.eq.s32.totalorder %s32, 0
      %p399 = por %p397, %p398
      %p400 = scmp.ne.s32.totalorder %s388, %s389
      %p401 = scmp.eq.s32.totalorder %s33, 1
      %p402 = por %p400, %p401
      %p404 = scmp.ne.s32.totalorder %s389, %s403
      %p405 = scmp.eq.s32.totalorder %s33, 0
      %p406 = por %p404, %p405
      %s407 = ssub.s32 %s27, %s34
      %p408 = scmp.eq.s32.totalorder %s407, 0
      %s410 = sadd.s32 %s409, 1
      %s411 = scalar_select %p408, %s409, %s410
      %p414 = pneg %p408
      %p415 = scmp.eq.s32.totalorder %s27, 1
      %p416 = por %p414, %p415
      %p417 = scmp.ne.s32.totalorder %s409, %s412
      %p418 = scmp.eq.s32.totalorder %s27, 0
      %p419 = por %p417, %p418
      %p420 = scmp.ne.s32.totalorder %s409, %s412
      %p421 = scmp.eq.s32.totalorder %s32, 1
      %p422 = por %p420, %p421
      %p423 = scmp.ne.s32.totalorder %s412, %s413
      %p424 = scmp.eq.s32.totalorder %s32, 0
      %p425 = por %p423, %p424
      %p426 = scmp.ne.s32.totalorder %s412, %s413
      %p427 = scmp.eq.s32.totalorder %s33, 1
      %p428 = por %p426, %p427
      %p430 = scmp.ne.s32.totalorder %s413, %s429
      %p431 = scmp.eq.s32.totalorder %s33, 0
      %p432 = por %p430, %p431
      %p433 = scmp.le.s32.totalorder 1, %s27
      %p434 = scmp.lt.s32.totalorder %s27, 3
      %p435 = pnand %p433, %p434
      %p436 = pneg %p435
      // Predicated region
      $region9: #{tpu_custom_call.1} parent=5 // pred_check
        _
      $region10: #{tpu_custom_call.1} parent=5 // pred_check_branch
        %438 = sbr.rel (%p435) target = $region12
      $region11: #{tpu_custom_call.1} parent=5 // pred_region
        %s439 = ssub.s32 %s27, 1
        // Predicated region
        $region13: #{tpu_custom_call.1} parent=11 // pred_check
          %p440 = pneg %p126
        $region14: #{tpu_custom_call.1} parent=11 // pred_check_branch
          %442 = sbr.rel (%p440) target = $region16
        $region15: #{tpu_custom_call.1} parent=11 // pred_region
          _
        $region16: #{tpu_custom_call.1} parent=11 // pred_fallthru
          _
        // Predicated region
        $region17: #{tpu_custom_call.1} parent=11 // pred_check
          %p443 = pneg %p147
        $region18: #{tpu_custom_call.1} parent=11 // pred_check_branch
          %445 = sbr.rel (%p443) target = $region20
        $region19: #{tpu_custom_call.1} parent=11 // pred_region
          _
        $region20: #{tpu_custom_call.1} parent=11 // pred_fallthru
          _
        // Predicated region
        $region21: #{tpu_custom_call.1} parent=11 // pred_check
          %p446 = pneg %p168
        $region22: #{tpu_custom_call.1} parent=11 // pred_check_branch
          %448 = sbr.rel (%p446) target = $region24
        $region23: #{tpu_custom_call.1} parent=11 // pred_region
          %s450 = ssub.s32 32, 32
          %451 = vsyncadd [#allocation6], %s450
          %s453 = sshll.u32 [#allocation5], 4
          %s454 = int_to_ptr.vmem [resolvable:$true] %s453
          %456 = dma.hbm_to_vmem [thread:$0]  %s5, 32, %s454, [#allocation6]
        $region24: #{tpu_custom_call.1} parent=11 // pred_fallthru
          _
        // Predicated region
        $region25: #{tpu_custom_call.1} parent=11 // pred_check
          %p457 = pneg %p189
        $region26: #{tpu_custom_call.1} parent=11 // pred_check_branch
          %459 = sbr.rel (%p457) target = $region28
        $region27: #{tpu_custom_call.1} parent=11 // pred_region
          _
        $region28: #{tpu_custom_call.1} parent=11 // pred_fallthru
          _
        // Predicated region
        $region29: #{tpu_custom_call.1} parent=11 // pred_check
          %p460 = pneg %p210
        $region30: #{tpu_custom_call.1} parent=11 // pred_check_branch
          %462 = sbr.rel (%p460) target = $region32
        $region31: #{tpu_custom_call.1} parent=11 // pred_region
          _
        $region32: #{tpu_custom_call.1} parent=11 // pred_fallthru
          _
        // Predicated region
        $region33: #{tpu_custom_call.1} parent=11 // pred_check
          %p463 = pneg %p231
        $region34: #{tpu_custom_call.1} parent=11 // pred_check_branch
          %465 = sbr.rel (%p463) target = $region36
        $region35: #{tpu_custom_call.1} parent=11 // pred_region
          _
        $region36: #{tpu_custom_call.1} parent=11 // pred_fallthru
          _
        // Predicated region
        $region37: #{tpu_custom_call.1} parent=11 // pred_check
          %p466 = pneg %p252
        $region38: #{tpu_custom_call.1} parent=11 // pred_check_branch
          %468 = sbr.rel (%p466) target = $region40
        $region39: #{tpu_custom_call.1} parent=11 // pred_region
          _
        $region40: #{tpu_custom_call.1} parent=11 // pred_fallthru
          _
        // Predicated region
        $region41: #{tpu_custom_call.1} parent=11 // pred_check
          %p469 = pneg %p273
        $region42: #{tpu_custom_call.1} parent=11 // pred_check_branch
          %471 = sbr.rel (%p469) target = $region44
        $region43: #{tpu_custom_call.1} parent=11 // pred_region
          _
        $region44: #{tpu_custom_call.1} parent=11 // pred_fallthru
          _
        // Predicated region
        $region45: #{tpu_custom_call.1} parent=11 // pred_check
          %p472 = pneg %p294
        $region46: #{tpu_custom_call.1} parent=11 // pred_check_branch
          %474 = sbr.rel (%p472) target = $region48
        $region47: #{tpu_custom_call.1} parent=11 // pred_region
          _
        $region48: #{tpu_custom_call.1} parent=11 // pred_fallthru
          _
        // Predicated region
        $region49: #{tpu_custom_call.1} parent=11 // pred_check
          %p475 = pneg %p315
        $region50: #{tpu_custom_call.1} parent=11 // pred_check_branch
          %477 = sbr.rel (%p475) target = $region52
        $region51: #{tpu_custom_call.1} parent=11 // pred_region
          _
        $region52: #{tpu_custom_call.1} parent=11 // pred_fallthru
          _
        // Predicated region
        $region53: #{tpu_custom_call.1} parent=11 // pred_check
          %p478 = pneg %p336
        $region54: #{tpu_custom_call.1} parent=11 // pred_check_branch
          %480 = sbr.rel (%p478) target = $region56
        $region55: #{tpu_custom_call.1} parent=11 // pred_region
          _
        $region56: #{tpu_custom_call.1} parent=11 // pred_fallthru
          _
        // Predicated region
        $region57: #{tpu_custom_call.1} parent=11 // pred_check
          %p481 = pneg %p357
        $region58: #{tpu_custom_call.1} parent=11 // pred_check_branch
          %483 = sbr.rel (%p481) target = $region60
        $region59: #{tpu_custom_call.1} parent=11 // pred_region
          _
        $region60: #{tpu_custom_call.1} parent=11 // pred_fallthru
          _
        // Predicated region
        $region61: #{tpu_custom_call.1} parent=11 // pred_check
          %p484 = pneg %p378
        $region62: #{tpu_custom_call.1} parent=11 // pred_check_branch
          %486 = sbr.rel (%p484) target = $region64
        $region63: #{tpu_custom_call.1} parent=11 // pred_region
          _
        $region64: #{tpu_custom_call.1} parent=11 // pred_fallthru
          _
        // Predicated region
        $region65: #{tpu_custom_call.1} parent=11 // pred_check
          %p487 = pneg %p399
        $region66: #{tpu_custom_call.1} parent=11 // pred_check_branch
          %489 = sbr.rel (%p487) target = $region68
        $region67: #{tpu_custom_call.1} parent=11 // pred_region
          _
        $region68: #{tpu_custom_call.1} parent=11 // pred_fallthru
          _
      $region12: #{tpu_custom_call.1} parent=5 // pred_fallthru
        _
      %p490 = scmp.lt.s32.totalorder %s27, 2
      // Predicated region
      $region69: #{tpu_custom_call.1} parent=5 // pred_check
        %p491 = pneg %p490
      $region70: #{tpu_custom_call.1} parent=5 // pred_check_branch
        %493 = sbr.rel (%p491) target = $region72
      $region71: #{tpu_custom_call.1} parent=5 // pred_region
        // Predicated region
        $region73: #{tpu_custom_call.1} parent=71 // pred_check
          %p494 = pneg %p47
        $region74: #{tpu_custom_call.1} parent=71 // pred_check_branch
          %496 = sbr.rel (%p494) target = $region76
        $region75: #{tpu_custom_call.1} parent=71 // pred_region
          %s497 = smul.u32 4, %s27
          %p498 = scmp.lt.s32.totalorder %s497, 7
          %s499 = scalar_select %p498, %s497, 7
          %s500 = smul.addr %s499, 8
          %s501 = scalar_lea.vmem %s0, %s500
          %s502 = smul.u32 4, %s27
        $region76: #{tpu_custom_call.1} parent=71 // pred_fallthru
          _
        // Predicated region
        $region77: #{tpu_custom_call.1} parent=71 // pred_check
          %p503 = pneg %p73
        $region78: #{tpu_custom_call.1} parent=71 // pred_check_branch
          %505 = sbr.rel (%p503) target = $region80
        $region79: #{tpu_custom_call.1} parent=71 // pred_region
          %s506 = smul.u32 4, %s27
          %p507 = scmp.lt.s32.totalorder %s506, 7
          %s508 = scalar_select %p507, %s506, 7
          %s509 = smul.addr %s508, 8
          %s510 = scalar_lea.vmem %s1, %s509
          %s511 = smul.u32 4, %s27
        $region80: #{tpu_custom_call.1} parent=71 // pred_fallthru
          _
        // Predicated region
        $region81: #{tpu_custom_call.1} parent=71 // pred_check
          %p512 = pneg %p99
        $region82: #{tpu_custom_call.1} parent=71 // pred_check_branch
          %514 = sbr.rel (%p512) target = $region84
        $region83: #{tpu_custom_call.1} parent=71 // pred_region
          %s515 = sand.u32 %s89, 1
          %s516 = scalar_lea.sflag [#allocation4], %s515
          %s517 = sand.u32 %s89, 1
          %s518 = smul.addr %s517, 2
          %s519 = scalar_lea.vmem [#allocation3], %s518
          %s520 = smul.u32 2, %s27
          %s522 = ssub.s32 32, 32
          %523 = vsyncadd %s516, %s522
          %s524 = smul.addr %s520, 16
          %s525 = scalar_lea.hbm %s2, %s524
          %s526 = sshll.u32 %s519, 4
          %s527 = int_to_ptr.vmem [resolvable:$true] %s526
          %532 = dma.hbm_to_vmem [thread:$0]  %s525, 32, %s527, %s516, 16, 16, 1
        $region84: #{tpu_custom_call.1} parent=71 // pred_fallthru
          _
      $region72: #{tpu_custom_call.1} parent=5 // pred_fallthru
        _
      %p533 = scmp.le.s32.totalorder 1, %s27
      %p534 = scmp.lt.s32.totalorder %s27, 3
      %p535 = pnand %p533, %p534
      %p536 = pneg %p535
      // Predicated region
      $region85: #{tpu_custom_call.1} parent=5 // pred_check
        _
      $region86: #{tpu_custom_call.1} parent=5 // pred_check_branch
        %538 = sbr.rel (%p535) target = $region88
      $region87: #{tpu_custom_call.1} parent=5 // pred_region
        %s539 = ssub.s32 %s27, 1
        %s540 = sand.u32 %s92, 1
        %s541 = scalar_lea.sflag [#allocation4], %s540
        %s542 = sand.u32 %s92, 1
        %s543 = smul.addr %s542, 2
        %s544 = scalar_lea.vmem [#allocation3], %s543
        // Predicated region
        $region89: #{tpu_custom_call.1} parent=87 // pred_check
          %p545 = pneg %p105
        $region90: #{tpu_custom_call.1} parent=87 // pred_check_branch
          %547 = sbr.rel (%p545) target = $region92
        $region91: #{tpu_custom_call.1} parent=87 // pred_region
          %548 = dma.done %s541, 32
        $region92: #{tpu_custom_call.1} parent=87 // pred_fallthru
          _
        // Predicated region
        $region93: #{tpu_custom_call.1} parent=87 // pred_check
          %p549 = pneg %p168
        $region94: #{tpu_custom_call.1} parent=87 // pred_check_branch
          %551 = sbr.rel (%p549) target = $region96
        $region95: #{tpu_custom_call.1} parent=87 // pred_region
          %552 = dma.done [#allocation6], 32
        $region96: #{tpu_custom_call.1} parent=87 // pred_fallthru
          _
        %s553 = smul.u32 4, %s32
        %p554 = scmp.lt.s32.totalorder %s553, 7
        %s555 = scalar_select %p554, %s553, 7
        %s556 = smul.addr %s555, 8
        %s557 = scalar_lea.vmem %s0, %s556
        %p558 = pneg %p53
        %p559 = pneg %p50
        %s560 = smul.u32 4, %s32
        %p561 = scmp.lt.s32.totalorder %s560, 7
        %s562 = scalar_select %p561, %s560, 7
        %s563 = smul.addr %s562, 8
        %s564 = scalar_lea.vmem %s1, %s563
        %p565 = pneg %p79
        %p566 = pneg %p76
        %s567 = sand.u32 %s92, 1
        %s568 = scalar_lea.sflag [#allocation4], %s567
        %s569 = sand.u32 %s92, 1
        %s570 = smul.addr %s569, 2
        %s571 = scalar_lea.vmem [#allocation3], %s570
        %p572 = pneg %p105
        %p573 = pneg %p102
        %p574 = pneg %p126
        %p575 = pneg %p123
        %p576 = pneg %p147
        %p577 = pneg %p144
        %p578 = pneg %p168
        %p579 = pneg %p165
        %p580 = pneg %p189
        %p581 = pneg %p186
        %p582 = pneg %p210
        %p583 = pneg %p207
        %p584 = pneg %p231
        %p585 = pneg %p228
        %p586 = pneg %p252
        %p587 = pneg %p249
        %p588 = pneg %p273
        %p589 = pneg %p270
        %p590 = pneg %p294
        %p591 = pneg %p291
        %p592 = pneg %p315
        %p593 = pneg %p312
        %p594 = pneg %p336
        %p595 = pneg %p333
        %p596 = pneg %p357
        %p597 = pneg %p354
        %p598 = pneg %p378
        %p599 = pneg %p375
        %p600 = pneg %p399
        %p601 = pneg %p396
        %p602 = pneg %p425
        %p603 = pneg %p422
        %s604 = smul.u32 4, %s32
        %p605 = scmp.lt.s32.totalorder %s604, 7
        %s606 = scalar_select %p605, %s604, 7
        %s607 = smul.addr %s606, 8
        %s608 = scalar_lea.vmem %s17, %s607
        %s609 = smul.u32 4, %s32
        %p610 = scmp.lt.s32.totalorder %s609, 7
        %s611 = scalar_select %p610, %s609, 7
        %s612 = smul.addr %s611, 8
        %s613 = scalar_lea.vmem %s0, %s612
        %s614 = smul.u32 4, %s32
        %s615 = smul.u32 4, %s32
        %p616 = scmp.lt.s32.totalorder %s615, 7
        %s617 = scalar_select %p616, %s615, 7
        %s618 = smul.addr %s617, 8
        %s619 = scalar_lea.vmem %s1, %s618
        %s620 = smul.u32 4, %s32
        %s621 = smul.u32 2, %s32
        %s622 = smul.u32 4, %s32
        %p623 = scmp.lt.s32.totalorder %s622, 7
        %s624 = scalar_select %p623, %s622, 7
        %s625 = smul.addr %s624, 8
        %s626 = scalar_lea.vmem %s17, %s625
        %s627 = smul.u32 4, %s32
        %v628 = vld [vmem:[%s619] sm:$0xff]
        %v629 = vld [vmem:[%s619 + $0x8] sm:$0xff]
        %v630 = vld [vmem:[%s619 + $0x10] sm:$0xff]
        %v631 = vld [vmem:[%s619 + $0x18] sm:$0xff]
        %v632 = vld [vmem:[%s613] sm:$0xff]
        %v633 = vld [vmem:[%s613 + $0x8] sm:$0xff]
        %v634 = vld [vmem:[%s613 + $0x10] sm:$0xff]
        %v635 = vld [vmem:[%s613 + $0x18] sm:$0xff]
        %v636 = vld [vmem:[%s3] sm:$0xff]
        %v637 = vld [vmem:[%s3 + $0x8] sm:$0xff]
        %v638 = vld [vmem:[%s3 + $0x10] sm:$0xff]
        %v639 = vld [vmem:[%s3 + $0x18] sm:$0xff]
        %v640 = vadd.f32 %v632, %v636
        %v641 = vadd.f32 %v633, %v637
        %v642 = vadd.f32 %v634, %v638
        %v643 = vadd.f32 %v635, %v639
        %645 = vset.pattern.permute.xlu0 0
        %646 = vperm.xlu0 %645, %v628
        %v647 = vpop.permute.xlu0 %646
        %650 = vset.pattern.permute.xlu0 0
        %651 = vperm.xlu0 %650, %v629
        %v652 = vpop.permute.xlu0 %651
        %655 = vset.pattern.permute.xlu0 0
        %656 = vperm.xlu0 %655, %v630
        %v657 = vpop.permute.xlu0 %656
        %660 = vset.pattern.permute.xlu0 0
        %661 = vperm.xlu0 %660, %v631
        %v662 = vpop.permute.xlu0 %661
        %v664 = vmul.f32 %v640, %v647
        %v665 = vmul.f32 %v641, %v652
        %v666 = vmul.f32 %v642, %v657
        %v667 = vmul.f32 %v643, %v662
        %v668 = vlaneseq
        %v669 = vshrl.u32 %v668, 7
        %v670 = vadd.s32 %v669, 8
        %v671 = vadd.s32 %v669, 16
        %v672 = vadd.s32 %v669, 24
        %vm673 = vcmp.lt.s32.totalorder %v669, 0
        %v674 = vsub.s32 0, %v669
        %v675 = vsel %vm673, %v674, %v669
        %v676 = vshrl.u32 %v675, 4
        %v677 = vand.u32 %v675, 15
        %v678 = vsub.s32 0, %v677
        %v679 = vsel %vm673, %v678, %v677
        %vm680 = vcmp.lt.s32.totalorder %v670, 0
        %v681 = vsub.s32 0, %v670
        %v682 = vsel %vm680, %v681, %v670
        %v683 = vshrl.u32 %v682, 4
        %v684 = vand.u32 %v682, 15
        %v685 = vsub.s32 0, %v684
        %v686 = vsel %vm680, %v685, %v684
        %vm687 = vcmp.lt.s32.totalorder %v671, 0
        %v688 = vsub.s32 0, %v671
        %v689 = vsel %vm687, %v688, %v671
        %v690 = vshrl.u32 %v689, 4
        %v691 = vand.u32 %v689, 15
        %v692 = vsub.s32 0, %v691
        %v693 = vsel %vm687, %v692, %v691
        %vm694 = vcmp.lt.s32.totalorder %v672, 0
        %v695 = vsub.s32 0, %v672
        %v696 = vsel %vm694, %v695, %v672
        %v697 = vshrl.u32 %v696, 4
        %v698 = vand.u32 %v696, 15
        %v699 = vsub.s32 0, %v698
        %v700 = vsel %vm694, %v699, %v698
        %vm701 = vcmp.ne.s32.totalorder %v679, 0
        %vm702 = vcmp.ne.s32.totalorder %v686, 0
        %vm703 = vcmp.ne.s32.totalorder %v693, 0
        %vm704 = vcmp.ne.s32.totalorder %v700, 0
        %vm705 = vcmp.lt.s32.totalorder %v679, 0
        %vm706 = vcmp.lt.s32.totalorder %v686, 0
        %vm707 = vcmp.lt.s32.totalorder %v693, 0
        %vm708 = vcmp.lt.s32.totalorder %v700, 0
        %vm709 = vmand %vm705, %vm701
        %vm710 = vmand %vm706, %vm702
        %vm711 = vmand %vm707, %vm703
        %vm712 = vmand %vm708, %vm704
        %v713 = vadd.s32 %v679, 16
        %v714 = vadd.s32 %v686, 16
        %v715 = vadd.s32 %v693, 16
        %v716 = vadd.s32 %v700, 16
        %v717 = vsel %vm709, %v713, %v679
        %v718 = vsel %vm710, %v714, %v686
        %v719 = vsel %vm711, %v715, %v693
        %v720 = vsel %vm712, %v716, %v700
        %v721 = vld [vmem:[%s4] sm:$0x1]
        %v722 = vld [vmem:[#allocation5] sm:$0x1]
        %vm723 = vcmask 261120
        %v724 = vsel %vm723, %v664, 0.0
        %725 = vadd.xlane.f32.xlu0 %v724
        %v726 = vpop.xlane.xlu0 %725
        %v727 = vsel %vm723, %v665, 0.0
        %728 = vadd.xlane.f32.xlu0 %v727
        %v729 = vpop.xlane.xlu0 %728
        %v730 = vsel %vm723, %v666, 0.0
        %731 = vadd.xlane.f32.xlu0 %v730
        %v732 = vpop.xlane.xlu0 %731
        %v733 = vsel %vm723, %v667, 0.0
        %734 = vadd.xlane.f32.xlu0 %v733
        %v735 = vpop.xlane.xlu0 %734
        %v736 = vrcp.pop 32.0
        %v737 = vmul.f32 %v726, %v736
        %v738 = vmul.f32 %v729, %v736
        %v739 = vmul.f32 %v732, %v736
        %v740 = vmul.f32 %v735, %v736
        %v741 = vsub.f32 %v664, %v737
        %v742 = vsub.f32 %v665, %v738
        %v743 = vsub.f32 %v666, %v739
        %v744 = vsub.f32 %v667, %v740
        %v745 = vmul.f32 %v741, %v741
        %v746 = vmul.f32 %v742, %v742
        %v747 = vmul.f32 %v743, %v743
        %v748 = vmul.f32 %v744, %v744
        %v749 = vsel %vm723, %v745, 0.0
        %750 = vadd.xlane.f32.xlu0 %v749
        %v751 = vpop.xlane.xlu0 %750
        %v752 = vsel %vm723, %v746, 0.0
        %753 = vadd.xlane.f32.xlu0 %v752
        %v754 = vpop.xlane.xlu0 %753
        %v755 = vsel %vm723, %v747, 0.0
        %756 = vadd.xlane.f32.xlu0 %v755
        %v757 = vpop.xlane.xlu0 %756
        %v758 = vsel %vm723, %v748, 0.0
        %759 = vadd.xlane.f32.xlu0 %v758
        %v760 = vpop.xlane.xlu0 %759
        %v761 = vmul.f32 %v751, %v736
        %v762 = vmul.f32 %v754, %v736
        %v763 = vmul.f32 %v757, %v736
        %v764 = vmul.f32 %v760, %v736
        %v765 = vadd.f32 %v761, 1e-05
        %v766 = vadd.f32 %v762, 1e-05
        %v767 = vadd.f32 %v763, 1e-05
        %v768 = vadd.f32 %v764, 1e-05
        %v769 = vrsqrt.pop %v765
        %v770 = vrsqrt.pop %v766
        %v771 = vrsqrt.pop %v767
        %v772 = vrsqrt.pop %v768
        %v773 = vmul.f32 %v741, %v769
        %v774 = vmul.f32 %v742, %v770
        %v775 = vmul.f32 %v743, %v771
        %v776 = vmul.f32 %v744, %v772
        %v777 = vlaneseq
        %v778 = vshrl.u32 %v777, 7
        %v779 = vsub.s32 0, %v778
        %v780 = vrot.slane %v721, %v779
        %v781 = vmul.f32 %v773, %v780
        %v782 = vmul.f32 %v774, %v780
        %v783 = vmul.f32 %v775, %v780
        %v784 = vmul.f32 %v776, %v780
        %v785 = vlaneseq
        %v786 = vshrl.u32 %v785, 7
        %v787 = vsub.s32 0, %v786
        %v788 = vrot.slane %v722, %v787
        %v789 = vadd.f32 %v781, %v788
        %v790 = vadd.f32 %v782, %v788
        %v791 = vadd.f32 %v783, %v788
        %v792 = vadd.f32 %v784, %v788
        %v793 = vmul.f32 %v789, %v647
        %v794 = vmul.f32 %v790, %v652
        %v795 = vmul.f32 %v791, %v657
        %v796 = vmul.f32 %v792, %v662
        %v797 = vld [vmem:[%s6] sm:$0x1f]
        %v798 = vld [vmem:[%s7] sm:$0x1]
        %v799 = vlaneseq
        %v800 = vshrl.u32 %v799, 7
        %v801 = vsub.s32 0, %v800
        %v802 = vrot.slane %v798, %v801
        %v803 = vadd.f32 %v802, 0.0
        %v804 = vrot.slane %v793, 6
        %v805 = vrot.slane %v794, 6
        %v806 = vrot.slane %v795, 6
        %v807 = vrot.slane %v796, 6
        %vm808 = vcmp.lt.s32.totalorder %v669, 2
        %v809 = vsel %vm808, %v806, %v807
        %v810 = vsel %vm808, %v805, %v806
        %v811 = vsel %vm808, %v804, %v805
        %v812 = vsel %vm808, %v807, %v804
        %v813 = vadd.s32 %v717, 4294967294
        %v814 = vadd.s32 %v718, 4294967294
        %v815 = vadd.s32 %v719, 4294967294
        %v816 = vadd.s32 %v720, 4294967294
        %vm817 = vcmp.ge.s32.totalorder %v813, 0
        %vm818 = vcmp.ge.s32.totalorder %v814, 0
        %vm819 = vcmp.ge.s32.totalorder %v815, 0
        %vm820 = vcmp.ge.s32.totalorder %v816, 0
        %vm821 = vcmp.lt.s32.totalorder %v813, 16
        %vm822 = vcmp.lt.s32.totalorder %v814, 16
        %vm823 = vcmp.lt.s32.totalorder %v815, 16
        %vm824 = vcmp.lt.s32.totalorder %v816, 16
        %vm825 = vmand %vm817, %vm821
        %vm826 = vmand %vm818, %vm822
        %vm827 = vmand %vm819, %vm823
        %vm828 = vmand %vm820, %vm824
        %v829 = vsel %vm825, 1, 0
        %v830 = vsel %vm826, 1, 0
        %v831 = vsel %vm827, 1, 0
        %v832 = vsel %vm828, 1, 0
        %vm833 = vcmp.eq.s32.totalorder %v829, 1
        %vm834 = vcmp.eq.s32.totalorder %v830, 1
        %vm835 = vcmp.eq.s32.totalorder %v831, 1
        %vm836 = vcmp.eq.s32.totalorder %v832, 1
        %v837 = vsel %vm833, %v812, 0.0
        %v838 = vsel %vm834, %v811, 0.0
        %v839 = vsel %vm835, %v810, 0.0
        %v840 = vsel %vm836, %v809, 0.0
        %v841 = vlaneseq
        %v842 = vshrl.u32 %v841, 7
        %v843 = vsub.s32 0, %v842
        %v844 = vrot.slane %v797, %v843
        %v845 = vmul.f32 %v844, %v837
        %v846 = vmul.f32 %v844, %v838
        %v847 = vmul.f32 %v844, %v839
        %v848 = vmul.f32 %v844, %v840
        %v849 = vadd.f32 %v803, %v845
        %v850 = vadd.f32 %v803, %v846
        %v851 = vadd.f32 %v803, %v847
        %v852 = vadd.f32 %v803, %v848
        %v853 = vrot.slane %v793, 7
        %v854 = vrot.slane %v794, 7
        %v855 = vrot.slane %v795, 7
        %v856 = vrot.slane %v796, 7
        %vm857 = vcmp.lt.s32.totalorder %v669, 1
        %v858 = vsel %vm857, %v855, %v856
        %v859 = vsel %vm857, %v854, %v855
        %v860 = vsel %vm857, %v853, %v854
        %v861 = vsel %vm857, %v856, %v853
        %v862 = vadd.s32 %v717, 4294967295
        %v863 = vadd.s32 %v718, 4294967295
        %v864 = vadd.s32 %v719, 4294967295
        %v865 = vadd.s32 %v720, 4294967295
        %vm866 = vcmp.ge.s32.totalorder %v862, 0
        %vm867 = vcmp.ge.s32.totalorder %v863, 0
        %vm868 = vcmp.ge.s32.totalorder %v864, 0
        %vm869 = vcmp.ge.s32.totalorder %v865, 0
        %vm870 = vcmp.lt.s32.totalorder %v862, 16
        %vm871 = vcmp.lt.s32.totalorder %v863, 16
        %vm872 = vcmp.lt.s32.totalorder %v864, 16
        %vm873 = vcmp.lt.s32.totalorder %v865, 16
        %vm874 = vmand %vm866, %vm870
        %vm875 = vmand %vm867, %vm871
        %vm876 = vmand %vm868, %vm872
        %vm877 = vmand %vm869, %vm873
        %v878 = vsel %vm874, 1, 0
        %v879 = vsel %vm875, 1, 0
        %v880 = vsel %vm876, 1, 0
        %v881 = vsel %vm877, 1, 0
        %vm882 = vcmp.eq.s32.totalorder %v878, 1
        %vm883 = vcmp.eq.s32.totalorder %v879, 1
        %vm884 = vcmp.eq.s32.totalorder %v880, 1
        %vm885 = vcmp.eq.s32.totalorder %v881, 1
        %v886 = vsel %vm882, %v861, 0.0
        %v887 = vsel %vm883, %v860, 0.0
        %v888 = vsel %vm884, %v859, 0.0
        %v889 = vsel %vm885, %v858, 0.0
        %v890 = vlaneseq
        %v891 = vshrl.u32 %v890, 7
        %v892 = vsub.s32 1, %v891
        %v893 = vrot.slane %v797, %v892
        %v894 = vmul.f32 %v893, %v886
        %v895 = vmul.f32 %v893, %v887
        %v896 = vmul.f32 %v893, %v888
        %v897 = vmul.f32 %v893, %v889
        %v898 = vadd.f32 %v849, %v894
        %v899 = vadd.f32 %v850, %v895
        %v900 = vadd.f32 %v851, %v896
        %v901 = vadd.f32 %v852, %v897
        %v902 = vlaneseq
        %v903 = vshrl.u32 %v902, 7
        %v904 = vsub.s32 2, %v903
        %v905 = vrot.slane %v797, %v904
        %v906 = vmul.f32 %v905, %v793
        %v907 = vmul.f32 %v905, %v794
        %v908 = vmul.f32 %v905, %v795
        %v909 = vmul.f32 %v905, %v796
        %v910 = vadd.f32 %v898, %v906
        %v911 = vadd.f32 %v899, %v907
        %v912 = vadd.f32 %v900, %v908
        %v913 = vadd.f32 %v901, %v909
        %v914 = vrot.slane %v793, 1
        %v915 = vrot.slane %v794, 1
        %v916 = vrot.slane %v795, 1
        %v917 = vrot.slane %v796, 1
        %vm918 = vcmp.lt.s32.totalorder %v669, 7
        %v919 = vsel %vm918, %v916, %v917
        %v920 = vsel %vm918, %v915, %v916
        %v921 = vsel %vm918, %v914, %v915
        %v922 = vsel %vm918, %v917, %v914
        %v923 = vadd.s32 %v717, 1
        %v924 = vadd.s32 %v718, 1
        %v925 = vadd.s32 %v719, 1
        %v926 = vadd.s32 %v720, 1
        %vm927 = vcmp.ge.s32.totalorder %v923, 0
        %vm928 = vcmp.ge.s32.totalorder %v924, 0
        %vm929 = vcmp.ge.s32.totalorder %v925, 0
        %vm930 = vcmp.ge.s32.totalorder %v926, 0
        %vm931 = vcmp.lt.s32.totalorder %v923, 16
        %vm932 = vcmp.lt.s32.totalorder %v924, 16
        %vm933 = vcmp.lt.s32.totalorder %v925, 16
        %vm934 = vcmp.lt.s32.totalorder %v926, 16
        %vm935 = vmand %vm927, %vm931
        %vm936 = vmand %vm928, %vm932
        %vm937 = vmand %vm929, %vm933
        %vm938 = vmand %vm930, %vm934
        %v939 = vsel %vm935, 1, 0
        %v940 = vsel %vm936, 1, 0
        %v941 = vsel %vm937, 1, 0
        %v942 = vsel %vm938, 1, 0
        %vm943 = vcmp.eq.s32.totalorder %v939, 1
        %vm944 = vcmp.eq.s32.totalorder %v940, 1
        %vm945 = vcmp.eq.s32.totalorder %v941, 1
        %vm946 = vcmp.eq.s32.totalorder %v942, 1
        %v947 = vsel %vm943, %v921, 0.0
        %v948 = vsel %vm944, %v920, 0.0
        %v949 = vsel %vm945, %v919, 0.0
        %v950 = vsel %vm946, %v922, 0.0
        %v951 = vlaneseq
        %v952 = vshrl.u32 %v951, 7
        %v953 = vsub.s32 3, %v952
        %v954 = vrot.slane %v797, %v953
        %v955 = vmul.f32 %v954, %v947
        %v956 = vmul.f32 %v954, %v948
        %v957 = vmul.f32 %v954, %v949
        %v958 = vmul.f32 %v954, %v950
        %v959 = vadd.f32 %v910, %v955
        %v960 = vadd.f32 %v911, %v956
        %v961 = vadd.f32 %v912, %v957
        %v962 = vadd.f32 %v913, %v958
        %v963 = vrot.slane %v793, 2
        %v964 = vrot.slane %v794, 2
        %v965 = vrot.slane %v795, 2
        %v966 = vrot.slane %v796, 2
        %vm967 = vcmp.lt.s32.totalorder %v669, 6
        %v968 = vsel %vm967, %v965, %v966
        %v969 = vsel %vm967, %v964, %v965
        %v970 = vsel %vm967, %v963, %v964
        %v971 = vsel %vm967, %v966, %v963
        %v972 = vadd.s32 %v717, 2
        %v973 = vadd.s32 %v718, 2
        %v974 = vadd.s32 %v719, 2
        %v975 = vadd.s32 %v720, 2
        %vm976 = vcmp.ge.s32.totalorder %v972, 0
        %vm977 = vcmp.ge.s32.totalorder %v973, 0
        %vm978 = vcmp.ge.s32.totalorder %v974, 0
        %vm979 = vcmp.ge.s32.totalorder %v975, 0
        %vm980 = vcmp.lt.s32.totalorder %v972, 16
        %vm981 = vcmp.lt.s32.totalorder %v973, 16
        %vm982 = vcmp.lt.s32.totalorder %v974, 16
        %vm983 = vcmp.lt.s32.totalorder %v975, 16
        %vm984 = vmand %vm976, %vm980
        %vm985 = vmand %vm977, %vm981
        %vm986 = vmand %vm978, %vm982
        %vm987 = vmand %vm979, %vm983
        %v988 = vsel %vm984, 1, 0
        %v989 = vsel %vm985, 1, 0
        %v990 = vsel %vm986, 1, 0
        %v991 = vsel %vm987, 1, 0
        %vm992 = vcmp.eq.s32.totalorder %v988, 1
        %vm993 = vcmp.eq.s32.totalorder %v989, 1
        %vm994 = vcmp.eq.s32.totalorder %v990, 1
        %vm995 = vcmp.eq.s32.totalorder %v991, 1
        %v996 = vsel %vm992, %v970, 0.0
        %v997 = vsel %vm993, %v969, 0.0
        %v998 = vsel %vm994, %v968, 0.0
        %v999 = vsel %vm995, %v971, 0.0
        %v1000 = vlaneseq
        %v1001 = vshrl.u32 %v1000, 7
        %v1002 = vsub.s32 4, %v1001
        %v1003 = vrot.slane %v797, %v1002
        %v1004 = vmul.f32 %v1003, %v996
        %v1005 = vmul.f32 %v1003, %v997
        %v1006 = vmul.f32 %v1003, %v998
        %v1007 = vmul.f32 %v1003, %v999
        %v1008 = vadd.f32 %v959, %v1004
        %v1009 = vadd.f32 %v960, %v1005
        %v1010 = vadd.f32 %v961, %v1006
        %v1011 = vadd.f32 %v962, %v1007
        %v1012 = vmul.f32 %v1008, %v647
        %v1013 = vmul.f32 %v1009, %v652
        %v1014 = vmul.f32 %v1010, %v657
        %v1015 = vmul.f32 %v1011, %v662
        %v1016 = vld [vmem:[%s8] sm:$0xff]
        %v1017 = vld [vmem:[%s8 + $0x8] sm:$0xff]
        %v1018 = vld [vmem:[%s8 + $0x10] sm:$0xff]
        %v1019 = vld [vmem:[%s8 + $0x18] sm:$0xff]
        %v1020 = vld [vmem:[%s9] sm:$0x1]
        %v1021 = vlaneseq
        %v1022 = vshrl.u32 %v1021, 7
        %v1023 = vsub.s32 0, %v1022
        %v1024 = vrot.slane %v1020, %v1023
        %v1026 = vsel %vm723, %v1012, 0
        %v1029 = vsel %vm723, %v1013, 0
        %v1032 = vsel %vm723, %v1014, 0
        %v1035 = vsel %vm723, %v1015, 0
        %1037 = vmatprep.subr.mxu0 0.0
        %1038 = vmatpush1.msra.mxu0 0.0
        %1039 = vmatprep.subr.mxu0 0.0
        %1040 = vmatpush1.msra.mxu0 0.0
        %1041 = vmatprep.subr.mxu0 0.0
        %1042 = vmatpush1.msra.mxu0 0.0
        %1043 = vmatprep.subr.mxu0 0.0
        %1044 = vmatpush1.msra.mxu0 0.0
        %1045 = vmatprep.subr.mxu0 0.0
        %1046 = vmatpush1.msra.mxu0 0.0
        %1047 = vmatprep.subr.mxu0 0.0
        %1048 = vmatpush1.msra.mxu0 0.0
        %1049 = vmatprep.subr.mxu0 0.0
        %1050 = vmatpush1.msra.mxu0 0.0
        %1051 = vmatprep.subr.mxu0 0.0
        %1052 = vmatpush1.msra.mxu0 0.0
        %1053 = vmatprep.subr.mxu0 0.0
        %1054 = vmatpush1.msra.mxu0 0.0
        %1055 = vmatprep.subr.mxu0 0.0
        %1056 = vmatpush1.msra.mxu0 0.0
        %1057 = vmatprep.subr.mxu0 0.0
        %1058 = vmatpush1.msra.mxu0 0.0
        %1059 = vmatprep.subr.mxu0 0.0
        %1060 = vmatpush1.msra.mxu0 0.0
        %1061 = vmatprep.subr.mxu0 0.0
        %1062 = vmatpush1.msra.mxu0 %v1019
        %1063 = vmatprep.subr.mxu0 0.0
        %1064 = vmatpush1.msra.mxu0 %v1018
        %1065 = vmatprep.subr.mxu0 0.0
        %1066 = vmatpush1.msra.mxu0 %v1017
        %1067 = vmatprep.subr.mxu0 0.0
        %1068 = vmatpush1.msra.mxu0 %v1016
        %1069 = vmatprep.subr.mxu0 0.0
        %1070 = vmatpush2.msra.mxu0 0.0
        %1071 = vmatprep.subr.mxu0 0.0
        %1072 = vmatpush2.msra.mxu0 0.0
        %1073 = vmatprep.subr.mxu0 0.0
        %1074 = vmatpush2.msra.mxu0 0.0
        %1075 = vmatprep.subr.mxu0 0.0
        %1076 = vmatpush2.msra.mxu0 0.0
        %1077 = vmatprep.subr.mxu0 0.0
        %1078 = vmatpush2.msra.mxu0 0.0
        %1079 = vmatprep.subr.mxu0 0.0
        %1080 = vmatpush2.msra.mxu0 0.0
        %1081 = vmatprep.subr.mxu0 0.0
        %1082 = vmatpush2.msra.mxu0 0.0
        %1083 = vmatprep.subr.mxu0 0.0
        %1084 = vmatpush2.msra.mxu0 0.0
        %1085 = vmatprep.subr.mxu0 0.0
        %1086 = vmatpush2.msra.mxu0 0.0
        %1087 = vmatprep.subr.mxu0 0.0
        %1088 = vmatpush2.msra.mxu0 0.0
        %1089 = vmatprep.subr.mxu0 0.0
        %1090 = vmatpush2.msra.mxu0 0.0
        %1091 = vmatprep.subr.mxu0 0.0
        %1092 = vmatpush2.msra.mxu0 0.0
        %1093 = vmatprep.subr.mxu0 0.0
        %1094 = vmatpush2.msra.mxu0 0.0
        %1095 = vmatprep.subr.mxu0 0.0
        %1096 = vmatpush2.msra.mxu0 0.0
        %1097 = vmatprep.subr.mxu0 0.0
        %1098 = vmatpush2.msra.mxu0 0.0
        %1099 = vmatprep.subr.mxu0 0.0
        %1100 = vmatpush2.msra.mxu0 0.0
        %1101 = vmatprep.mubr.f32.mxu0 0.0
        %1102 = vmatmul.mubr.f32.gmra.mxu0 %v1026
        %v1103 = vpop.f32.mrf.mxu0
        %v1104 = vadd.f32 %v1024, %v1103
        %v1105 = vpop.f32.mrf.mxu0
        %1106 = vmatprep.mubr.f32.mxu0 0.0
        %1107 = vmatmul.mubr.f32.gmra.mxu0 %v1029
        %v1108 = vpop.f32.mrf.mxu0
        %v1109 = vadd.f32 %v1024, %v1108
        %v1110 = vpop.f32.mrf.mxu0
        %1111 = vmatprep.mubr.f32.mxu0 0.0
        %1112 = vmatmul.mubr.f32.gmra.mxu0 %v1032
        %v1113 = vpop.f32.mrf.mxu0
        %v1114 = vadd.f32 %v1024, %v1113
        %v1115 = vpop.f32.mrf.mxu0
        %1116 = vmatprep.mubr.f32.mxu0 0.0
        %1117 = vmatmul.mubr.f32.gmra.mxu0 %v1035
        %v1118 = vpop.f32.mrf.mxu0
        %v1119 = vadd.f32 %v1024, %v1118
        %v1120 = vpop.f32.mrf.mxu0
        %1121 = vdwg.mxu0
        %v1122 = vmul.f32 %v1104, %v647
        %v1123 = vmul.f32 %v1109, %v652
        %v1124 = vmul.f32 %v1114, %v657
        %v1125 = vmul.f32 %v1119, %v662
        %v1126 = vadd.f32 %v664, %v1122
        %v1127 = vadd.f32 %v665, %v1123
        %v1128 = vadd.f32 %v666, %v1124
        %v1129 = vadd.f32 %v667, %v1125
        %v1130 = vld [vmem:[%s4 + $0x1] sm:$0x1]
        %v1131 = vld [vmem:[#allocation5 + $0x1] sm:$0x1]
        %v1132 = vsel %vm723, %v1126, 0.0
        %1133 = vadd.xlane.f32.xlu0 %v1132
        %v1134 = vpop.xlane.xlu0 %1133
        %v1135 = vsel %vm723, %v1127, 0.0
        %1136 = vadd.xlane.f32.xlu0 %v1135
        %v1137 = vpop.xlane.xlu0 %1136
        %v1138 = vsel %vm723, %v1128, 0.0
        %1139 = vadd.xlane.f32.xlu0 %v1138
        %v1140 = vpop.xlane.xlu0 %1139
        %v1141 = vsel %vm723, %v1129, 0.0
        %1142 = vadd.xlane.f32.xlu0 %v1141
        %v1143 = vpop.xlane.xlu0 %1142
        %v1144 = vmul.f32 %v1134, %v736
        %v1145 = vmul.f32 %v1137, %v736
        %v1146 = vmul.f32 %v1140, %v736
        %v1147 = vmul.f32 %v1143, %v736
        %v1148 = vsub.f32 %v1126, %v1144
        %v1149 = vsub.f32 %v1127, %v1145
        %v1150 = vsub.f32 %v1128, %v1146
        %v1151 = vsub.f32 %v1129, %v1147
        %v1152 = vmul.f32 %v1148, %v1148
        %v1153 = vmul.f32 %v1149, %v1149
        %v1154 = vmul.f32 %v1150, %v1150
        %v1155 = vmul.f32 %v1151, %v1151
        %v1156 = vsel %vm723, %v1152, 0.0
        %1157 = vadd.xlane.f32.xlu0 %v1156
        %v1158 = vpop.xlane.xlu0 %1157
        %v1159 = vsel %vm723, %v1153, 0.0
        %1160 = vadd.xlane.f32.xlu0 %v1159
        %v1161 = vpop.xlane.xlu0 %1160
        %v1162 = vsel %vm723, %v1154, 0.0
        %1163 = vadd.xlane.f32.xlu0 %v1162
        %v1164 = vpop.xlane.xlu0 %1163
        %v1165 = vsel %vm723, %v1155, 0.0
        %1166 = vadd.xlane.f32.xlu0 %v1165
        %v1167 = vpop.xlane.xlu0 %1166
        %v1168 = vmul.f32 %v1158, %v736
        %v1169 = vmul.f32 %v1161, %v736
        %v1170 = vmul.f32 %v1164, %v736
        %v1171 = vmul.f32 %v1167, %v736
        %v1172 = vadd.f32 %v1168, 1e-05
        %v1173 = vadd.f32 %v1169, 1e-05
        %v1174 = vadd.f32 %v1170, 1e-05
        %v1175 = vadd.f32 %v1171, 1e-05
        %v1176 = vrsqrt.pop %v1172
        %v1177 = vrsqrt.pop %v1173
        %v1178 = vrsqrt.pop %v1174
        %v1179 = vrsqrt.pop %v1175
        %v1180 = vmul.f32 %v1148, %v1176
        %v1181 = vmul.f32 %v1149, %v1177
        %v1182 = vmul.f32 %v1150, %v1178
        %v1183 = vmul.f32 %v1151, %v1179
        %v1184 = vlaneseq
        %v1185 = vshrl.u32 %v1184, 7
        %v1186 = vsub.s32 0, %v1185
        %v1187 = vrot.slane %v1130, %v1186
        %v1188 = vmul.f32 %v1180, %v1187
        %v1189 = vmul.f32 %v1181, %v1187
        %v1190 = vmul.f32 %v1182, %v1187
        %v1191 = vmul.f32 %v1183, %v1187
        %v1192 = vlaneseq
        %v1193 = vshrl.u32 %v1192, 7
        %v1194 = vsub.s32 0, %v1193
        %v1195 = vrot.slane %v1131, %v1194
        %v1196 = vadd.f32 %v1188, %v1195
        %v1197 = vadd.f32 %v1189, %v1195
        %v1198 = vadd.f32 %v1190, %v1195
        %v1199 = vadd.f32 %v1191, %v1195
        %v1200 = vmul.f32 %v1196, %v647
        %v1201 = vmul.f32 %v1197, %v652
        %v1202 = vmul.f32 %v1198, %v657
        %v1203 = vmul.f32 %v1199, %v662
        %s1204 = scalar_lea.vmem %s6, 8
        %v1205 = vld [vmem:[%s1204] sm:$0x1f]
        %v1206 = vld [vmem:[%s7 + $0x1] sm:$0x1]
        %v1207 = vlaneseq
        %v1208 = vshrl.u32 %v1207, 7
        %v1209 = vsub.s32 0, %v1208
        %v1210 = vrot.slane %v1206, %v1209
        %v1211 = vadd.f32 %v1210, 0.0
        %v1212 = vrot.slane %v1200, 6
        %v1213 = vrot.slane %v1201, 6
        %v1214 = vrot.slane %v1202, 6
        %v1215 = vrot.slane %v1203, 6
        %v1216 = vsel %vm808, %v1214, %v1215
        %v1217 = vsel %vm808, %v1213, %v1214
        %v1218 = vsel %vm808, %v1212, %v1213
        %v1219 = vsel %vm808, %v1215, %v1212
        %v1220 = vsel %vm833, %v1219, 0.0
        %v1221 = vsel %vm834, %v1218, 0.0
        %v1222 = vsel %vm835, %v1217, 0.0
        %v1223 = vsel %vm836, %v1216, 0.0
        %v1224 = vlaneseq
        %v1225 = vshrl.u32 %v1224, 7
        %v1226 = vsub.s32 0, %v1225
        %v1227 = vrot.slane %v1205, %v1226
        %v1228 = vmul.f32 %v1227, %v1220
        %v1229 = vmul.f32 %v1227, %v1221
        %v1230 = vmul.f32 %v1227, %v1222
        %v1231 = vmul.f32 %v1227, %v1223
        %v1232 = vadd.f32 %v1211, %v1228
        %v1233 = vadd.f32 %v1211, %v1229
        %v1234 = vadd.f32 %v1211, %v1230
        %v1235 = vadd.f32 %v1211, %v1231
        %v1236 = vrot.slane %v1200, 7
        %v1237 = vrot.slane %v1201, 7
        %v1238 = vrot.slane %v1202, 7
        %v1239 = vrot.slane %v1203, 7
        %v1240 = vsel %vm857, %v1238, %v1239
        %v1241 = vsel %vm857, %v1237, %v1238
        %v1242 = vsel %vm857, %v1236, %v1237
        %v1243 = vsel %vm857, %v1239, %v1236
        %v1244 = vsel %vm882, %v1243, 0.0
        %v1245 = vsel %vm883, %v1242, 0.0
        %v1246 = vsel %vm884, %v1241, 0.0
        %v1247 = vsel %vm885, %v1240, 0.0
        %v1248 = vlaneseq
        %v1249 = vshrl.u32 %v1248, 7
        %v1250 = vsub.s32 1, %v1249
        %v1251 = vrot.slane %v1205, %v1250
        %v1252 = vmul.f32 %v1251, %v1244
        %v1253 = vmul.f32 %v1251, %v1245
        %v1254 = vmul.f32 %v1251, %v1246
        %v1255 = vmul.f32 %v1251, %v1247
        %v1256 = vadd.f32 %v1232, %v1252
        %v1257 = vadd.f32 %v1233, %v1253
        %v1258 = vadd.f32 %v1234, %v1254
        %v1259 = vadd.f32 %v1235, %v1255
        %v1260 = vlaneseq
        %v1261 = vshrl.u32 %v1260, 7
        %v1262 = vsub.s32 2, %v1261
        %v1263 = vrot.slane %v1205, %v1262
        %v1264 = vmul.f32 %v1263, %v1200
        %v1265 = vmul.f32 %v1263, %v1201
        %v1266 = vmul.f32 %v1263, %v1202
        %v1267 = vmul.f32 %v1263, %v1203
        %v1268 = vadd.f32 %v1256, %v1264
        %v1269 = vadd.f32 %v1257, %v1265
        %v1270 = vadd.f32 %v1258, %v1266
        %v1271 = vadd.f32 %v1259, %v1267
        %v1272 = vrot.slane %v1200, 1
        %v1273 = vrot.slane %v1201, 1
        %v1274 = vrot.slane %v1202, 1
        %v1275 = vrot.slane %v1203, 1
        %v1276 = vsel %vm918, %v1274, %v1275
        %v1277 = vsel %vm918, %v1273, %v1274
        %v1278 = vsel %vm918, %v1272, %v1273
        %v1279 = vsel %vm918, %v1275, %v1272
        %v1280 = vsel %vm943, %v1278, 0.0
        %v1281 = vsel %vm944, %v1277, 0.0
        %v1282 = vsel %vm945, %v1276, 0.0
        %v1283 = vsel %vm946, %v1279, 0.0
        %v1284 = vlaneseq
        %v1285 = vshrl.u32 %v1284, 7
        %v1286 = vsub.s32 3, %v1285
        %v1287 = vrot.slane %v1205, %v1286
        %v1288 = vmul.f32 %v1287, %v1280
        %v1289 = vmul.f32 %v1287, %v1281
        %v1290 = vmul.f32 %v1287, %v1282
        %v1291 = vmul.f32 %v1287, %v1283
        %v1292 = vadd.f32 %v1268, %v1288
        %v1293 = vadd.f32 %v1269, %v1289
        %v1294 = vadd.f32 %v1270, %v1290
        %v1295 = vadd.f32 %v1271, %v1291
        %v1296 = vrot.slane %v1200, 2
        %v1297 = vrot.slane %v1201, 2
        %v1298 = vrot.slane %v1202, 2
        %v1299 = vrot.slane %v1203, 2
        %v1300 = vsel %vm967, %v1298, %v1299
        %v1301 = vsel %vm967, %v1297, %v1298
        %v1302 = vsel %vm967, %v1296, %v1297
        %v1303 = vsel %vm967, %v1299, %v1296
        %v1304 = vsel %vm992, %v1302, 0.0
        %v1305 = vsel %vm993, %v1301, 0.0
        %v1306 = vsel %vm994, %v1300, 0.0
        %v1307 = vsel %vm995, %v1303, 0.0
        %v1308 = vlaneseq
        %v1309 = vshrl.u32 %v1308, 7
        %v1310 = vsub.s32 4, %v1309
        %v1311 = vrot.slane %v1205, %v1310
        %v1312 = vmul.f32 %v1311, %v1304
        %v1313 = vmul.f32 %v1311, %v1305
        %v1314 = vmul.f32 %v1311, %v1306
        %v1315 = vmul.f32 %v1311, %v1307
        %v1316 = vadd.f32 %v1292, %v1312
        %v1317 = vadd.f32 %v1293, %v1313
        %v1318 = vadd.f32 %v1294, %v1314
        %v1319 = vadd.f32 %v1295, %v1315
        %v1320 = vmul.f32 %v1316, %v647
        %v1321 = vmul.f32 %v1317, %v652
        %v1322 = vmul.f32 %v1318, %v657
        %v1323 = vmul.f32 %v1319, %v662
        %s1324 = scalar_lea.vmem %s8, 32
        %v1325 = vld [vmem:[%s1324] sm:$0xff]
        %v1326 = vld [vmem:[%s1324 + $0x8] sm:$0xff]
        %v1327 = vld [vmem:[%s1324 + $0x10] sm:$0xff]
        %v1328 = vld [vmem:[%s1324 + $0x18] sm:$0xff]
        %v1329 = vld [vmem:[%s9 + $0x1] sm:$0x1]
        %v1330 = vlaneseq
        %v1331 = vshrl.u32 %v1330, 7
        %v1332 = vsub.s32 0, %v1331
        %v1333 = vrot.slane %v1329, %v1332
        %v1335 = vsel %vm723, %v1320, 0
        %v1338 = vsel %vm723, %v1321, 0
        %v1341 = vsel %vm723, %v1322, 0
        %v1344 = vsel %vm723, %v1323, 0
        %1346 = vmatprep.subr.mxu0 0.0
        %1347 = vmatpush1.msra.mxu0 0.0
        %1348 = vmatprep.subr.mxu0 0.0
        %1349 = vmatpush1.msra.mxu0 0.0
        %1350 = vmatprep.subr.mxu0 0.0
        %1351 = vmatpush1.msra.mxu0 0.0
        %1352 = vmatprep.subr.mxu0 0.0
        %1353 = vmatpush1.msra.mxu0 0.0
        %1354 = vmatprep.subr.mxu0 0.0
        %1355 = vmatpush1.msra.mxu0 0.0
        %1356 = vmatprep.subr.mxu0 0.0
        %1357 = vmatpush1.msra.mxu0 0.0
        %1358 = vmatprep.subr.mxu0 0.0
        %1359 = vmatpush1.msra.mxu0 0.0
        %1360 = vmatprep.subr.mxu0 0.0
        %1361 = vmatpush1.msra.mxu0 0.0
        %1362 = vmatprep.subr.mxu0 0.0
        %1363 = vmatpush1.msra.mxu0 0.0
        %1364 = vmatprep.subr.mxu0 0.0
        %1365 = vmatpush1.msra.mxu0 0.0
        %1366 = vmatprep.subr.mxu0 0.0
        %1367 = vmatpush1.msra.mxu0 0.0
        %1368 = vmatprep.subr.mxu0 0.0
        %1369 = vmatpush1.msra.mxu0 0.0
        %1370 = vmatprep.subr.mxu0 0.0
        %1371 = vmatpush1.msra.mxu0 %v1328
        %1372 = vmatprep.subr.mxu0 0.0
        %1373 = vmatpush1.msra.mxu0 %v1327
        %1374 = vmatprep.subr.mxu0 0.0
        %1375 = vmatpush1.msra.mxu0 %v1326
        %1376 = vmatprep.subr.mxu0 0.0
        %1377 = vmatpush1.msra.mxu0 %v1325
        %1378 = vmatprep.subr.mxu0 0.0
        %1379 = vmatpush2.msra.mxu0 0.0
        %1380 = vmatprep.subr.mxu0 0.0
        %1381 = vmatpush2.msra.mxu0 0.0
        %1382 = vmatprep.subr.mxu0 0.0
        %1383 = vmatpush2.msra.mxu0 0.0
        %1384 = vmatprep.subr.mxu0 0.0
        %1385 = vmatpush2.msra.mxu0 0.0
        %1386 = vmatprep.subr.mxu0 0.0
        %1387 = vmatpush2.msra.mxu0 0.0
        %1388 = vmatprep.subr.mxu0 0.0
        %1389 = vmatpush2.msra.mxu0 0.0
        %1390 = vmatprep.subr.mxu0 0.0
        %1391 = vmatpush2.msra.mxu0 0.0
        %1392 = vmatprep.subr.mxu0 0.0
        %1393 = vmatpush2.msra.mxu0 0.0
        %1394 = vmatprep.subr.mxu0 0.0
        %1395 = vmatpush2.msra.mxu0 0.0
        %1396 = vmatprep.subr.mxu0 0.0
        %1397 = vmatpush2.msra.mxu0 0.0
        %1398 = vmatprep.subr.mxu0 0.0
        %1399 = vmatpush2.msra.mxu0 0.0
        %1400 = vmatprep.subr.mxu0 0.0
        %1401 = vmatpush2.msra.mxu0 0.0
        %1402 = vmatprep.subr.mxu0 0.0
        %1403 = vmatpush2.msra.mxu0 0.0
        %1404 = vmatprep.subr.mxu0 0.0
        %1405 = vmatpush2.msra.mxu0 0.0
        %1406 = vmatprep.subr.mxu0 0.0
        %1407 = vmatpush2.msra.mxu0 0.0
        %1408 = vmatprep.subr.mxu0 0.0
        %1409 = vmatpush2.msra.mxu0 0.0
        %1410 = vmatprep.mubr.f32.mxu0 0.0
        %1411 = vmatmul.mubr.f32.gmra.mxu0 %v1335
        %v1412 = vpop.f32.mrf.mxu0
        %v1413 = vadd.f32 %v1333, %v1412
        %v1414 = vpop.f32.mrf.mxu0
        %1415 = vmatprep.mubr.f32.mxu0 0.0
        %1416 = vmatmul.mubr.f32.gmra.mxu0 %v1338
        %v1417 = vpop.f32.mrf.mxu0
        %v1418 = vadd.f32 %v1333, %v1417
        %v1419 = vpop.f32.mrf.mxu0
        %1420 = vmatprep.mubr.f32.mxu0 0.0
        %1421 = vmatmul.mubr.f32.gmra.mxu0 %v1341
        %v1422 = vpop.f32.mrf.mxu0
        %v1423 = vadd.f32 %v1333, %v1422
        %v1424 = vpop.f32.mrf.mxu0
        %1425 = vmatprep.mubr.f32.mxu0 0.0
        %1426 = vmatmul.mubr.f32.gmra.mxu0 %v1344
        %v1427 = vpop.f32.mrf.mxu0
        %v1428 = vadd.f32 %v1333, %v1427
        %v1429 = vpop.f32.mrf.mxu0
        %1430 = vdwg.mxu0
        %v1431 = vmul.f32 %v1413, %v647
        %v1432 = vmul.f32 %v1418, %v652
        %v1433 = vmul.f32 %v1423, %v657
        %v1434 = vmul.f32 %v1428, %v662
        %v1435 = vmul.f32 %v1431, 0.9875
        %v1436 = vmul.f32 %v1432, 0.9875
        %v1437 = vmul.f32 %v1433, 0.9875
        %v1438 = vmul.f32 %v1434, 0.9875
        %v1439 = vadd.f32 %v1126, %v1435
        %v1440 = vadd.f32 %v1127, %v1436
        %v1441 = vadd.f32 %v1128, %v1437
        %v1442 = vadd.f32 %v1129, %v1438
        %v1443 = vld [vmem:[%s10] sm:$0x1]
        %v1444 = vld [vmem:[%s11] sm:$0x1]
        %v1445 = vsel %vm723, %v1439, 0.0
        %1446 = vadd.xlane.f32.xlu0 %v1445
        %v1447 = vpop.xlane.xlu0 %1446
        %v1448 = vsel %vm723, %v1440, 0.0
        %1449 = vadd.xlane.f32.xlu0 %v1448
        %v1450 = vpop.xlane.xlu0 %1449
        %v1451 = vsel %vm723, %v1441, 0.0
        %1452 = vadd.xlane.f32.xlu0 %v1451
        %v1453 = vpop.xlane.xlu0 %1452
        %v1454 = vsel %vm723, %v1442, 0.0
        %1455 = vadd.xlane.f32.xlu0 %v1454
        %v1456 = vpop.xlane.xlu0 %1455
        %v1457 = vmul.f32 %v1447, %v736
        %v1458 = vmul.f32 %v1450, %v736
        %v1459 = vmul.f32 %v1453, %v736
        %v1460 = vmul.f32 %v1456, %v736
        %v1461 = vsub.f32 %v1439, %v1457
        %v1462 = vsub.f32 %v1440, %v1458
        %v1463 = vsub.f32 %v1441, %v1459
        %v1464 = vsub.f32 %v1442, %v1460
        %v1465 = vmul.f32 %v1461, %v1461
        %v1466 = vmul.f32 %v1462, %v1462
        %v1467 = vmul.f32 %v1463, %v1463
        %v1468 = vmul.f32 %v1464, %v1464
        %v1469 = vsel %vm723, %v1465, 0.0
        %1470 = vadd.xlane.f32.xlu0 %v1469
        %v1471 = vpop.xlane.xlu0 %1470
        %v1472 = vsel %vm723, %v1466, 0.0
        %1473 = vadd.xlane.f32.xlu0 %v1472
        %v1474 = vpop.xlane.xlu0 %1473
        %v1475 = vsel %vm723, %v1467, 0.0
        %1476 = vadd.xlane.f32.xlu0 %v1475
        %v1477 = vpop.xlane.xlu0 %1476
        %v1478 = vsel %vm723, %v1468, 0.0
        %1479 = vadd.xlane.f32.xlu0 %v1478
        %v1480 = vpop.xlane.xlu0 %1479
        %v1481 = vmul.f32 %v1471, %v736
        %v1482 = vmul.f32 %v1474, %v736
        %v1483 = vmul.f32 %v1477, %v736
        %v1484 = vmul.f32 %v1480, %v736
        %v1485 = vadd.f32 %v1481, 1e-05
        %v1486 = vadd.f32 %v1482, 1e-05
        %v1487 = vadd.f32 %v1483, 1e-05
        %v1488 = vadd.f32 %v1484, 1e-05
        %v1489 = vrsqrt.pop %v1485
        %v1490 = vrsqrt.pop %v1486
        %v1491 = vrsqrt.pop %v1487
        %v1492 = vrsqrt.pop %v1488
        %v1493 = vmul.f32 %v1461, %v1489
        %v1494 = vmul.f32 %v1462, %v1490
        %v1495 = vmul.f32 %v1463, %v1491
        %v1496 = vmul.f32 %v1464, %v1492
        %v1498 = vlaneseq
        %v1499 = vshrl.u32 %v1498, 7
        %v1500 = vsub.s32 0, %v1499
        %v1501 = vrot.slane %v1443, %v1500
        %v1503 = vmul.f32 %v1493, %v1501
        %v1504 = vmul.f32 %v1494, %v1501
        %v1505 = vmul.f32 %v1495, %v1501
        %v1506 = vmul.f32 %v1496, %v1501
        %v1508 = vlaneseq
        %v1509 = vshrl.u32 %v1508, 7
        %v1510 = vsub.s32 0, %v1509
        %v1511 = vrot.slane %v1444, %v1510
        %v1513 = vadd.f32 %v1503, %v1511
        %v1514 = vadd.f32 %v1504, %v1511
        %v1515 = vadd.f32 %v1505, %v1511
        %v1516 = vadd.f32 %v1506, %v1511
        %v1517 = vmul.f32 %v1513, %v647
        %v1518 = vmul.f32 %v1514, %v652
        %v1519 = vmul.f32 %v1515, %v657
        %v1520 = vmul.f32 %v1516, %v662
        %v1521 = vld [vmem:[%s12] sm:$0xff]
        %v1522 = vld [vmem:[%s12 + $0x8] sm:$0xff]
        %v1523 = vld [vmem:[%s12 + $0x10] sm:$0xff]
        %v1524 = vld [vmem:[%s12 + $0x18] sm:$0xff]
        %v1526 = vsel %vm723, %v1517, 0
        %v1529 = vsel %vm723, %v1518, 0
        %v1532 = vsel %vm723, %v1519, 0
        %v1535 = vsel %vm723, %v1520, 0
        %1537 = vmatprep.subr.mxu0 0.0
        %1538 = vmatpush1.msra.mxu0 0.0
        %1539 = vmatprep.subr.mxu0 0.0
        %1540 = vmatpush1.msra.mxu0 0.0
        %1541 = vmatprep.subr.mxu0 0.0
        %1542 = vmatpush1.msra.mxu0 0.0
        %1543 = vmatprep.subr.mxu0 0.0
        %1544 = vmatpush1.msra.mxu0 0.0
        %1545 = vmatprep.subr.mxu0 0.0
        %1546 = vmatpush1.msra.mxu0 0.0
        %1547 = vmatprep.subr.mxu0 0.0
        %1548 = vmatpush1.msra.mxu0 0.0
        %1549 = vmatprep.subr.mxu0 0.0
        %1550 = vmatpush1.msra.mxu0 0.0
        %1551 = vmatprep.subr.mxu0 0.0
        %1552 = vmatpush1.msra.mxu0 0.0
        %1553 = vmatprep.subr.mxu0 0.0
        %1554 = vmatpush1.msra.mxu0 0.0
        %1555 = vmatprep.subr.mxu0 0.0
        %1556 = vmatpush1.msra.mxu0 0.0
        %1557 = vmatprep.subr.mxu0 0.0
        %1558 = vmatpush1.msra.mxu0 0.0
        %1559 = vmatprep.subr.mxu0 0.0
        %1560 = vmatpush1.msra.mxu0 0.0
        %1561 = vmatprep.subr.mxu0 0.0
        %1562 = vmatpush1.msra.mxu0 %v1524
        %1563 = vmatprep.subr.mxu0 0.0
        %1564 = vmatpush1.msra.mxu0 %v1523
        %1565 = vmatprep.subr.mxu0 0.0
        %1566 = vmatpush1.msra.mxu0 %v1522
        %1567 = vmatprep.subr.mxu0 0.0
        %1568 = vmatpush1.msra.mxu0 %v1521
        %1569 = vmatprep.subr.mxu0 0.0
        %1570 = vmatpush2.msra.mxu0 0.0
        %1571 = vmatprep.subr.mxu0 0.0
        %1572 = vmatpush2.msra.mxu0 0.0
        %1573 = vmatprep.subr.mxu0 0.0
        %1574 = vmatpush2.msra.mxu0 0.0
        %1575 = vmatprep.subr.mxu0 0.0
        %1576 = vmatpush2.msra.mxu0 0.0
        %1577 = vmatprep.subr.mxu0 0.0
        %1578 = vmatpush2.msra.mxu0 0.0
        %1579 = vmatprep.subr.mxu0 0.0
        %1580 = vmatpush2.msra.mxu0 0.0
        %1581 = vmatprep.subr.mxu0 0.0
        %1582 = vmatpush2.msra.mxu0 0.0
        %1583 = vmatprep.subr.mxu0 0.0
        %1584 = vmatpush2.msra.mxu0 0.0
        %1585 = vmatprep.subr.mxu0 0.0
        %1586 = vmatpush2.msra.mxu0 0.0
        %1587 = vmatprep.subr.mxu0 0.0
        %1588 = vmatpush2.msra.mxu0 0.0
        %1589 = vmatprep.subr.mxu0 0.0
        %1590 = vmatpush2.msra.mxu0 0.0
        %1591 = vmatprep.subr.mxu0 0.0
        %1592 = vmatpush2.msra.mxu0 0.0
        %1593 = vmatprep.subr.mxu0 0.0
        %1594 = vmatpush2.msra.mxu0 0.0
        %1595 = vmatprep.subr.mxu0 0.0
        %1596 = vmatpush2.msra.mxu0 0.0
        %1597 = vmatprep.subr.mxu0 0.0
        %1598 = vmatpush2.msra.mxu0 0.0
        %1599 = vmatprep.subr.mxu0 0.0
        %1600 = vmatpush2.msra.mxu0 0.0
        %1601 = vmatprep.mubr.f32.mxu0 0.0
        %1602 = vmatmul.mubr.f32.gmra.mxu0 %v1526
        %v1603 = vpop.f32.mrf.mxu0
        %v1604 = vadd.f32 0.0, %v1603
        %v1605 = vpop.f32.mrf.mxu0
        %1606 = vmatprep.mubr.f32.mxu0 0.0
        %1607 = vmatmul.mubr.f32.gmra.mxu0 %v1529
        %v1608 = vpop.f32.mrf.mxu0
        %v1609 = vadd.f32 0.0, %v1608
        %v1610 = vpop.f32.mrf.mxu0
        %1611 = vmatprep.mubr.f32.mxu0 0.0
        %1612 = vmatmul.mubr.f32.gmra.mxu0 %v1532
        %v1613 = vpop.f32.mrf.mxu0
        %v1614 = vadd.f32 0.0, %v1613
        %v1615 = vpop.f32.mrf.mxu0
        %1616 = vmatprep.mubr.f32.mxu0 0.0
        %1617 = vmatmul.mubr.f32.gmra.mxu0 %v1535
        %v1618 = vpop.f32.mrf.mxu0
        %v1619 = vadd.f32 0.0, %v1618
        %v1620 = vpop.f32.mrf.mxu0
        %1621 = vdwg.mxu0
        %v1622 = vld [vmem:[%s544] sm:$0x1]
        %v1623 = vld [vmem:[%s544 + $0x1] sm:$0x1]
        %1626 = vrot.lane.b32.xlu0 %v1604, 96
        %v1627 = vpop.permute.xlu0 %1626
        %1628 = vrot.lane.b32.xlu0 %v1609, 96
        %v1629 = vpop.permute.xlu0 %1628
        %vm1630 = vcmask 64512
        %v1631 = vsel %vm1630, %v1604, 0
        %v1633 = vsel %vm1630, %v1609, 0
        %v1635 = vsel %vm1630, %v1627, 0
        %v1637 = vsel %vm1630, %v1629, 0
        %1639 = vmatprep.subr.mxu0 0.0
        %1640 = vmatpush1.xpose.msra.mxu0 0.0
        %1641 = vmatprep.subr.mxu0 0.0
        %1642 = vmatpush1.xpose.msra.mxu0 0.0
        %1643 = vmatprep.subr.mxu0 0.0
        %1644 = vmatpush1.xpose.msra.mxu0 0.0
        %1645 = vmatprep.subr.mxu0 0.0
        %1646 = vmatpush1.xpose.msra.mxu0 0.0
        %1647 = vmatprep.subr.mxu0 0.0
        %1648 = vmatpush1.xpose.msra.mxu0 0.0
        %1649 = vmatprep.subr.mxu0 0.0
        %1650 = vmatpush1.xpose.msra.mxu0 0.0
        %1651 = vmatprep.subr.mxu0 0.0
        %1652 = vmatpush1.xpose.msra.mxu0 0.0
        %1653 = vmatprep.subr.mxu0 0.0
        %1654 = vmatpush1.xpose.msra.mxu0 0.0
        %1655 = vmatprep.subr.mxu0 0.0
        %1656 = vmatpush1.xpose.msra.mxu0 0.0
        %1657 = vmatprep.subr.mxu0 0.0
        %1658 = vmatpush1.xpose.msra.mxu0 0.0
        %1659 = vmatprep.subr.mxu0 0.0
        %1660 = vmatpush1.xpose.msra.mxu0 0.0
        %1661 = vmatprep.subr.mxu0 0.0
        %1662 = vmatpush1.xpose.msra.mxu0 0.0
        %1663 = vmatprep.subr.mxu0 0.0
        %1664 = vmatpush1.xpose.msra.mxu0 0.0
        %1665 = vmatprep.subr.mxu0 0.0
        %1666 = vmatpush1.xpose.msra.mxu0 0.0
        %1667 = vmatprep.subr.mxu0 0.0
        %1668 = vmatpush1.xpose.msra.mxu0 %v1637
        %1669 = vmatprep.subr.mxu0 0.0
        %1670 = vmatpush1.xpose.msra.mxu0 %v1635
        %1671 = vmatprep.subr.mxu0 0.0
        %1672 = vmatpush2.xpose.msra.mxu0 0.0
        %1673 = vmatprep.subr.mxu0 0.0
        %1674 = vmatpush2.xpose.msra.mxu0 0.0
        %1675 = vmatprep.subr.mxu0 0.0
        %1676 = vmatpush2.xpose.msra.mxu0 0.0
        %1677 = vmatprep.subr.mxu0 0.0
        %1678 = vmatpush2.xpose.msra.mxu0 0.0
        %1679 = vmatprep.subr.mxu0 0.0
        %1680 = vmatpush2.xpose.msra.mxu0 0.0
        %1681 = vmatprep.subr.mxu0 0.0
        %1682 = vmatpush2.xpose.msra.mxu0 0.0
        %1683 = vmatprep.subr.mxu0 0.0
        %1684 = vmatpush2.xpose.msra.mxu0 0.0
        %1685 = vmatprep.subr.mxu0 0.0
        %1686 = vmatpush2.xpose.msra.mxu0 0.0
        %1687 = vmatprep.subr.mxu0 0.0
        %1688 = vmatpush2.xpose.msra.mxu0 0.0
        %1689 = vmatprep.subr.mxu0 0.0
        %1690 = vmatpush2.xpose.msra.mxu0 0.0
        %1691 = vmatprep.subr.mxu0 0.0
        %1692 = vmatpush2.xpose.msra.mxu0 0.0
        %1693 = vmatprep.subr.mxu0 0.0
        %1694 = vmatpush2.xpose.msra.mxu0 0.0
        %1695 = vmatprep.subr.mxu0 0.0
        %1696 = vmatpush2.xpose.msra.mxu0 0.0
        %1697 = vmatprep.subr.mxu0 0.0
        %1698 = vmatpush2.xpose.msra.mxu0 0.0
        %1699 = vmatprep.subr.mxu0 0.0
        %1700 = vmatpush2.xpose.msra.mxu0 0.0
        %1701 = vmatprep.subr.mxu0 0.0
        %1702 = vmatpush2.xpose.msra.mxu0 0.0
        %1703 = vmatprep.mubr.f32.mxu0 0.0
        %1704 = vmatmul.mubr.f32.gmra.mxu0 %v1631
        %v1705 = vpop.f32.mrf.mxu0
        %v1706 = vadd.f32 0.0, %v1705
        %v1707 = vpop.f32.mrf.mxu0
        %1708 = vmatprep.mubr.f32.mxu0 0.0
        %1709 = vmatmul.mubr.f32.gmra.mxu0 %v1633
        %v1710 = vpop.f32.mrf.mxu0
        %v1711 = vadd.f32 0.0, %v1710
        %v1712 = vpop.f32.mrf.mxu0
        %1713 = vdwg.mxu0
        %v1714 = vmul.f32 %v1706, 0.35355338
        %v1715 = vmul.f32 %v1711, 0.35355338
        %v1717 = vlaneseq
        %v1718 = vshrl.u32 %v1717, 7
        %v1719 = vsub.s32 0, %v1718
        %v1720 = vrot.slane %v1622, %v1719
        %v1722 = vadd.f32 %v1714, %v1720
        %v1723 = vadd.f32 %v1715, %v1720
        %vm1724 = vcmask 130048
        %v1725 = vsel %vm1724, %v1722, -inf
        %1726 = vmax.xlane.f32.xlu0 %v1725
        %v1727 = vpop.xlane.xlu0 %1726
        %v1728 = vsel %vm1724, %v1723, -inf
        %1729 = vmax.xlane.f32.xlu0 %v1728
        %v1730 = vpop.xlane.xlu0 %1729
        %v1731 = vsub.f32 %v1722, %v1727
        %v1732 = vsub.f32 %v1723, %v1730
        %v1733 = vmul.f32 %v1731, 1.442695
        %v1734 = vpow.pop %v1733
        %v1735 = vmul.f32 %v1732, 1.442695
        %v1736 = vpow.pop %v1735
        %v1737 = vsel %vm1724, %v1734, 0.0
        %1738 = vadd.xlane.f32.xlu0 %v1737
        %v1739 = vpop.xlane.xlu0 %1738
        %v1740 = vsel %vm1724, %v1736, 0.0
        %1741 = vadd.xlane.f32.xlu0 %v1740
        %v1742 = vpop.xlane.xlu0 %1741
        %v1743 = vrcp.pop %v1739
        %v1744 = vrcp.pop %v1742
        %v1745 = vmul.f32 %v1734, %v1743
        %v1746 = vmul.f32 %v1736, %v1744
        %1747 = vrot.lane.b32.xlu0 %v1604, 64
        %v1748 = vpop.permute.xlu0 %1747
        %1749 = vrot.lane.b32.xlu0 %v1609, 64
        %v1750 = vpop.permute.xlu0 %1749
        %v1754 = vsel %vm1724, %v1745, 0
        %v1757 = vsel %vm1724, %v1746, 0
        %1759 = vmatprep.subr.mxu0 0.0
        %1760 = vmatpush1.msra.mxu0 0.0
        %1761 = vmatprep.subr.mxu0 0.0
        %1762 = vmatpush1.msra.mxu0 0.0
        %1763 = vmatprep.subr.mxu0 0.0
        %1764 = vmatpush1.msra.mxu0 0.0
        %1765 = vmatprep.subr.mxu0 0.0
        %1766 = vmatpush1.msra.mxu0 0.0
        %1767 = vmatprep.subr.mxu0 0.0
        %1768 = vmatpush1.msra.mxu0 0.0
        %1769 = vmatprep.subr.mxu0 0.0
        %1770 = vmatpush1.msra.mxu0 0.0
        %1771 = vmatprep.subr.mxu0 0.0
        %1772 = vmatpush1.msra.mxu0 0.0
        %1773 = vmatprep.subr.mxu0 0.0
        %1774 = vmatpush1.msra.mxu0 0.0
        %1775 = vmatprep.subr.mxu0 0.0
        %1776 = vmatpush1.msra.mxu0 0.0
        %1777 = vmatprep.subr.mxu0 0.0
        %1778 = vmatpush1.msra.mxu0 0.0
        %1779 = vmatprep.subr.mxu0 0.0
        %1780 = vmatpush1.msra.mxu0 0.0
        %1781 = vmatprep.subr.mxu0 0.0
        %1782 = vmatpush1.msra.mxu0 0.0
        %1783 = vmatprep.subr.mxu0 0.0
        %1784 = vmatpush1.msra.mxu0 0.0
        %1785 = vmatprep.subr.mxu0 0.0
        %1786 = vmatpush1.msra.mxu0 0.0
        %1787 = vmatprep.subr.mxu0 0.0
        %1788 = vmatpush1.msra.mxu0 %v1750
        %1789 = vmatprep.subr.mxu0 0.0
        %1790 = vmatpush1.msra.mxu0 %v1748
        %1791 = vmatprep.subr.mxu0 0.0
        %1792 = vmatpush2.msra.mxu0 0.0
        %1793 = vmatprep.subr.mxu0 0.0
        %1794 = vmatpush2.msra.mxu0 0.0
        %1795 = vmatprep.subr.mxu0 0.0
        %1796 = vmatpush2.msra.mxu0 0.0
        %1797 = vmatprep.subr.mxu0 0.0
        %1798 = vmatpush2.msra.mxu0 0.0
        %1799 = vmatprep.subr.mxu0 0.0
        %1800 = vmatpush2.msra.mxu0 0.0
        %1801 = vmatprep.subr.mxu0 0.0
        %1802 = vmatpush2.msra.mxu0 0.0
        %1803 = vmatprep.subr.mxu0 0.0
        %1804 = vmatpush2.msra.mxu0 0.0
        %1805 = vmatprep.subr.mxu0 0.0
        %1806 = vmatpush2.msra.mxu0 0.0
        %1807 = vmatprep.subr.mxu0 0.0
        %1808 = vmatpush2.msra.mxu0 0.0
        %1809 = vmatprep.subr.mxu0 0.0
        %1810 = vmatpush2.msra.mxu0 0.0
        %1811 = vmatprep.subr.mxu0 0.0
        %1812 = vmatpush2.msra.mxu0 0.0
        %1813 = vmatprep.subr.mxu0 0.0
        %1814 = vmatpush2.msra.mxu0 0.0
        %1815 = vmatprep.subr.mxu0 0.0
        %1816 = vmatpush2.msra.mxu0 0.0
        %1817 = vmatprep.subr.mxu0 0.0
        %1818 = vmatpush2.msra.mxu0 0.0
        %1819 = vmatprep.subr.mxu0 0.0
        %1820 = vmatpush2.msra.mxu0 0.0
        %1821 = vmatprep.subr.mxu0 0.0
        %1822 = vmatpush2.msra.mxu0 0.0
        %1823 = vmatprep.mubr.f32.mxu0 0.0
        %1824 = vmatmul.mubr.f32.gmra.mxu0 %v1754
        %v1825 = vpop.f32.mrf.mxu0
        %v1826 = vadd.f32 0.0, %v1825
        %v1827 = vpop.f32.mrf.mxu0
        %1828 = vmatprep.mubr.f32.mxu0 0.0
        %1829 = vmatmul.mubr.f32.gmra.mxu0 %v1757
        %v1830 = vpop.f32.mrf.mxu0
        %v1831 = vadd.f32 0.0, %v1830
        %v1832 = vpop.f32.mrf.mxu0
        %1833 = vdwg.mxu0
        %1834 = vst.msk [vmem:[#allocation2] sm:$0xff] %vm1630, %v1826
        %1835 = vst.msk [vmem:[#allocation2 + $0x8] sm:$0xff] %vm1630, %v1831
        %1836 = vrot.lane.b32.xlu0 %v1604, 120
        %v1837 = vpop.permute.xlu0 %1836
        %1838 = vrot.lane.b32.xlu0 %v1609, 120
        %v1839 = vpop.permute.xlu0 %1838
        %1840 = vrot.lane.b32.xlu0 %v1604, 88
        %v1841 = vpop.permute.xlu0 %1840
        %1842 = vrot.lane.b32.xlu0 %v1609, 88
        %v1843 = vpop.permute.xlu0 %1842
        %v1844 = vsel %vm1630, %v1837, 0
        %v1846 = vsel %vm1630, %v1839, 0
        %v1848 = vsel %vm1630, %v1841, 0
        %v1850 = vsel %vm1630, %v1843, 0
        %1852 = vmatprep.subr.mxu0 0.0
        %1853 = vmatpush1.xpose.msra.mxu0 0.0
        %1854 = vmatprep.subr.mxu0 0.0
        %1855 = vmatpush1.xpose.msra.mxu0 0.0
        %1856 = vmatprep.subr.mxu0 0.0
        %1857 = vmatpush1.xpose.msra.mxu0 0.0
        %1858 = vmatprep.subr.mxu0 0.0
        %1859 = vmatpush1.xpose.msra.mxu0 0.0
        %1860 = vmatprep.subr.mxu0 0.0
        %1861 = vmatpush1.xpose.msra.mxu0 0.0
        %1862 = vmatprep.subr.mxu0 0.0
        %1863 = vmatpush1.xpose.msra.mxu0 0.0
        %1864 = vmatprep.subr.mxu0 0.0
        %1865 = vmatpush1.xpose.msra.mxu0 0.0
        %1866 = vmatprep.subr.mxu0 0.0
        %1867 = vmatpush1.xpose.msra.mxu0 0.0
        %1868 = vmatprep.subr.mxu0 0.0
        %1869 = vmatpush1.xpose.msra.mxu0 0.0
        %1870 = vmatprep.subr.mxu0 0.0
        %1871 = vmatpush1.xpose.msra.mxu0 0.0
        %1872 = vmatprep.subr.mxu0 0.0
        %1873 = vmatpush1.xpose.msra.mxu0 0.0
        %1874 = vmatprep.subr.mxu0 0.0
        %1875 = vmatpush1.xpose.msra.mxu0 0.0
        %1876 = vmatprep.subr.mxu0 0.0
        %1877 = vmatpush1.xpose.msra.mxu0 0.0
        %1878 = vmatprep.subr.mxu0 0.0
        %1879 = vmatpush1.xpose.msra.mxu0 0.0
        %1880 = vmatprep.subr.mxu0 0.0
        %1881 = vmatpush1.xpose.msra.mxu0 %v1850
        %1882 = vmatprep.subr.mxu0 0.0
        %1883 = vmatpush1.xpose.msra.mxu0 %v1848
        %1884 = vmatprep.subr.mxu0 0.0
        %1885 = vmatpush2.xpose.msra.mxu0 0.0
        %1886 = vmatprep.subr.mxu0 0.0
        %1887 = vmatpush2.xpose.msra.mxu0 0.0
        %1888 = vmatprep.subr.mxu0 0.0
        %1889 = vmatpush2.xpose.msra.mxu0 0.0
        %1890 = vmatprep.subr.mxu0 0.0
        %1891 = vmatpush2.xpose.msra.mxu0 0.0
        %1892 = vmatprep.subr.mxu0 0.0
        %1893 = vmatpush2.xpose.msra.mxu0 0.0
        %1894 = vmatprep.subr.mxu0 0.0
        %1895 = vmatpush2.xpose.msra.mxu0 0.0
        %1896 = vmatprep.subr.mxu0 0.0
        %1897 = vmatpush2.xpose.msra.mxu0 0.0
        %1898 = vmatprep.subr.mxu0 0.0
        %1899 = vmatpush2.xpose.msra.mxu0 0.0
        %1900 = vmatprep.subr.mxu0 0.0
        %1901 = vmatpush2.xpose.msra.mxu0 0.0
        %1902 = vmatprep.subr.mxu0 0.0
        %1903 = vmatpush2.xpose.msra.mxu0 0.0
        %1904 = vmatprep.subr.mxu0 0.0
        %1905 = vmatpush2.xpose.msra.mxu0 0.0
        %1906 = vmatprep.subr.mxu0 0.0
        %1907 = vmatpush2.xpose.msra.mxu0 0.0
        %1908 = vmatprep.subr.mxu0 0.0
        %1909 = vmatpush2.xpose.msra.mxu0 0.0
        %1910 = vmatprep.subr.mxu0 0.0
        %1911 = vmatpush2.xpose.msra.mxu0 0.0
        %1912 = vmatprep.subr.mxu0 0.0
        %1913 = vmatpush2.xpose.msra.mxu0 0.0
        %1914 = vmatprep.subr.mxu0 0.0
        %1915 = vmatpush2.xpose.msra.mxu0 0.0
        %1916 = vmatprep.mubr.f32.mxu0 0.0
        %1917 = vmatmul.mubr.f32.gmra.mxu0 %v1844
        %v1918 = vpop.f32.mrf.mxu0
        %v1919 = vadd.f32 0.0, %v1918
        %v1920 = vpop.f32.mrf.mxu0
        %1921 = vmatprep.mubr.f32.mxu0 0.0
        %1922 = vmatmul.mubr.f32.gmra.mxu0 %v1846
        %v1923 = vpop.f32.mrf.mxu0
        %v1924 = vadd.f32 0.0, %v1923
        %v1925 = vpop.f32.mrf.mxu0
        %1926 = vdwg.mxu0
        %v1927 = vmul.f32 %v1919, 0.35355338
        %v1928 = vmul.f32 %v1924, 0.35355338
        %v1929 = vadd.f32 %v1927, %v1720
        %v1930 = vadd.f32 %v1928, %v1720
        %v1931 = vsel %vm1724, %v1929, -inf
        %1932 = vmax.xlane.f32.xlu0 %v1931
        %v1933 = vpop.xlane.xlu0 %1932
        %v1934 = vsel %vm1724, %v1930, -inf
        %1935 = vmax.xlane.f32.xlu0 %v1934
        %v1936 = vpop.xlane.xlu0 %1935
        %v1937 = vsub.f32 %v1929, %v1933
        %v1938 = vsub.f32 %v1930, %v1936
        %v1939 = vmul.f32 %v1937, 1.442695
        %v1940 = vpow.pop %v1939
        %v1941 = vmul.f32 %v1938, 1.442695
        %v1942 = vpow.pop %v1941
        %v1943 = vsel %vm1724, %v1940, 0.0
        %1944 = vadd.xlane.f32.xlu0 %v1943
        %v1945 = vpop.xlane.xlu0 %1944
        %v1946 = vsel %vm1724, %v1942, 0.0
        %1947 = vadd.xlane.f32.xlu0 %v1946
        %v1948 = vpop.xlane.xlu0 %1947
        %v1949 = vrcp.pop %v1945
        %v1950 = vrcp.pop %v1948
        %v1951 = vmul.f32 %v1940, %v1949
        %v1952 = vmul.f32 %v1942, %v1950
        %1953 = vrot.lane.b32.xlu0 %v1604, 56
        %v1954 = vpop.permute.xlu0 %1953
        %1955 = vrot.lane.b32.xlu0 %v1609, 56
        %v1956 = vpop.permute.xlu0 %1955
        %v1960 = vsel %vm1724, %v1951, 0
        %v1963 = vsel %vm1724, %v1952, 0
        %1965 = vmatprep.subr.mxu0 0.0
        %1966 = vmatpush1.msra.mxu0 0.0
        %1967 = vmatprep.subr.mxu0 0.0
        %1968 = vmatpush1.msra.mxu0 0.0
        %1969 = vmatprep.subr.mxu0 0.0
        %1970 = vmatpush1.msra.mxu0 0.0
        %1971 = vmatprep.subr.mxu0 0.0
        %1972 = vmatpush1.msra.mxu0 0.0
        %1973 = vmatprep.subr.mxu0 0.0
        %1974 = vmatpush1.msra.mxu0 0.0
        %1975 = vmatprep.subr.mxu0 0.0
        %1976 = vmatpush1.msra.mxu0 0.0
        %1977 = vmatprep.subr.mxu0 0.0
        %1978 = vmatpush1.msra.mxu0 0.0
        %1979 = vmatprep.subr.mxu0 0.0
        %1980 = vmatpush1.msra.mxu0 0.0
        %1981 = vmatprep.subr.mxu0 0.0
        %1982 = vmatpush1.msra.mxu0 0.0
        %1983 = vmatprep.subr.mxu0 0.0
        %1984 = vmatpush1.msra.mxu0 0.0
        %1985 = vmatprep.subr.mxu0 0.0
        %1986 = vmatpush1.msra.mxu0 0.0
        %1987 = vmatprep.subr.mxu0 0.0
        %1988 = vmatpush1.msra.mxu0 0.0
        %1989 = vmatprep.subr.mxu0 0.0
        %1990 = vmatpush1.msra.mxu0 0.0
        %1991 = vmatprep.subr.mxu0 0.0
        %1992 = vmatpush1.msra.mxu0 0.0
        %1993 = vmatprep.subr.mxu0 0.0
        %1994 = vmatpush1.msra.mxu0 %v1956
        %1995 = vmatprep.subr.mxu0 0.0
        %1996 = vmatpush1.msra.mxu0 %v1954
        %1997 = vmatprep.subr.mxu0 0.0
        %1998 = vmatpush2.msra.mxu0 0.0
        %1999 = vmatprep.subr.mxu0 0.0
        %2000 = vmatpush2.msra.mxu0 0.0
        %2001 = vmatprep.subr.mxu0 0.0
        %2002 = vmatpush2.msra.mxu0 0.0
        %2003 = vmatprep.subr.mxu0 0.0
        %2004 = vmatpush2.msra.mxu0 0.0
        %2005 = vmatprep.subr.mxu0 0.0
        %2006 = vmatpush2.msra.mxu0 0.0
        %2007 = vmatprep.subr.mxu0 0.0
        %2008 = vmatpush2.msra.mxu0 0.0
        %2009 = vmatprep.subr.mxu0 0.0
        %2010 = vmatpush2.msra.mxu0 0.0
        %2011 = vmatprep.subr.mxu0 0.0
        %2012 = vmatpush2.msra.mxu0 0.0
        %2013 = vmatprep.subr.mxu0 0.0
        %2014 = vmatpush2.msra.mxu0 0.0
        %2015 = vmatprep.subr.mxu0 0.0
        %2016 = vmatpush2.msra.mxu0 0.0
        %2017 = vmatprep.subr.mxu0 0.0
        %2018 = vmatpush2.msra.mxu0 0.0
        %2019 = vmatprep.subr.mxu0 0.0
        %2020 = vmatpush2.msra.mxu0 0.0
        %2021 = vmatprep.subr.mxu0 0.0
        %2022 = vmatpush2.msra.mxu0 0.0
        %2023 = vmatprep.subr.mxu0 0.0
        %2024 = vmatpush2.msra.mxu0 0.0
        %2025 = vmatprep.subr.mxu0 0.0
        %2026 = vmatpush2.msra.mxu0 0.0
        %2027 = vmatprep.subr.mxu0 0.0
        %2028 = vmatpush2.msra.mxu0 0.0
        %2029 = vmatprep.mubr.f32.mxu0 0.0
        %2030 = vmatmul.mubr.f32.gmra.mxu0 %v1960
        %v2031 = vpop.f32.mrf.mxu0
        %v2032 = vadd.f32 0.0, %v2031
        %v2033 = vpop.f32.mrf.mxu0
        %2034 = vmatprep.mubr.f32.mxu0 0.0
        %2035 = vmatmul.mubr.f32.gmra.mxu0 %v1963
        %v2036 = vpop.f32.mrf.mxu0
        %v2037 = vadd.f32 0.0, %v2036
        %v2038 = vpop.f32.mrf.mxu0
        %2039 = vdwg.mxu0
        %2042 = vrot.lane.b32.xlu0 %v2032, 8
        %v2043 = vpop.permute.xlu0 %2042
        %2044 = vrot.lane.b32.xlu0 %v2037, 8
        %v2045 = vpop.permute.xlu0 %2044
        %vm2048 = vcmask 130112
        %2049 = vst.msk [vmem:[#allocation2] sm:$0xff] %vm2048, %v2043
        %2050 = vst.msk [vmem:[#allocation2 + $0x8] sm:$0xff] %vm2048, %v2045
        %2051 = vrot.lane.b32.xlu0 %v1604, 112
        %v2052 = vpop.permute.xlu0 %2051
        %2053 = vrot.lane.b32.xlu0 %v1609, 112
        %v2054 = vpop.permute.xlu0 %2053
        %2055 = vrot.lane.b32.xlu0 %v1604, 80
        %v2056 = vpop.permute.xlu0 %2055
        %2057 = vrot.lane.b32.xlu0 %v1609, 80
        %v2058 = vpop.permute.xlu0 %2057
        %v2059 = vsel %vm1630, %v2052, 0
        %v2061 = vsel %vm1630, %v2054, 0
        %v2063 = vsel %vm1630, %v2056, 0
        %v2065 = vsel %vm1630, %v2058, 0
        %2067 = vmatprep.subr.mxu0 0.0
        %2068 = vmatpush1.xpose.msra.mxu0 0.0
        %2069 = vmatprep.subr.mxu0 0.0
        %2070 = vmatpush1.xpose.msra.mxu0 0.0
        %2071 = vmatprep.subr.mxu0 0.0
        %2072 = vmatpush1.xpose.msra.mxu0 0.0
        %2073 = vmatprep.subr.mxu0 0.0
        %2074 = vmatpush1.xpose.msra.mxu0 0.0
        %2075 = vmatprep.subr.mxu0 0.0
        %2076 = vmatpush1.xpose.msra.mxu0 0.0
        %2077 = vmatprep.subr.mxu0 0.0
        %2078 = vmatpush1.xpose.msra.mxu0 0.0
        %2079 = vmatprep.subr.mxu0 0.0
        %2080 = vmatpush1.xpose.msra.mxu0 0.0
        %2081 = vmatprep.subr.mxu0 0.0
        %2082 = vmatpush1.xpose.msra.mxu0 0.0
        %2083 = vmatprep.subr.mxu0 0.0
        %2084 = vmatpush1.xpose.msra.mxu0 0.0
        %2085 = vmatprep.subr.mxu0 0.0
        %2086 = vmatpush1.xpose.msra.mxu0 0.0
        %2087 = vmatprep.subr.mxu0 0.0
        %2088 = vmatpush1.xpose.msra.mxu0 0.0
        %2089 = vmatprep.subr.mxu0 0.0
        %2090 = vmatpush1.xpose.msra.mxu0 0.0
        %2091 = vmatprep.subr.mxu0 0.0
        %2092 = vmatpush1.xpose.msra.mxu0 0.0
        %2093 = vmatprep.subr.mxu0 0.0
        %2094 = vmatpush1.xpose.msra.mxu0 0.0
        %2095 = vmatprep.subr.mxu0 0.0
        %2096 = vmatpush1.xpose.msra.mxu0 %v2065
        %2097 = vmatprep.subr.mxu0 0.0
        %2098 = vmatpush1.xpose.msra.mxu0 %v2063
        %2099 = vmatprep.subr.mxu0 0.0
        %2100 = vmatpush2.xpose.msra.mxu0 0.0
        %2101 = vmatprep.subr.mxu0 0.0
        %2102 = vmatpush2.xpose.msra.mxu0 0.0
        %2103 = vmatprep.subr.mxu0 0.0
        %2104 = vmatpush2.xpose.msra.mxu0 0.0
        %2105 = vmatprep.subr.mxu0 0.0
        %2106 = vmatpush2.xpose.msra.mxu0 0.0
        %2107 = vmatprep.subr.mxu0 0.0
        %2108 = vmatpush2.xpose.msra.mxu0 0.0
        %2109 = vmatprep.subr.mxu0 0.0
        %2110 = vmatpush2.xpose.msra.mxu0 0.0
        %2111 = vmatprep.subr.mxu0 0.0
        %2112 = vmatpush2.xpose.msra.mxu0 0.0
        %2113 = vmatprep.subr.mxu0 0.0
        %2114 = vmatpush2.xpose.msra.mxu0 0.0
        %2115 = vmatprep.subr.mxu0 0.0
        %2116 = vmatpush2.xpose.msra.mxu0 0.0
        %2117 = vmatprep.subr.mxu0 0.0
        %2118 = vmatpush2.xpose.msra.mxu0 0.0
        %2119 = vmatprep.subr.mxu0 0.0
        %2120 = vmatpush2.xpose.msra.mxu0 0.0
        %2121 = vmatprep.subr.mxu0 0.0
        %2122 = vmatpush2.xpose.msra.mxu0 0.0
        %2123 = vmatprep.subr.mxu0 0.0
        %2124 = vmatpush2.xpose.msra.mxu0 0.0
        %2125 = vmatprep.subr.mxu0 0.0
        %2126 = vmatpush2.xpose.msra.mxu0 0.0
        %2127 = vmatprep.subr.mxu0 0.0
        %2128 = vmatpush2.xpose.msra.mxu0 0.0
        %2129 = vmatprep.subr.mxu0 0.0
        %2130 = vmatpush2.xpose.msra.mxu0 0.0
        %2131 = vmatprep.mubr.f32.mxu0 0.0
        %2132 = vmatmul.mubr.f32.gmra.mxu0 %v2059
        %v2133 = vpop.f32.mrf.mxu0
        %v2134 = vadd.f32 0.0, %v2133
        %v2135 = vpop.f32.mrf.mxu0
        %2136 = vmatprep.mubr.f32.mxu0 0.0
        %2137 = vmatmul.mubr.f32.gmra.mxu0 %v2061
        %v2138 = vpop.f32.mrf.mxu0
        %v2139 = vadd.f32 0.0, %v2138
        %v2140 = vpop.f32.mrf.mxu0
        %2141 = vdwg.mxu0
        %v2142 = vmul.f32 %v2134, 0.35355338
        %v2143 = vmul.f32 %v2139, 0.35355338
        %v2144 = vadd.f32 %v2142, %v1720
        %v2145 = vadd.f32 %v2143, %v1720
        %v2146 = vsel %vm1724, %v2144, -inf
        %2147 = vmax.xlane.f32.xlu0 %v2146
        %v2148 = vpop.xlane.xlu0 %2147
        %v2149 = vsel %vm1724, %v2145, -inf
        %2150 = vmax.xlane.f32.xlu0 %v2149
        %v2151 = vpop.xlane.xlu0 %2150
        %v2152 = vsub.f32 %v2144, %v2148
        %v2153 = vsub.f32 %v2145, %v2151
        %v2154 = vmul.f32 %v2152, 1.442695
        %v2155 = vpow.pop %v2154
        %v2156 = vmul.f32 %v2153, 1.442695
        %v2157 = vpow.pop %v2156
        %v2158 = vsel %vm1724, %v2155, 0.0
        %2159 = vadd.xlane.f32.xlu0 %v2158
        %v2160 = vpop.xlane.xlu0 %2159
        %v2161 = vsel %vm1724, %v2157, 0.0
        %2162 = vadd.xlane.f32.xlu0 %v2161
        %v2163 = vpop.xlane.xlu0 %2162
        %v2164 = vrcp.pop %v2160
        %v2165 = vrcp.pop %v2163
        %v2166 = vmul.f32 %v2155, %v2164
        %v2167 = vmul.f32 %v2157, %v2165
        %2168 = vrot.lane.b32.xlu0 %v1604, 48
        %v2169 = vpop.permute.xlu0 %2168
        %2170 = vrot.lane.b32.xlu0 %v1609, 48
        %v2171 = vpop.permute.xlu0 %2170
        %v2175 = vsel %vm1724, %v2166, 0
        %v2178 = vsel %vm1724, %v2167, 0
        %2180 = vmatprep.subr.mxu0 0.0
        %2181 = vmatpush1.msra.mxu0 0.0
        %2182 = vmatprep.subr.mxu0 0.0
        %2183 = vmatpush1.msra.mxu0 0.0
        %2184 = vmatprep.subr.mxu0 0.0
        %2185 = vmatpush1.msra.mxu0 0.0
        %2186 = vmatprep.subr.mxu0 0.0
        %2187 = vmatpush1.msra.mxu0 0.0
        %2188 = vmatprep.subr.mxu0 0.0
        %2189 = vmatpush1.msra.mxu0 0.0
        %2190 = vmatprep.subr.mxu0 0.0
        %2191 = vmatpush1.msra.mxu0 0.0
        %2192 = vmatprep.subr.mxu0 0.0
        %2193 = vmatpush1.msra.mxu0 0.0
        %2194 = vmatprep.subr.mxu0 0.0
        %2195 = vmatpush1.msra.mxu0 0.0
        %2196 = vmatprep.subr.mxu0 0.0
        %2197 = vmatpush1.msra.mxu0 0.0
        %2198 = vmatprep.subr.mxu0 0.0
        %2199 = vmatpush1.msra.mxu0 0.0
        %2200 = vmatprep.subr.mxu0 0.0
        %2201 = vmatpush1.msra.mxu0 0.0
        %2202 = vmatprep.subr.mxu0 0.0
        %2203 = vmatpush1.msra.mxu0 0.0
        %2204 = vmatprep.subr.mxu0 0.0
        %2205 = vmatpush1.msra.mxu0 0.0
        %2206 = vmatprep.subr.mxu0 0.0
        %2207 = vmatpush1.msra.mxu0 0.0
        %2208 = vmatprep.subr.mxu0 0.0
        %2209 = vmatpush1.msra.mxu0 %v2171
        %2210 = vmatprep.subr.mxu0 0.0
        %2211 = vmatpush1.msra.mxu0 %v2169
        %2212 = vmatprep.subr.mxu0 0.0
        %2213 = vmatpush2.msra.mxu0 0.0
        %2214 = vmatprep.subr.mxu0 0.0
        %2215 = vmatpush2.msra.mxu0 0.0
        %2216 = vmatprep.subr.mxu0 0.0
        %2217 = vmatpush2.msra.mxu0 0.0
        %2218 = vmatprep.subr.mxu0 0.0
        %2219 = vmatpush2.msra.mxu0 0.0
        %2220 = vmatprep.subr.mxu0 0.0
        %2221 = vmatpush2.msra.mxu0 0.0
        %2222 = vmatprep.subr.mxu0 0.0
        %2223 = vmatpush2.msra.mxu0 0.0
        %2224 = vmatprep.subr.mxu0 0.0
        %2225 = vmatpush2.msra.mxu0 0.0
        %2226 = vmatprep.subr.mxu0 0.0
        %2227 = vmatpush2.msra.mxu0 0.0
        %2228 = vmatprep.subr.mxu0 0.0
        %2229 = vmatpush2.msra.mxu0 0.0
        %2230 = vmatprep.subr.mxu0 0.0
        %2231 = vmatpush2.msra.mxu0 0.0
        %2232 = vmatprep.subr.mxu0 0.0
        %2233 = vmatpush2.msra.mxu0 0.0
        %2234 = vmatprep.subr.mxu0 0.0
        %2235 = vmatpush2.msra.mxu0 0.0
        %2236 = vmatprep.subr.mxu0 0.0
        %2237 = vmatpush2.msra.mxu0 0.0
        %2238 = vmatprep.subr.mxu0 0.0
        %2239 = vmatpush2.msra.mxu0 0.0
        %2240 = vmatprep.subr.mxu0 0.0
        %2241 = vmatpush2.msra.mxu0 0.0
        %2242 = vmatprep.subr.mxu0 0.0
        %2243 = vmatpush2.msra.mxu0 0.0
        %2244 = vmatprep.mubr.f32.mxu0 0.0
        %2245 = vmatmul.mubr.f32.gmra.mxu0 %v2175
        %v2246 = vpop.f32.mrf.mxu0
        %v2247 = vadd.f32 0.0, %v2246
        %v2248 = vpop.f32.mrf.mxu0
        %2249 = vmatprep.mubr.f32.mxu0 0.0
        %2250 = vmatmul.mubr.f32.gmra.mxu0 %v2178
        %v2251 = vpop.f32.mrf.mxu0
        %v2252 = vadd.f32 0.0, %v2251
        %v2253 = vpop.f32.mrf.mxu0
        %2254 = vdwg.mxu0
        %2257 = vrot.lane.b32.xlu0 %v2247, 16
        %v2258 = vpop.permute.xlu0 %2257
        %2259 = vrot.lane.b32.xlu0 %v2252, 16
        %v2260 = vpop.permute.xlu0 %2259
        %vm2263 = vcmask 195712
        %2264 = vst.msk [vmem:[#allocation2] sm:$0xff] %vm2263, %v2258
        %2265 = vst.msk [vmem:[#allocation2 + $0x8] sm:$0xff] %vm2263, %v2260
        %2266 = vrot.lane.b32.xlu0 %v1604, 104
        %v2267 = vpop.permute.xlu0 %2266
        %2268 = vrot.lane.b32.xlu0 %v1609, 104
        %v2269 = vpop.permute.xlu0 %2268
        %2270 = vrot.lane.b32.xlu0 %v1604, 72
        %v2271 = vpop.permute.xlu0 %2270
        %2272 = vrot.lane.b32.xlu0 %v1609, 72
        %v2273 = vpop.permute.xlu0 %2272
        %v2274 = vsel %vm1630, %v2267, 0
        %v2276 = vsel %vm1630, %v2269, 0
        %v2278 = vsel %vm1630, %v2271, 0
        %v2280 = vsel %vm1630, %v2273, 0
        %2282 = vmatprep.subr.mxu0 0.0
        %2283 = vmatpush1.xpose.msra.mxu0 0.0
        %2284 = vmatprep.subr.mxu0 0.0
        %2285 = vmatpush1.xpose.msra.mxu0 0.0
        %2286 = vmatprep.subr.mxu0 0.0
        %2287 = vmatpush1.xpose.msra.mxu0 0.0
        %2288 = vmatprep.subr.mxu0 0.0
        %2289 = vmatpush1.xpose.msra.mxu0 0.0
        %2290 = vmatprep.subr.mxu0 0.0
        %2291 = vmatpush1.xpose.msra.mxu0 0.0
        %2292 = vmatprep.subr.mxu0 0.0
        %2293 = vmatpush1.xpose.msra.mxu0 0.0
        %2294 = vmatprep.subr.mxu0 0.0
        %2295 = vmatpush1.xpose.msra.mxu0 0.0
        %2296 = vmatprep.subr.mxu0 0.0
        %2297 = vmatpush1.xpose.msra.mxu0 0.0
        %2298 = vmatprep.subr.mxu0 0.0
        %2299 = vmatpush1.xpose.msra.mxu0 0.0
        %2300 = vmatprep.subr.mxu0 0.0
        %2301 = vmatpush1.xpose.msra.mxu0 0.0
        %2302 = vmatprep.subr.mxu0 0.0
        %2303 = vmatpush1.xpose.msra.mxu0 0.0
        %2304 = vmatprep.subr.mxu0 0.0
        %2305 = vmatpush1.xpose.msra.mxu0 0.0
        %2306 = vmatprep.subr.mxu0 0.0
        %2307 = vmatpush1.xpose.msra.mxu0 0.0
        %2308 = vmatprep.subr.mxu0 0.0
        %2309 = vmatpush1.xpose.msra.mxu0 0.0
        %2310 = vmatprep.subr.mxu0 0.0
        %2311 = vmatpush1.xpose.msra.mxu0 %v2280
        %2312 = vmatprep.subr.mxu0 0.0
        %2313 = vmatpush1.xpose.msra.mxu0 %v2278
        %2314 = vmatprep.subr.mxu0 0.0
        %2315 = vmatpush2.xpose.msra.mxu0 0.0
        %2316 = vmatprep.subr.mxu0 0.0
        %2317 = vmatpush2.xpose.msra.mxu0 0.0
        %2318 = vmatprep.subr.mxu0 0.0
        %2319 = vmatpush2.xpose.msra.mxu0 0.0
        %2320 = vmatprep.subr.mxu0 0.0
        %2321 = vmatpush2.xpose.msra.mxu0 0.0
        %2322 = vmatprep.subr.mxu0 0.0
        %2323 = vmatpush2.xpose.msra.mxu0 0.0
        %2324 = vmatprep.subr.mxu0 0.0
        %2325 = vmatpush2.xpose.msra.mxu0 0.0
        %2326 = vmatprep.subr.mxu0 0.0
        %2327 = vmatpush2.xpose.msra.mxu0 0.0
        %2328 = vmatprep.subr.mxu0 0.0
        %2329 = vmatpush2.xpose.msra.mxu0 0.0
        %2330 = vmatprep.subr.mxu0 0.0
        %2331 = vmatpush2.xpose.msra.mxu0 0.0
        %2332 = vmatprep.subr.mxu0 0.0
        %2333 = vmatpush2.xpose.msra.mxu0 0.0
        %2334 = vmatprep.subr.mxu0 0.0
        %2335 = vmatpush2.xpose.msra.mxu0 0.0
        %2336 = vmatprep.subr.mxu0 0.0
        %2337 = vmatpush2.xpose.msra.mxu0 0.0
        %2338 = vmatprep.subr.mxu0 0.0
        %2339 = vmatpush2.xpose.msra.mxu0 0.0
        %2340 = vmatprep.subr.mxu0 0.0
        %2341 = vmatpush2.xpose.msra.mxu0 0.0
        %2342 = vmatprep.subr.mxu0 0.0
        %2343 = vmatpush2.xpose.msra.mxu0 0.0
        %2344 = vmatprep.subr.mxu0 0.0
        %2345 = vmatpush2.xpose.msra.mxu0 0.0
        %2346 = vmatprep.mubr.f32.mxu0 0.0
        %2347 = vmatmul.mubr.f32.gmra.mxu0 %v2274
        %v2348 = vpop.f32.mrf.mxu0
        %v2349 = vadd.f32 0.0, %v2348
        %v2350 = vpop.f32.mrf.mxu0
        %2351 = vmatprep.mubr.f32.mxu0 0.0
        %2352 = vmatmul.mubr.f32.gmra.mxu0 %v2276
        %v2353 = vpop.f32.mrf.mxu0
        %v2354 = vadd.f32 0.0, %v2353
        %v2355 = vpop.f32.mrf.mxu0
        %2356 = vdwg.mxu0
        %v2357 = vmul.f32 %v2349, 0.35355338
        %v2358 = vmul.f32 %v2354, 0.35355338
        %v2359 = vadd.f32 %v2357, %v1720
        %v2360 = vadd.f32 %v2358, %v1720
        %v2361 = vsel %vm1724, %v2359, -inf
        %2362 = vmax.xlane.f32.xlu0 %v2361
        %v2363 = vpop.xlane.xlu0 %2362
        %v2364 = vsel %vm1724, %v2360, -inf
        %2365 = vmax.xlane.f32.xlu0 %v2364
        %v2366 = vpop.xlane.xlu0 %2365
        %v2367 = vsub.f32 %v2359, %v2363
        %v2368 = vsub.f32 %v2360, %v2366
        %v2369 = vmul.f32 %v2367, 1.442695
        %v2370 = vpow.pop %v2369
        %v2371 = vmul.f32 %v2368, 1.442695
        %v2372 = vpow.pop %v2371
        %v2373 = vsel %vm1724, %v2370, 0.0
        %2374 = vadd.xlane.f32.xlu0 %v2373
        %v2375 = vpop.xlane.xlu0 %2374
        %v2376 = vsel %vm1724, %v2372, 0.0
        %2377 = vadd.xlane.f32.xlu0 %v2376
        %v2378 = vpop.xlane.xlu0 %2377
        %v2379 = vrcp.pop %v2375
        %v2380 = vrcp.pop %v2378
        %v2381 = vmul.f32 %v2370, %v2379
        %v2382 = vmul.f32 %v2372, %v2380
        %2383 = vrot.lane.b32.xlu0 %v1604, 40
        %v2384 = vpop.permute.xlu0 %2383
        %2385 = vrot.lane.b32.xlu0 %v1609, 40
        %v2386 = vpop.permute.xlu0 %2385
        %v2390 = vsel %vm1724, %v2381, 0
        %v2393 = vsel %vm1724, %v2382, 0
        %2395 = vmatprep.subr.mxu0 0.0
        %2396 = vmatpush1.msra.mxu0 0.0
        %2397 = vmatprep.subr.mxu0 0.0
        %2398 = vmatpush1.msra.mxu0 0.0
        %2399 = vmatprep.subr.mxu0 0.0
        %2400 = vmatpush1.msra.mxu0 0.0
        %2401 = vmatprep.subr.mxu0 0.0
        %2402 = vmatpush1.msra.mxu0 0.0
        %2403 = vmatprep.subr.mxu0 0.0
        %2404 = vmatpush1.msra.mxu0 0.0
        %2405 = vmatprep.subr.mxu0 0.0
        %2406 = vmatpush1.msra.mxu0 0.0
        %2407 = vmatprep.subr.mxu0 0.0
        %2408 = vmatpush1.msra.mxu0 0.0
        %2409 = vmatprep.subr.mxu0 0.0
        %2410 = vmatpush1.msra.mxu0 0.0
        %2411 = vmatprep.subr.mxu0 0.0
        %2412 = vmatpush1.msra.mxu0 0.0
        %2413 = vmatprep.subr.mxu0 0.0
        %2414 = vmatpush1.msra.mxu0 0.0
        %2415 = vmatprep.subr.mxu0 0.0
        %2416 = vmatpush1.msra.mxu0 0.0
        %2417 = vmatprep.subr.mxu0 0.0
        %2418 = vmatpush1.msra.mxu0 0.0
        %2419 = vmatprep.subr.mxu0 0.0
        %2420 = vmatpush1.msra.mxu0 0.0
        %2421 = vmatprep.subr.mxu0 0.0
        %2422 = vmatpush1.msra.mxu0 0.0
        %2423 = vmatprep.subr.mxu0 0.0
        %2424 = vmatpush1.msra.mxu0 %v2386
        %2425 = vmatprep.subr.mxu0 0.0
        %2426 = vmatpush1.msra.mxu0 %v2384
        %2427 = vmatprep.subr.mxu0 0.0
        %2428 = vmatpush2.msra.mxu0 0.0
        %2429 = vmatprep.subr.mxu0 0.0
        %2430 = vmatpush2.msra.mxu0 0.0
        %2431 = vmatprep.subr.mxu0 0.0
        %2432 = vmatpush2.msra.mxu0 0.0
        %2433 = vmatprep.subr.mxu0 0.0
        %2434 = vmatpush2.msra.mxu0 0.0
        %2435 = vmatprep.subr.mxu0 0.0
        %2436 = vmatpush2.msra.mxu0 0.0
        %2437 = vmatprep.subr.mxu0 0.0
        %2438 = vmatpush2.msra.mxu0 0.0
        %2439 = vmatprep.subr.mxu0 0.0
        %2440 = vmatpush2.msra.mxu0 0.0
        %2441 = vmatprep.subr.mxu0 0.0
        %2442 = vmatpush2.msra.mxu0 0.0
        %2443 = vmatprep.subr.mxu0 0.0
        %2444 = vmatpush2.msra.mxu0 0.0
        %2445 = vmatprep.subr.mxu0 0.0
        %2446 = vmatpush2.msra.mxu0 0.0
        %2447 = vmatprep.subr.mxu0 0.0
        %2448 = vmatpush2.msra.mxu0 0.0
        %2449 = vmatprep.subr.mxu0 0.0
        %2450 = vmatpush2.msra.mxu0 0.0
        %2451 = vmatprep.subr.mxu0 0.0
        %2452 = vmatpush2.msra.mxu0 0.0
        %2453 = vmatprep.subr.mxu0 0.0
        %2454 = vmatpush2.msra.mxu0 0.0
        %2455 = vmatprep.subr.mxu0 0.0
        %2456 = vmatpush2.msra.mxu0 0.0
        %2457 = vmatprep.subr.mxu0 0.0
        %2458 = vmatpush2.msra.mxu0 0.0
        %2459 = vmatprep.mubr.f32.mxu0 0.0
        %2460 = vmatmul.mubr.f32.gmra.mxu0 %v2390
        %v2461 = vpop.f32.mrf.mxu0
        %v2462 = vadd.f32 0.0, %v2461
        %v2463 = vpop.f32.mrf.mxu0
        %2464 = vmatprep.mubr.f32.mxu0 0.0
        %2465 = vmatmul.mubr.f32.gmra.mxu0 %v2393
        %v2466 = vpop.f32.mrf.mxu0
        %v2467 = vadd.f32 0.0, %v2466
        %v2468 = vpop.f32.mrf.mxu0
        %2469 = vdwg.mxu0
        %2472 = vrot.lane.b32.xlu0 %v2462, 24
        %v2473 = vpop.permute.xlu0 %2472
        %2474 = vrot.lane.b32.xlu0 %v2467, 24
        %v2475 = vpop.permute.xlu0 %2474
        %vm2478 = vcmask 261312
        %2479 = vst.msk [vmem:[#allocation2] sm:$0xff] %vm2478, %v2473
        %2480 = vst.msk [vmem:[#allocation2 + $0x8] sm:$0xff] %vm2478, %v2475
        %2483 = vrot.lane.b32.xlu0 %v1614, 96
        %v2484 = vpop.permute.xlu0 %2483
        %2485 = vrot.lane.b32.xlu0 %v1619, 96
        %v2486 = vpop.permute.xlu0 %2485
        %v2487 = vsel %vm1630, %v1614, 0
        %v2489 = vsel %vm1630, %v1619, 0
        %v2491 = vsel %vm1630, %v2484, 0
        %v2493 = vsel %vm1630, %v2486, 0
        %2495 = vmatprep.subr.mxu0 0.0
        %2496 = vmatpush1.xpose.msra.mxu0 0.0
        %2497 = vmatprep.subr.mxu0 0.0
        %2498 = vmatpush1.xpose.msra.mxu0 0.0
        %2499 = vmatprep.subr.mxu0 0.0
        %2500 = vmatpush1.xpose.msra.mxu0 0.0
        %2501 = vmatprep.subr.mxu0 0.0
        %2502 = vmatpush1.xpose.msra.mxu0 0.0
        %2503 = vmatprep.subr.mxu0 0.0
        %2504 = vmatpush1.xpose.msra.mxu0 0.0
        %2505 = vmatprep.subr.mxu0 0.0
        %2506 = vmatpush1.xpose.msra.mxu0 0.0
        %2507 = vmatprep.subr.mxu0 0.0
        %2508 = vmatpush1.xpose.msra.mxu0 0.0
        %2509 = vmatprep.subr.mxu0 0.0
        %2510 = vmatpush1.xpose.msra.mxu0 0.0
        %2511 = vmatprep.subr.mxu0 0.0
        %2512 = vmatpush1.xpose.msra.mxu0 0.0
        %2513 = vmatprep.subr.mxu0 0.0
        %2514 = vmatpush1.xpose.msra.mxu0 0.0
        %2515 = vmatprep.subr.mxu0 0.0
        %2516 = vmatpush1.xpose.msra.mxu0 0.0
        %2517 = vmatprep.subr.mxu0 0.0
        %2518 = vmatpush1.xpose.msra.mxu0 0.0
        %2519 = vmatprep.subr.mxu0 0.0
        %2520 = vmatpush1.xpose.msra.mxu0 0.0
        %2521 = vmatprep.subr.mxu0 0.0
        %2522 = vmatpush1.xpose.msra.mxu0 0.0
        %2523 = vmatprep.subr.mxu0 0.0
        %2524 = vmatpush1.xpose.msra.mxu0 %v2493
        %2525 = vmatprep.subr.mxu0 0.0
        %2526 = vmatpush1.xpose.msra.mxu0 %v2491
        %2527 = vmatprep.subr.mxu0 0.0
        %2528 = vmatpush2.xpose.msra.mxu0 0.0
        %2529 = vmatprep.subr.mxu0 0.0
        %2530 = vmatpush2.xpose.msra.mxu0 0.0
        %2531 = vmatprep.subr.mxu0 0.0
        %2532 = vmatpush2.xpose.msra.mxu0 0.0
        %2533 = vmatprep.subr.mxu0 0.0
        %2534 = vmatpush2.xpose.msra.mxu0 0.0
        %2535 = vmatprep.subr.mxu0 0.0
        %2536 = vmatpush2.xpose.msra.mxu0 0.0
        %2537 = vmatprep.subr.mxu0 0.0
        %2538 = vmatpush2.xpose.msra.mxu0 0.0
        %2539 = vmatprep.subr.mxu0 0.0
        %2540 = vmatpush2.xpose.msra.mxu0 0.0
        %2541 = vmatprep.subr.mxu0 0.0
        %2542 = vmatpush2.xpose.msra.mxu0 0.0
        %2543 = vmatprep.subr.mxu0 0.0
        %2544 = vmatpush2.xpose.msra.mxu0 0.0
        %2545 = vmatprep.subr.mxu0 0.0
        %2546 = vmatpush2.xpose.msra.mxu0 0.0
        %2547 = vmatprep.subr.mxu0 0.0
        %2548 = vmatpush2.xpose.msra.mxu0 0.0
        %2549 = vmatprep.subr.mxu0 0.0
        %2550 = vmatpush2.xpose.msra.mxu0 0.0
        %2551 = vmatprep.subr.mxu0 0.0
        %2552 = vmatpush2.xpose.msra.mxu0 0.0
        %2553 = vmatprep.subr.mxu0 0.0
        %2554 = vmatpush2.xpose.msra.mxu0 0.0
        %2555 = vmatprep.subr.mxu0 0.0
        %2556 = vmatpush2.xpose.msra.mxu0 0.0
        %2557 = vmatprep.subr.mxu0 0.0
        %2558 = vmatpush2.xpose.msra.mxu0 0.0
        %2559 = vmatprep.mubr.f32.mxu0 0.0
        %2560 = vmatmul.mubr.f32.gmra.mxu0 %v2487
        %v2561 = vpop.f32.mrf.mxu0
        %v2562 = vadd.f32 0.0, %v2561
        %v2563 = vpop.f32.mrf.mxu0
        %2564 = vmatprep.mubr.f32.mxu0 0.0
        %2565 = vmatmul.mubr.f32.gmra.mxu0 %v2489
        %v2566 = vpop.f32.mrf.mxu0
        %v2567 = vadd.f32 0.0, %v2566
        %v2568 = vpop.f32.mrf.mxu0
        %2569 = vdwg.mxu0
        %v2570 = vmul.f32 %v2562, 0.35355338
        %v2571 = vmul.f32 %v2567, 0.35355338
        %v2573 = vlaneseq
        %v2574 = vshrl.u32 %v2573, 7
        %v2575 = vsub.s32 0, %v2574
        %v2576 = vrot.slane %v1623, %v2575
        %v2578 = vadd.f32 %v2570, %v2576
        %v2579 = vadd.f32 %v2571, %v2576
        %v2580 = vsel %vm1724, %v2578, -inf
        %2581 = vmax.xlane.f32.xlu0 %v2580
        %v2582 = vpop.xlane.xlu0 %2581
        %v2583 = vsel %vm1724, %v2579, -inf
        %2584 = vmax.xlane.f32.xlu0 %v2583
        %v2585 = vpop.xlane.xlu0 %2584
        %v2586 = vsub.f32 %v2578, %v2582
        %v2587 = vsub.f32 %v2579, %v2585
        %v2588 = vmul.f32 %v2586, 1.442695
        %v2589 = vpow.pop %v2588
        %v2590 = vmul.f32 %v2587, 1.442695
        %v2591 = vpow.pop %v2590
        %v2592 = vsel %vm1724, %v2589, 0.0
        %2593 = vadd.xlane.f32.xlu0 %v2592
        %v2594 = vpop.xlane.xlu0 %2593
        %v2595 = vsel %vm1724, %v2591, 0.0
        %2596 = vadd.xlane.f32.xlu0 %v2595
        %v2597 = vpop.xlane.xlu0 %2596
        %v2598 = vrcp.pop %v2594
        %v2599 = vrcp.pop %v2597
        %v2600 = vmul.f32 %v2589, %v2598
        %v2601 = vmul.f32 %v2591, %v2599
        %2602 = vrot.lane.b32.xlu0 %v1614, 64
        %v2603 = vpop.permute.xlu0 %2602
        %2604 = vrot.lane.b32.xlu0 %v1619, 64
        %v2605 = vpop.permute.xlu0 %2604
        %v2609 = vsel %vm1724, %v2600, 0
        %v2612 = vsel %vm1724, %v2601, 0
        %2614 = vmatprep.subr.mxu0 0.0
        %2615 = vmatpush1.msra.mxu0 0.0
        %2616 = vmatprep.subr.mxu0 0.0
        %2617 = vmatpush1.msra.mxu0 0.0
        %2618 = vmatprep.subr.mxu0 0.0
        %2619 = vmatpush1.msra.mxu0 0.0
        %2620 = vmatprep.subr.mxu0 0.0
        %2621 = vmatpush1.msra.mxu0 0.0
        %2622 = vmatprep.subr.mxu0 0.0
        %2623 = vmatpush1.msra.mxu0 0.0
        %2624 = vmatprep.subr.mxu0 0.0
        %2625 = vmatpush1.msra.mxu0 0.0
        %2626 = vmatprep.subr.mxu0 0.0
        %2627 = vmatpush1.msra.mxu0 0.0
        %2628 = vmatprep.subr.mxu0 0.0
        %2629 = vmatpush1.msra.mxu0 0.0
        %2630 = vmatprep.subr.mxu0 0.0
        %2631 = vmatpush1.msra.mxu0 0.0
        %2632 = vmatprep.subr.mxu0 0.0
        %2633 = vmatpush1.msra.mxu0 0.0
        %2634 = vmatprep.subr.mxu0 0.0
        %2635 = vmatpush1.msra.mxu0 0.0
        %2636 = vmatprep.subr.mxu0 0.0
        %2637 = vmatpush1.msra.mxu0 0.0
        %2638 = vmatprep.subr.mxu0 0.0
        %2639 = vmatpush1.msra.mxu0 0.0
        %2640 = vmatprep.subr.mxu0 0.0
        %2641 = vmatpush1.msra.mxu0 0.0
        %2642 = vmatprep.subr.mxu0 0.0
        %2643 = vmatpush1.msra.mxu0 %v2605
        %2644 = vmatprep.subr.mxu0 0.0
        %2645 = vmatpush1.msra.mxu0 %v2603
        %2646 = vmatprep.subr.mxu0 0.0
        %2647 = vmatpush2.msra.mxu0 0.0
        %2648 = vmatprep.subr.mxu0 0.0
        %2649 = vmatpush2.msra.mxu0 0.0
        %2650 = vmatprep.subr.mxu0 0.0
        %2651 = vmatpush2.msra.mxu0 0.0
        %2652 = vmatprep.subr.mxu0 0.0
        %2653 = vmatpush2.msra.mxu0 0.0
        %2654 = vmatprep.subr.mxu0 0.0
        %2655 = vmatpush2.msra.mxu0 0.0
        %2656 = vmatprep.subr.mxu0 0.0
        %2657 = vmatpush2.msra.mxu0 0.0
        %2658 = vmatprep.subr.mxu0 0.0
        %2659 = vmatpush2.msra.mxu0 0.0
        %2660 = vmatprep.subr.mxu0 0.0
        %2661 = vmatpush2.msra.mxu0 0.0
        %2662 = vmatprep.subr.mxu0 0.0
        %2663 = vmatpush2.msra.mxu0 0.0
        %2664 = vmatprep.subr.mxu0 0.0
        %2665 = vmatpush2.msra.mxu0 0.0
        %2666 = vmatprep.subr.mxu0 0.0
        %2667 = vmatpush2.msra.mxu0 0.0
        %2668 = vmatprep.subr.mxu0 0.0
        %2669 = vmatpush2.msra.mxu0 0.0
        %2670 = vmatprep.subr.mxu0 0.0
        %2671 = vmatpush2.msra.mxu0 0.0
        %2672 = vmatprep.subr.mxu0 0.0
        %2673 = vmatpush2.msra.mxu0 0.0
        %2674 = vmatprep.subr.mxu0 0.0
        %2675 = vmatpush2.msra.mxu0 0.0
        %2676 = vmatprep.subr.mxu0 0.0
        %2677 = vmatpush2.msra.mxu0 0.0
        %2678 = vmatprep.mubr.f32.mxu0 0.0
        %2679 = vmatmul.mubr.f32.gmra.mxu0 %v2609
        %v2680 = vpop.f32.mrf.mxu0
        %v2681 = vadd.f32 0.0, %v2680
        %v2682 = vpop.f32.mrf.mxu0
        %2683 = vmatprep.mubr.f32.mxu0 0.0
        %2684 = vmatmul.mubr.f32.gmra.mxu0 %v2612
        %v2685 = vpop.f32.mrf.mxu0
        %v2686 = vadd.f32 0.0, %v2685
        %v2687 = vpop.f32.mrf.mxu0
        %2688 = vdwg.mxu0
        %2689 = vst.msk [vmem:[#allocation2 + $0x10] sm:$0xff] %vm1630, %v2681
        %2690 = vst.msk [vmem:[#allocation2 + $0x18] sm:$0xff] %vm1630, %v2686
        %2691 = vrot.lane.b32.xlu0 %v1614, 120
        %v2692 = vpop.permute.xlu0 %2691
        %2693 = vrot.lane.b32.xlu0 %v1619, 120
        %v2694 = vpop.permute.xlu0 %2693
        %2695 = vrot.lane.b32.xlu0 %v1614, 88
        %v2696 = vpop.permute.xlu0 %2695
        %2697 = vrot.lane.b32.xlu0 %v1619, 88
        %v2698 = vpop.permute.xlu0 %2697
        %v2699 = vsel %vm1630, %v2692, 0
        %v2701 = vsel %vm1630, %v2694, 0
        %v2703 = vsel %vm1630, %v2696, 0
        %v2705 = vsel %vm1630, %v2698, 0
        %2707 = vmatprep.subr.mxu0 0.0
        %2708 = vmatpush1.xpose.msra.mxu0 0.0
        %2709 = vmatprep.subr.mxu0 0.0
        %2710 = vmatpush1.xpose.msra.mxu0 0.0
        %2711 = vmatprep.subr.mxu0 0.0
        %2712 = vmatpush1.xpose.msra.mxu0 0.0
        %2713 = vmatprep.subr.mxu0 0.0
        %2714 = vmatpush1.xpose.msra.mxu0 0.0
        %2715 = vmatprep.subr.mxu0 0.0
        %2716 = vmatpush1.xpose.msra.mxu0 0.0
        %2717 = vmatprep.subr.mxu0 0.0
        %2718 = vmatpush1.xpose.msra.mxu0 0.0
        %2719 = vmatprep.subr.mxu0 0.0
        %2720 = vmatpush1.xpose.msra.mxu0 0.0
        %2721 = vmatprep.subr.mxu0 0.0
        %2722 = vmatpush1.xpose.msra.mxu0 0.0
        %2723 = vmatprep.subr.mxu0 0.0
        %2724 = vmatpush1.xpose.msra.mxu0 0.0
        %2725 = vmatprep.subr.mxu0 0.0
        %2726 = vmatpush1.xpose.msra.mxu0 0.0
        %2727 = vmatprep.subr.mxu0 0.0
        %2728 = vmatpush1.xpose.msra.mxu0 0.0
        %2729 = vmatprep.subr.mxu0 0.0
        %2730 = vmatpush1.xpose.msra.mxu0 0.0
        %2731 = vmatprep.subr.mxu0 0.0
        %2732 = vmatpush1.xpose.msra.mxu0 0.0
        %2733 = vmatprep.subr.mxu0 0.0
        %2734 = vmatpush1.xpose.msra.mxu0 0.0
        %2735 = vmatprep.subr.mxu0 0.0
        %2736 = vmatpush1.xpose.msra.mxu0 %v2705
        %2737 = vmatprep.subr.mxu0 0.0
        %2738 = vmatpush1.xpose.msra.mxu0 %v2703
        %2739 = vmatprep.subr.mxu0 0.0
        %2740 = vmatpush2.xpose.msra.mxu0 0.0
        %2741 = vmatprep.subr.mxu0 0.0
        %2742 = vmatpush2.xpose.msra.mxu0 0.0
        %2743 = vmatprep.subr.mxu0 0.0
        %2744 = vmatpush2.xpose.msra.mxu0 0.0
        %2745 = vmatprep.subr.mxu0 0.0
        %2746 = vmatpush2.xpose.msra.mxu0 0.0
        %2747 = vmatprep.subr.mxu0 0.0
        %2748 = vmatpush2.xpose.msra.mxu0 0.0
        %2749 = vmatprep.subr.mxu0 0.0
        %2750 = vmatpush2.xpose.msra.mxu0 0.0
        %2751 = vmatprep.subr.mxu0 0.0
        %2752 = vmatpush2.xpose.msra.mxu0 0.0
        %2753 = vmatprep.subr.mxu0 0.0
        %2754 = vmatpush2.xpose.msra.mxu0 0.0
        %2755 = vmatprep.subr.mxu0 0.0
        %2756 = vmatpush2.xpose.msra.mxu0 0.0
        %2757 = vmatprep.subr.mxu0 0.0
        %2758 = vmatpush2.xpose.msra.mxu0 0.0
        %2759 = vmatprep.subr.mxu0 0.0
        %2760 = vmatpush2.xpose.msra.mxu0 0.0
        %2761 = vmatprep.subr.mxu0 0.0
        %2762 = vmatpush2.xpose.msra.mxu0 0.0
        %2763 = vmatprep.subr.mxu0 0.0
        %2764 = vmatpush2.xpose.msra.mxu0 0.0
        %2765 = vmatprep.subr.mxu0 0.0
        %2766 = vmatpush2.xpose.msra.mxu0 0.0
        %2767 = vmatprep.subr.mxu0 0.0
        %2768 = vmatpush2.xpose.msra.mxu0 0.0
        %2769 = vmatprep.subr.mxu0 0.0
        %2770 = vmatpush2.xpose.msra.mxu0 0.0
        %2771 = vmatprep.mubr.f32.mxu0 0.0
        %2772 = vmatmul.mubr.f32.gmra.mxu0 %v2699
        %v2773 = vpop.f32.mrf.mxu0
        %v2774 = vadd.f32 0.0, %v2773
        %v2775 = vpop.f32.mrf.mxu0
        %2776 = vmatprep.mubr.f32.mxu0 0.0
        %2777 = vmatmul.mubr.f32.gmra.mxu0 %v2701
        %v2778 = vpop.f32.mrf.mxu0
        %v2779 = vadd.f32 0.0, %v2778
        %v2780 = vpop.f32.mrf.mxu0
        %2781 = vdwg.mxu0
        %v2782 = vmul.f32 %v2774, 0.35355338
        %v2783 = vmul.f32 %v2779, 0.35355338
        %v2784 = vadd.f32 %v2782, %v2576
        %v2785 = vadd.f32 %v2783, %v2576
        %v2786 = vsel %vm1724, %v2784, -inf
        %2787 = vmax.xlane.f32.xlu0 %v2786
        %v2788 = vpop.xlane.xlu0 %2787
        %v2789 = vsel %vm1724, %v2785, -inf
        %2790 = vmax.xlane.f32.xlu0 %v2789
        %v2791 = vpop.xlane.xlu0 %2790
        %v2792 = vsub.f32 %v2784, %v2788
        %v2793 = vsub.f32 %v2785, %v2791
        %v2794 = vmul.f32 %v2792, 1.442695
        %v2795 = vpow.pop %v2794
        %v2796 = vmul.f32 %v2793, 1.442695
        %v2797 = vpow.pop %v2796
        %v2798 = vsel %vm1724, %v2795, 0.0
        %2799 = vadd.xlane.f32.xlu0 %v2798
        %v2800 = vpop.xlane.xlu0 %2799
        %v2801 = vsel %vm1724, %v2797, 0.0
        %2802 = vadd.xlane.f32.xlu0 %v2801
        %v2803 = vpop.xlane.xlu0 %2802
        %v2804 = vrcp.pop %v2800
        %v2805 = vrcp.pop %v2803
        %v2806 = vmul.f32 %v2795, %v2804
        %v2807 = vmul.f32 %v2797, %v2805
        %2808 = vrot.lane.b32.xlu0 %v1614, 56
        %v2809 = vpop.permute.xlu0 %2808
        %2810 = vrot.lane.b32.xlu0 %v1619, 56
        %v2811 = vpop.permute.xlu0 %2810
        %v2815 = vsel %vm1724, %v2806, 0
        %v2818 = vsel %vm1724, %v2807, 0
        %2820 = vmatprep.subr.mxu0 0.0
        %2821 = vmatpush1.msra.mxu0 0.0
        %2822 = vmatprep.subr.mxu0 0.0
        %2823 = vmatpush1.msra.mxu0 0.0
        %2824 = vmatprep.subr.mxu0 0.0
        %2825 = vmatpush1.msra.mxu0 0.0
        %2826 = vmatprep.subr.mxu0 0.0
        %2827 = vmatpush1.msra.mxu0 0.0
        %2828 = vmatprep.subr.mxu0 0.0
        %2829 = vmatpush1.msra.mxu0 0.0
        %2830 = vmatprep.subr.mxu0 0.0
        %2831 = vmatpush1.msra.mxu0 0.0
        %2832 = vmatprep.subr.mxu0 0.0
        %2833 = vmatpush1.msra.mxu0 0.0
        %2834 = vmatprep.subr.mxu0 0.0
        %2835 = vmatpush1.msra.mxu0 0.0
        %2836 = vmatprep.subr.mxu0 0.0
        %2837 = vmatpush1.msra.mxu0 0.0
        %2838 = vmatprep.subr.mxu0 0.0
        %2839 = vmatpush1.msra.mxu0 0.0
        %2840 = vmatprep.subr.mxu0 0.0
        %2841 = vmatpush1.msra.mxu0 0.0
        %2842 = vmatprep.subr.mxu0 0.0
        %2843 = vmatpush1.msra.mxu0 0.0
        %2844 = vmatprep.subr.mxu0 0.0
        %2845 = vmatpush1.msra.mxu0 0.0
        %2846 = vmatprep.subr.mxu0 0.0
        %2847 = vmatpush1.msra.mxu0 0.0
        %2848 = vmatprep.subr.mxu0 0.0
        %2849 = vmatpush1.msra.mxu0 %v2811
        %2850 = vmatprep.subr.mxu0 0.0
        %2851 = vmatpush1.msra.mxu0 %v2809
        %2852 = vmatprep.subr.mxu0 0.0
        %2853 = vmatpush2.msra.mxu0 0.0
        %2854 = vmatprep.subr.mxu0 0.0
        %2855 = vmatpush2.msra.mxu0 0.0
        %2856 = vmatprep.subr.mxu0 0.0
        %2857 = vmatpush2.msra.mxu0 0.0
        %2858 = vmatprep.subr.mxu0 0.0
        %2859 = vmatpush2.msra.mxu0 0.0
        %2860 = vmatprep.subr.mxu0 0.0
        %2861 = vmatpush2.msra.mxu0 0.0
        %2862 = vmatprep.subr.mxu0 0.0
        %2863 = vmatpush2.msra.mxu0 0.0
        %2864 = vmatprep.subr.mxu0 0.0
        %2865 = vmatpush2.msra.mxu0 0.0
        %2866 = vmatprep.subr.mxu0 0.0
        %2867 = vmatpush2.msra.mxu0 0.0
        %2868 = vmatprep.subr.mxu0 0.0
        %2869 = vmatpush2.msra.mxu0 0.0
        %2870 = vmatprep.subr.mxu0 0.0
        %2871 = vmatpush2.msra.mxu0 0.0
        %2872 = vmatprep.subr.mxu0 0.0
        %2873 = vmatpush2.msra.mxu0 0.0
        %2874 = vmatprep.subr.mxu0 0.0
        %2875 = vmatpush2.msra.mxu0 0.0
        %2876 = vmatprep.subr.mxu0 0.0
        %2877 = vmatpush2.msra.mxu0 0.0
        %2878 = vmatprep.subr.mxu0 0.0
        %2879 = vmatpush2.msra.mxu0 0.0
        %2880 = vmatprep.subr.mxu0 0.0
        %2881 = vmatpush2.msra.mxu0 0.0
        %2882 = vmatprep.subr.mxu0 0.0
        %2883 = vmatpush2.msra.mxu0 0.0
        %2884 = vmatprep.mubr.f32.mxu0 0.0
        %2885 = vmatmul.mubr.f32.gmra.mxu0 %v2815
        %v2886 = vpop.f32.mrf.mxu0
        %v2887 = vadd.f32 0.0, %v2886
        %v2888 = vpop.f32.mrf.mxu0
        %2889 = vmatprep.mubr.f32.mxu0 0.0
        %2890 = vmatmul.mubr.f32.gmra.mxu0 %v2818
        %v2891 = vpop.f32.mrf.mxu0
        %v2892 = vadd.f32 0.0, %v2891
        %v2893 = vpop.f32.mrf.mxu0
        %2894 = vdwg.mxu0
        %2897 = vrot.lane.b32.xlu0 %v2887, 8
        %v2898 = vpop.permute.xlu0 %2897
        %2899 = vrot.lane.b32.xlu0 %v2892, 8
        %v2900 = vpop.permute.xlu0 %2899
        %2903 = vst.msk [vmem:[#allocation2 + $0x10] sm:$0xff] %vm2048, %v2898
        %2904 = vst.msk [vmem:[#allocation2 + $0x18] sm:$0xff] %vm2048, %v2900
        %2905 = vrot.lane.b32.xlu0 %v1614, 112
        %v2906 = vpop.permute.xlu0 %2905
        %2907 = vrot.lane.b32.xlu0 %v1619, 112
        %v2908 = vpop.permute.xlu0 %2907
        %2909 = vrot.lane.b32.xlu0 %v1614, 80
        %v2910 = vpop.permute.xlu0 %2909
        %2911 = vrot.lane.b32.xlu0 %v1619, 80
        %v2912 = vpop.permute.xlu0 %2911
        %v2913 = vsel %vm1630, %v2906, 0
        %v2915 = vsel %vm1630, %v2908, 0
        %v2917 = vsel %vm1630, %v2910, 0
        %v2919 = vsel %vm1630, %v2912, 0
        %2921 = vmatprep.subr.mxu0 0.0
        %2922 = vmatpush1.xpose.msra.mxu0 0.0
        %2923 = vmatprep.subr.mxu0 0.0
        %2924 = vmatpush1.xpose.msra.mxu0 0.0
        %2925 = vmatprep.subr.mxu0 0.0
        %2926 = vmatpush1.xpose.msra.mxu0 0.0
        %2927 = vmatprep.subr.mxu0 0.0
        %2928 = vmatpush1.xpose.msra.mxu0 0.0
        %2929 = vmatprep.subr.mxu0 0.0
        %2930 = vmatpush1.xpose.msra.mxu0 0.0
        %2931 = vmatprep.subr.mxu0 0.0
        %2932 = vmatpush1.xpose.msra.mxu0 0.0
        %2933 = vmatprep.subr.mxu0 0.0
        %2934 = vmatpush1.xpose.msra.mxu0 0.0
        %2935 = vmatprep.subr.mxu0 0.0
        %2936 = vmatpush1.xpose.msra.mxu0 0.0
        %2937 = vmatprep.subr.mxu0 0.0
        %2938 = vmatpush1.xpose.msra.mxu0 0.0
        %2939 = vmatprep.subr.mxu0 0.0
        %2940 = vmatpush1.xpose.msra.mxu0 0.0
        %2941 = vmatprep.subr.mxu0 0.0
        %2942 = vmatpush1.xpose.msra.mxu0 0.0
        %2943 = vmatprep.subr.mxu0 0.0
        %2944 = vmatpush1.xpose.msra.mxu0 0.0
        %2945 = vmatprep.subr.mxu0 0.0
        %2946 = vmatpush1.xpose.msra.mxu0 0.0
        %2947 = vmatprep.subr.mxu0 0.0
        %2948 = vmatpush1.xpose.msra.mxu0 0.0
        %2949 = vmatprep.subr.mxu0 0.0
        %2950 = vmatpush1.xpose.msra.mxu0 %v2919
        %2951 = vmatprep.subr.mxu0 0.0
        %2952 = vmatpush1.xpose.msra.mxu0 %v2917
        %2953 = vmatprep.subr.mxu0 0.0
        %2954 = vmatpush2.xpose.msra.mxu0 0.0
        %2955 = vmatprep.subr.mxu0 0.0
        %2956 = vmatpush2.xpose.msra.mxu0 0.0
        %2957 = vmatprep.subr.mxu0 0.0
        %2958 = vmatpush2.xpose.msra.mxu0 0.0
        %2959 = vmatprep.subr.mxu0 0.0
        %2960 = vmatpush2.xpose.msra.mxu0 0.0
        %2961 = vmatprep.subr.mxu0 0.0
        %2962 = vmatpush2.xpose.msra.mxu0 0.0
        %2963 = vmatprep.subr.mxu0 0.0
        %2964 = vmatpush2.xpose.msra.mxu0 0.0
        %2965 = vmatprep.subr.mxu0 0.0
        %2966 = vmatpush2.xpose.msra.mxu0 0.0
        %2967 = vmatprep.subr.mxu0 0.0
        %2968 = vmatpush2.xpose.msra.mxu0 0.0
        %2969 = vmatprep.subr.mxu0 0.0
        %2970 = vmatpush2.xpose.msra.mxu0 0.0
        %2971 = vmatprep.subr.mxu0 0.0
        %2972 = vmatpush2.xpose.msra.mxu0 0.0
        %2973 = vmatprep.subr.mxu0 0.0
        %2974 = vmatpush2.xpose.msra.mxu0 0.0
        %2975 = vmatprep.subr.mxu0 0.0
        %2976 = vmatpush2.xpose.msra.mxu0 0.0
        %2977 = vmatprep.subr.mxu0 0.0
        %2978 = vmatpush2.xpose.msra.mxu0 0.0
        %2979 = vmatprep.subr.mxu0 0.0
        %2980 = vmatpush2.xpose.msra.mxu0 0.0
        %2981 = vmatprep.subr.mxu0 0.0
        %2982 = vmatpush2.xpose.msra.mxu0 0.0
        %2983 = vmatprep.subr.mxu0 0.0
        %2984 = vmatpush2.xpose.msra.mxu0 0.0
        %2985 = vmatprep.mubr.f32.mxu0 0.0
        %2986 = vmatmul.mubr.f32.gmra.mxu0 %v2913
        %v2987 = vpop.f32.mrf.mxu0
        %v2988 = vadd.f32 0.0, %v2987
        %v2989 = vpop.f32.mrf.mxu0
        %2990 = vmatprep.mubr.f32.mxu0 0.0
        %2991 = vmatmul.mubr.f32.gmra.mxu0 %v2915
        %v2992 = vpop.f32.mrf.mxu0
        %v2993 = vadd.f32 0.0, %v2992
        %v2994 = vpop.f32.mrf.mxu0
        %2995 = vdwg.mxu0
        %v2996 = vmul.f32 %v2988, 0.35355338
        %v2997 = vmul.f32 %v2993, 0.35355338
        %v2998 = vadd.f32 %v2996, %v2576
        %v2999 = vadd.f32 %v2997, %v2576
        %v3000 = vsel %vm1724, %v2998, -inf
        %3001 = vmax.xlane.f32.xlu0 %v3000
        %v3002 = vpop.xlane.xlu0 %3001
        %v3003 = vsel %vm1724, %v2999, -inf
        %3004 = vmax.xlane.f32.xlu0 %v3003
        %v3005 = vpop.xlane.xlu0 %3004
        %v3006 = vsub.f32 %v2998, %v3002
        %v3007 = vsub.f32 %v2999, %v3005
        %v3008 = vmul.f32 %v3006, 1.442695
        %v3009 = vpow.pop %v3008
        %v3010 = vmul.f32 %v3007, 1.442695
        %v3011 = vpow.pop %v3010
        %v3012 = vsel %vm1724, %v3009, 0.0
        %3013 = vadd.xlane.f32.xlu0 %v3012
        %v3014 = vpop.xlane.xlu0 %3013
        %v3015 = vsel %vm1724, %v3011, 0.0
        %3016 = vadd.xlane.f32.xlu0 %v3015
        %v3017 = vpop.xlane.xlu0 %3016
        %v3018 = vrcp.pop %v3014
        %v3019 = vrcp.pop %v3017
        %v3020 = vmul.f32 %v3009, %v3018
        %v3021 = vmul.f32 %v3011, %v3019
        %3022 = vrot.lane.b32.xlu0 %v1614, 48
        %v3023 = vpop.permute.xlu0 %3022
        %3024 = vrot.lane.b32.xlu0 %v1619, 48
        %v3025 = vpop.permute.xlu0 %3024
        %v3029 = vsel %vm1724, %v3020, 0
        %v3032 = vsel %vm1724, %v3021, 0
        %3034 = vmatprep.subr.mxu0 0.0
        %3035 = vmatpush1.msra.mxu0 0.0
        %3036 = vmatprep.subr.mxu0 0.0
        %3037 = vmatpush1.msra.mxu0 0.0
        %3038 = vmatprep.subr.mxu0 0.0
        %3039 = vmatpush1.msra.mxu0 0.0
        %3040 = vmatprep.subr.mxu0 0.0
        %3041 = vmatpush1.msra.mxu0 0.0
        %3042 = vmatprep.subr.mxu0 0.0
        %3043 = vmatpush1.msra.mxu0 0.0
        %3044 = vmatprep.subr.mxu0 0.0
        %3045 = vmatpush1.msra.mxu0 0.0
        %3046 = vmatprep.subr.mxu0 0.0
        %3047 = vmatpush1.msra.mxu0 0.0
        %3048 = vmatprep.subr.mxu0 0.0
        %3049 = vmatpush1.msra.mxu0 0.0
        %3050 = vmatprep.subr.mxu0 0.0
        %3051 = vmatpush1.msra.mxu0 0.0
        %3052 = vmatprep.subr.mxu0 0.0
        %3053 = vmatpush1.msra.mxu0 0.0
        %3054 = vmatprep.subr.mxu0 0.0
        %3055 = vmatpush1.msra.mxu0 0.0
        %3056 = vmatprep.subr.mxu0 0.0
        %3057 = vmatpush1.msra.mxu0 0.0
        %3058 = vmatprep.subr.mxu0 0.0
        %3059 = vmatpush1.msra.mxu0 0.0
        %3060 = vmatprep.subr.mxu0 0.0
        %3061 = vmatpush1.msra.mxu0 0.0
        %3062 = vmatprep.subr.mxu0 0.0
        %3063 = vmatpush1.msra.mxu0 %v3025
        %3064 = vmatprep.subr.mxu0 0.0
        %3065 = vmatpush1.msra.mxu0 %v3023
        %3066 = vmatprep.subr.mxu0 0.0
        %3067 = vmatpush2.msra.mxu0 0.0
        %3068 = vmatprep.subr.mxu0 0.0
        %3069 = vmatpush2.msra.mxu0 0.0
        %3070 = vmatprep.subr.mxu0 0.0
        %3071 = vmatpush2.msra.mxu0 0.0
        %3072 = vmatprep.subr.mxu0 0.0
        %3073 = vmatpush2.msra.mxu0 0.0
        %3074 = vmatprep.subr.mxu0 0.0
        %3075 = vmatpush2.msra.mxu0 0.0
        %3076 = vmatprep.subr.mxu0 0.0
        %3077 = vmatpush2.msra.mxu0 0.0
        %3078 = vmatprep.subr.mxu0 0.0
        %3079 = vmatpush2.msra.mxu0 0.0
        %3080 = vmatprep.subr.mxu0 0.0
        %3081 = vmatpush2.msra.mxu0 0.0
        %3082 = vmatprep.subr.mxu0 0.0
        %3083 = vmatpush2.msra.mxu0 0.0
        %3084 = vmatprep.subr.mxu0 0.0
        %3085 = vmatpush2.msra.mxu0 0.0
        %3086 = vmatprep.subr.mxu0 0.0
        %3087 = vmatpush2.msra.mxu0 0.0
        %3088 = vmatprep.subr.mxu0 0.0
        %3089 = vmatpush2.msra.mxu0 0.0
        %3090 = vmatprep.subr.mxu0 0.0
        %3091 = vmatpush2.msra.mxu0 0.0
        %3092 = vmatprep.subr.mxu0 0.0
        %3093 = vmatpush2.msra.mxu0 0.0
        %3094 = vmatprep.subr.mxu0 0.0
        %3095 = vmatpush2.msra.mxu0 0.0
        %3096 = vmatprep.subr.mxu0 0.0
        %3097 = vmatpush2.msra.mxu0 0.0
        %3098 = vmatprep.mubr.f32.mxu0 0.0
        %3099 = vmatmul.mubr.f32.gmra.mxu0 %v3029
        %v3100 = vpop.f32.mrf.mxu0
        %v3101 = vadd.f32 0.0, %v3100
        %v3102 = vpop.f32.mrf.mxu0
        %3103 = vmatprep.mubr.f32.mxu0 0.0
        %3104 = vmatmul.mubr.f32.gmra.mxu0 %v3032
        %v3105 = vpop.f32.mrf.mxu0
        %v3106 = vadd.f32 0.0, %v3105
        %v3107 = vpop.f32.mrf.mxu0
        %3108 = vdwg.mxu0
        %3111 = vrot.lane.b32.xlu0 %v3101, 16
        %v3112 = vpop.permute.xlu0 %3111
        %3113 = vrot.lane.b32.xlu0 %v3106, 16
        %v3114 = vpop.permute.xlu0 %3113
        %3117 = vst.msk [vmem:[#allocation2 + $0x10] sm:$0xff] %vm2263, %v3112
        %3118 = vst.msk [vmem:[#allocation2 + $0x18] sm:$0xff] %vm2263, %v3114
        %3119 = vrot.lane.b32.xlu0 %v1614, 104
        %v3120 = vpop.permute.xlu0 %3119
        %3121 = vrot.lane.b32.xlu0 %v1619, 104
        %v3122 = vpop.permute.xlu0 %3121
        %3123 = vrot.lane.b32.xlu0 %v1614, 72
        %v3124 = vpop.permute.xlu0 %3123
        %3125 = vrot.lane.b32.xlu0 %v1619, 72
        %v3126 = vpop.permute.xlu0 %3125
        %v3127 = vsel %vm1630, %v3120, 0
        %v3129 = vsel %vm1630, %v3122, 0
        %v3131 = vsel %vm1630, %v3124, 0
        %v3133 = vsel %vm1630, %v3126, 0
        %3135 = vmatprep.subr.mxu0 0.0
        %3136 = vmatpush1.xpose.msra.mxu0 0.0
        %3137 = vmatprep.subr.mxu0 0.0
        %3138 = vmatpush1.xpose.msra.mxu0 0.0
        %3139 = vmatprep.subr.mxu0 0.0
        %3140 = vmatpush1.xpose.msra.mxu0 0.0
        %3141 = vmatprep.subr.mxu0 0.0
        %3142 = vmatpush1.xpose.msra.mxu0 0.0
        %3143 = vmatprep.subr.mxu0 0.0
        %3144 = vmatpush1.xpose.msra.mxu0 0.0
        %3145 = vmatprep.subr.mxu0 0.0
        %3146 = vmatpush1.xpose.msra.mxu0 0.0
        %3147 = vmatprep.subr.mxu0 0.0
        %3148 = vmatpush1.xpose.msra.mxu0 0.0
        %3149 = vmatprep.subr.mxu0 0.0
        %3150 = vmatpush1.xpose.msra.mxu0 0.0
        %3151 = vmatprep.subr.mxu0 0.0
        %3152 = vmatpush1.xpose.msra.mxu0 0.0
        %3153 = vmatprep.subr.mxu0 0.0
        %3154 = vmatpush1.xpose.msra.mxu0 0.0
        %3155 = vmatprep.subr.mxu0 0.0
        %3156 = vmatpush1.xpose.msra.mxu0 0.0
        %3157 = vmatprep.subr.mxu0 0.0
        %3158 = vmatpush1.xpose.msra.mxu0 0.0
        %3159 = vmatprep.subr.mxu0 0.0
        %3160 = vmatpush1.xpose.msra.mxu0 0.0
        %3161 = vmatprep.subr.mxu0 0.0
        %3162 = vmatpush1.xpose.msra.mxu0 0.0
        %3163 = vmatprep.subr.mxu0 0.0
        %3164 = vmatpush1.xpose.msra.mxu0 %v3133
        %3165 = vmatprep.subr.mxu0 0.0
        %3166 = vmatpush1.xpose.msra.mxu0 %v3131
        %3167 = vmatprep.subr.mxu0 0.0
        %3168 = vmatpush2.xpose.msra.mxu0 0.0
        %3169 = vmatprep.subr.mxu0 0.0
        %3170 = vmatpush2.xpose.msra.mxu0 0.0
        %3171 = vmatprep.subr.mxu0 0.0
        %3172 = vmatpush2.xpose.msra.mxu0 0.0
        %3173 = vmatprep.subr.mxu0 0.0
        %3174 = vmatpush2.xpose.msra.mxu0 0.0
        %3175 = vmatprep.subr.mxu0 0.0
        %3176 = vmatpush2.xpose.msra.mxu0 0.0
        %3177 = vmatprep.subr.mxu0 0.0
        %3178 = vmatpush2.xpose.msra.mxu0 0.0
        %3179 = vmatprep.subr.mxu0 0.0
        %3180 = vmatpush2.xpose.msra.mxu0 0.0
        %3181 = vmatprep.subr.mxu0 0.0
        %3182 = vmatpush2.xpose.msra.mxu0 0.0
        %3183 = vmatprep.subr.mxu0 0.0
        %3184 = vmatpush2.xpose.msra.mxu0 0.0
        %3185 = vmatprep.subr.mxu0 0.0
        %3186 = vmatpush2.xpose.msra.mxu0 0.0
        %3187 = vmatprep.subr.mxu0 0.0
        %3188 = vmatpush2.xpose.msra.mxu0 0.0
        %3189 = vmatprep.subr.mxu0 0.0
        %3190 = vmatpush2.xpose.msra.mxu0 0.0
        %3191 = vmatprep.subr.mxu0 0.0
        %3192 = vmatpush2.xpose.msra.mxu0 0.0
        %3193 = vmatprep.subr.mxu0 0.0
        %3194 = vmatpush2.xpose.msra.mxu0 0.0
        %3195 = vmatprep.subr.mxu0 0.0
        %3196 = vmatpush2.xpose.msra.mxu0 0.0
        %3197 = vmatprep.subr.mxu0 0.0
        %3198 = vmatpush2.xpose.msra.mxu0 0.0
        %3199 = vmatprep.mubr.f32.mxu0 0.0
        %3200 = vmatmul.mubr.f32.gmra.mxu0 %v3127
        %v3201 = vpop.f32.mrf.mxu0
        %v3202 = vadd.f32 0.0, %v3201
        %v3203 = vpop.f32.mrf.mxu0
        %3204 = vmatprep.mubr.f32.mxu0 0.0
        %3205 = vmatmul.mubr.f32.gmra.mxu0 %v3129
        %v3206 = vpop.f32.mrf.mxu0
        %v3207 = vadd.f32 0.0, %v3206
        %v3208 = vpop.f32.mrf.mxu0
        %3209 = vdwg.mxu0
        %v3210 = vmul.f32 %v3202, 0.35355338
        %v3211 = vmul.f32 %v3207, 0.35355338
        %v3212 = vadd.f32 %v3210, %v2576
        %v3213 = vadd.f32 %v3211, %v2576
        %v3214 = vsel %vm1724, %v3212, -inf
        %3215 = vmax.xlane.f32.xlu0 %v3214
        %v3216 = vpop.xlane.xlu0 %3215
        %v3217 = vsel %vm1724, %v3213, -inf
        %3218 = vmax.xlane.f32.xlu0 %v3217
        %v3219 = vpop.xlane.xlu0 %3218
        %v3220 = vsub.f32 %v3212, %v3216
        %v3221 = vsub.f32 %v3213, %v3219
        %v3222 = vmul.f32 %v3220, 1.442695
        %v3223 = vpow.pop %v3222
        %v3224 = vmul.f32 %v3221, 1.442695
        %v3225 = vpow.pop %v3224
        %v3226 = vsel %vm1724, %v3223, 0.0
        %3227 = vadd.xlane.f32.xlu0 %v3226
        %v3228 = vpop.xlane.xlu0 %3227
        %v3229 = vsel %vm1724, %v3225, 0.0
        %3230 = vadd.xlane.f32.xlu0 %v3229
        %v3231 = vpop.xlane.xlu0 %3230
        %v3232 = vrcp.pop %v3228
        %v3233 = vrcp.pop %v3231
        %v3234 = vmul.f32 %v3223, %v3232
        %v3235 = vmul.f32 %v3225, %v3233
        %3236 = vrot.lane.b32.xlu0 %v1614, 40
        %v3237 = vpop.permute.xlu0 %3236
        %3238 = vrot.lane.b32.xlu0 %v1619, 40
        %v3239 = vpop.permute.xlu0 %3238
        %v3243 = vsel %vm1724, %v3234, 0
        %v3246 = vsel %vm1724, %v3235, 0
        %3248 = vmatprep.subr.mxu0 0.0
        %3249 = vmatpush1.msra.mxu0 0.0
        %3250 = vmatprep.subr.mxu0 0.0
        %3251 = vmatpush1.msra.mxu0 0.0
        %3252 = vmatprep.subr.mxu0 0.0
        %3253 = vmatpush1.msra.mxu0 0.0
        %3254 = vmatprep.subr.mxu0 0.0
        %3255 = vmatpush1.msra.mxu0 0.0
        %3256 = vmatprep.subr.mxu0 0.0
        %3257 = vmatpush1.msra.mxu0 0.0
        %3258 = vmatprep.subr.mxu0 0.0
        %3259 = vmatpush1.msra.mxu0 0.0
        %3260 = vmatprep.subr.mxu0 0.0
        %3261 = vmatpush1.msra.mxu0 0.0
        %3262 = vmatprep.subr.mxu0 0.0
        %3263 = vmatpush1.msra.mxu0 0.0
        %3264 = vmatprep.subr.mxu0 0.0
        %3265 = vmatpush1.msra.mxu0 0.0
        %3266 = vmatprep.subr.mxu0 0.0
        %3267 = vmatpush1.msra.mxu0 0.0
        %3268 = vmatprep.subr.mxu0 0.0
        %3269 = vmatpush1.msra.mxu0 0.0
        %3270 = vmatprep.subr.mxu0 0.0
        %3271 = vmatpush1.msra.mxu0 0.0
        %3272 = vmatprep.subr.mxu0 0.0
        %3273 = vmatpush1.msra.mxu0 0.0
        %3274 = vmatprep.subr.mxu0 0.0
        %3275 = vmatpush1.msra.mxu0 0.0
        %3276 = vmatprep.subr.mxu0 0.0
        %3277 = vmatpush1.msra.mxu0 %v3239
        %3278 = vmatprep.subr.mxu0 0.0
        %3279 = vmatpush1.msra.mxu0 %v3237
        %3280 = vmatprep.subr.mxu0 0.0
        %3281 = vmatpush2.msra.mxu0 0.0
        %3282 = vmatprep.subr.mxu0 0.0
        %3283 = vmatpush2.msra.mxu0 0.0
        %3284 = vmatprep.subr.mxu0 0.0
        %3285 = vmatpush2.msra.mxu0 0.0
        %3286 = vmatprep.subr.mxu0 0.0
        %3287 = vmatpush2.msra.mxu0 0.0
        %3288 = vmatprep.subr.mxu0 0.0
        %3289 = vmatpush2.msra.mxu0 0.0
        %3290 = vmatprep.subr.mxu0 0.0
        %3291 = vmatpush2.msra.mxu0 0.0
        %3292 = vmatprep.subr.mxu0 0.0
        %3293 = vmatpush2.msra.mxu0 0.0
        %3294 = vmatprep.subr.mxu0 0.0
        %3295 = vmatpush2.msra.mxu0 0.0
        %3296 = vmatprep.subr.mxu0 0.0
        %3297 = vmatpush2.msra.mxu0 0.0
        %3298 = vmatprep.subr.mxu0 0.0
        %3299 = vmatpush2.msra.mxu0 0.0
        %3300 = vmatprep.subr.mxu0 0.0
        %3301 = vmatpush2.msra.mxu0 0.0
        %3302 = vmatprep.subr.mxu0 0.0
        %3303 = vmatpush2.msra.mxu0 0.0
        %3304 = vmatprep.subr.mxu0 0.0
        %3305 = vmatpush2.msra.mxu0 0.0
        %3306 = vmatprep.subr.mxu0 0.0
        %3307 = vmatpush2.msra.mxu0 0.0
        %3308 = vmatprep.subr.mxu0 0.0
        %3309 = vmatpush2.msra.mxu0 0.0
        %3310 = vmatprep.subr.mxu0 0.0
        %3311 = vmatpush2.msra.mxu0 0.0
        %3312 = vmatprep.mubr.f32.mxu0 0.0
        %3313 = vmatmul.mubr.f32.gmra.mxu0 %v3243
        %v3314 = vpop.f32.mrf.mxu0
        %v3315 = vadd.f32 0.0, %v3314
        %v3316 = vpop.f32.mrf.mxu0
        %3317 = vmatprep.mubr.f32.mxu0 0.0
        %3318 = vmatmul.mubr.f32.gmra.mxu0 %v3246
        %v3319 = vpop.f32.mrf.mxu0
        %v3320 = vadd.f32 0.0, %v3319
        %v3321 = vpop.f32.mrf.mxu0
        %3322 = vdwg.mxu0
        %3325 = vrot.lane.b32.xlu0 %v3315, 24
        %v3326 = vpop.permute.xlu0 %3325
        %3327 = vrot.lane.b32.xlu0 %v3320, 24
        %v3328 = vpop.permute.xlu0 %3327
        %3331 = vst.msk [vmem:[#allocation2 + $0x10] sm:$0xff] %vm2478, %v3326
        %3332 = vst.msk [vmem:[#allocation2 + $0x18] sm:$0xff] %vm2478, %v3328
        %v3333 = vld [vmem:[#allocation2] sm:$0xff]
        %v3334 = vld [vmem:[#allocation2 + $0x8] sm:$0xff]
        %v3335 = vld [vmem:[#allocation2 + $0x10] sm:$0xff]
        %v3336 = vld [vmem:[#allocation2 + $0x18] sm:$0xff]
        %v3337 = vld [vmem:[%s13] sm:$0xff]
        %v3338 = vld [vmem:[%s13 + $0x8] sm:$0xff]
        %v3339 = vld [vmem:[%s13 + $0x10] sm:$0xff]
        %v3340 = vld [vmem:[%s13 + $0x18] sm:$0xff]
        %v3342 = vsel %vm723, %v3333, 0
        %v3345 = vsel %vm723, %v3334, 0
        %v3348 = vsel %vm723, %v3335, 0
        %v3351 = vsel %vm723, %v3336, 0
        %3353 = vmatprep.subr.mxu0 0.0
        %3354 = vmatpush1.msra.mxu0 0.0
        %3355 = vmatprep.subr.mxu0 0.0
        %3356 = vmatpush1.msra.mxu0 0.0
        %3357 = vmatprep.subr.mxu0 0.0
        %3358 = vmatpush1.msra.mxu0 0.0
        %3359 = vmatprep.subr.mxu0 0.0
        %3360 = vmatpush1.msra.mxu0 0.0
        %3361 = vmatprep.subr.mxu0 0.0
        %3362 = vmatpush1.msra.mxu0 0.0
        %3363 = vmatprep.subr.mxu0 0.0
        %3364 = vmatpush1.msra.mxu0 0.0
        %3365 = vmatprep.subr.mxu0 0.0
        %3366 = vmatpush1.msra.mxu0 0.0
        %3367 = vmatprep.subr.mxu0 0.0
        %3368 = vmatpush1.msra.mxu0 0.0
        %3369 = vmatprep.subr.mxu0 0.0
        %3370 = vmatpush1.msra.mxu0 0.0
        %3371 = vmatprep.subr.mxu0 0.0
        %3372 = vmatpush1.msra.mxu0 0.0
        %3373 = vmatprep.subr.mxu0 0.0
        %3374 = vmatpush1.msra.mxu0 0.0
        %3375 = vmatprep.subr.mxu0 0.0
        %3376 = vmatpush1.msra.mxu0 0.0
        %3377 = vmatprep.subr.mxu0 0.0
        %3378 = vmatpush1.msra.mxu0 %v3340
        %3379 = vmatprep.subr.mxu0 0.0
        %3380 = vmatpush1.msra.mxu0 %v3339
        %3381 = vmatprep.subr.mxu0 0.0
        %3382 = vmatpush1.msra.mxu0 %v3338
        %3383 = vmatprep.subr.mxu0 0.0
        %3384 = vmatpush1.msra.mxu0 %v3337
        %3385 = vmatprep.subr.mxu0 0.0
        %3386 = vmatpush2.msra.mxu0 0.0
        %3387 = vmatprep.subr.mxu0 0.0
        %3388 = vmatpush2.msra.mxu0 0.0
        %3389 = vmatprep.subr.mxu0 0.0
        %3390 = vmatpush2.msra.mxu0 0.0
        %3391 = vmatprep.subr.mxu0 0.0
        %3392 = vmatpush2.msra.mxu0 0.0
        %3393 = vmatprep.subr.mxu0 0.0
        %3394 = vmatpush2.msra.mxu0 0.0
        %3395 = vmatprep.subr.mxu0 0.0
        %3396 = vmatpush2.msra.mxu0 0.0
        %3397 = vmatprep.subr.mxu0 0.0
        %3398 = vmatpush2.msra.mxu0 0.0
        %3399 = vmatprep.subr.mxu0 0.0
        %3400 = vmatpush2.msra.mxu0 0.0
        %3401 = vmatprep.subr.mxu0 0.0
        %3402 = vmatpush2.msra.mxu0 0.0
        %3403 = vmatprep.subr.mxu0 0.0
        %3404 = vmatpush2.msra.mxu0 0.0
        %3405 = vmatprep.subr.mxu0 0.0
        %3406 = vmatpush2.msra.mxu0 0.0
        %3407 = vmatprep.subr.mxu0 0.0
        %3408 = vmatpush2.msra.mxu0 0.0
        %3409 = vmatprep.subr.mxu0 0.0
        %3410 = vmatpush2.msra.mxu0 0.0
        %3411 = vmatprep.subr.mxu0 0.0
        %3412 = vmatpush2.msra.mxu0 0.0
        %3413 = vmatprep.subr.mxu0 0.0
        %3414 = vmatpush2.msra.mxu0 0.0
        %3415 = vmatprep.subr.mxu0 0.0
        %3416 = vmatpush2.msra.mxu0 0.0
        %3417 = vmatprep.mubr.f32.mxu0 0.0
        %3418 = vmatmul.mubr.f32.gmra.mxu0 %v3342
        %v3419 = vpop.f32.mrf.mxu0
        %v3420 = vadd.f32 0.0, %v3419
        %v3421 = vpop.f32.mrf.mxu0
        %3422 = vmatprep.mubr.f32.mxu0 0.0
        %3423 = vmatmul.mubr.f32.gmra.mxu0 %v3345
        %v3424 = vpop.f32.mrf.mxu0
        %v3425 = vadd.f32 0.0, %v3424
        %v3426 = vpop.f32.mrf.mxu0
        %3427 = vmatprep.mubr.f32.mxu0 0.0
        %3428 = vmatmul.mubr.f32.gmra.mxu0 %v3348
        %v3429 = vpop.f32.mrf.mxu0
        %v3430 = vadd.f32 0.0, %v3429
        %v3431 = vpop.f32.mrf.mxu0
        %3432 = vmatprep.mubr.f32.mxu0 0.0
        %3433 = vmatmul.mubr.f32.gmra.mxu0 %v3351
        %v3434 = vpop.f32.mrf.mxu0
        %v3435 = vadd.f32 0.0, %v3434
        %v3436 = vpop.f32.mrf.mxu0
        %3437 = vdwg.mxu0
        %v3438 = vmul.f32 %v3420, %v647
        %v3439 = vmul.f32 %v3425, %v652
        %v3440 = vmul.f32 %v3430, %v657
        %v3441 = vmul.f32 %v3435, %v662
        %v3442 = vmul.f32 %v3438, 0.975
        %v3443 = vmul.f32 %v3439, 0.975
        %v3444 = vmul.f32 %v3440, 0.975
        %v3445 = vmul.f32 %v3441, 0.975
        %v3446 = vadd.f32 %v1439, %v3442
        %v3447 = vadd.f32 %v1440, %v3443
        %v3448 = vadd.f32 %v1441, %v3444
        %v3449 = vadd.f32 %v1442, %v3445
        %v3450 = vld [vmem:[%s14] sm:$0x1]
        %v3451 = vld [vmem:[%s15] sm:$0x1]
        %v3452 = vsel %vm723, %v3446, 0.0
        %3453 = vadd.xlane.f32.xlu0 %v3452
        %v3454 = vpop.xlane.xlu0 %3453
        %v3455 = vsel %vm723, %v3447, 0.0
        %3456 = vadd.xlane.f32.xlu0 %v3455
        %v3457 = vpop.xlane.xlu0 %3456
        %v3458 = vsel %vm723, %v3448, 0.0
        %3459 = vadd.xlane.f32.xlu0 %v3458
        %v3460 = vpop.xlane.xlu0 %3459
        %v3461 = vsel %vm723, %v3449, 0.0
        %3462 = vadd.xlane.f32.xlu0 %v3461
        %v3463 = vpop.xlane.xlu0 %3462
        %v3464 = vmul.f32 %v3454, %v736
        %v3465 = vmul.f32 %v3457, %v736
        %v3466 = vmul.f32 %v3460, %v736
        %v3467 = vmul.f32 %v3463, %v736
        %v3468 = vsub.f32 %v3446, %v3464
        %v3469 = vsub.f32 %v3447, %v3465
        %v3470 = vsub.f32 %v3448, %v3466
        %v3471 = vsub.f32 %v3449, %v3467
        %v3472 = vmul.f32 %v3468, %v3468
        %v3473 = vmul.f32 %v3469, %v3469
        %v3474 = vmul.f32 %v3470, %v3470
        %v3475 = vmul.f32 %v3471, %v3471
        %v3476 = vsel %vm723, %v3472, 0.0
        %3477 = vadd.xlane.f32.xlu0 %v3476
        %v3478 = vpop.xlane.xlu0 %3477
        %v3479 = vsel %vm723, %v3473, 0.0
        %3480 = vadd.xlane.f32.xlu0 %v3479
        %v3481 = vpop.xlane.xlu0 %3480
        %v3482 = vsel %vm723, %v3474, 0.0
        %3483 = vadd.xlane.f32.xlu0 %v3482
        %v3484 = vpop.xlane.xlu0 %3483
        %v3485 = vsel %vm723, %v3475, 0.0
        %3486 = vadd.xlane.f32.xlu0 %v3485
        %v3487 = vpop.xlane.xlu0 %3486
        %v3488 = vmul.f32 %v3478, %v736
        %v3489 = vmul.f32 %v3481, %v736
        %v3490 = vmul.f32 %v3484, %v736
        %v3491 = vmul.f32 %v3487, %v736
        %v3492 = vadd.f32 %v3488, 1e-05
        %v3493 = vadd.f32 %v3489, 1e-05
        %v3494 = vadd.f32 %v3490, 1e-05
        %v3495 = vadd.f32 %v3491, 1e-05
        %v3496 = vrsqrt.pop %v3492
        %v3497 = vrsqrt.pop %v3493
        %v3498 = vrsqrt.pop %v3494
        %v3499 = vrsqrt.pop %v3495
        %v3500 = vmul.f32 %v3468, %v3496
        %v3501 = vmul.f32 %v3469, %v3497
        %v3502 = vmul.f32 %v3470, %v3498
        %v3503 = vmul.f32 %v3471, %v3499
        %v3505 = vlaneseq
        %v3506 = vshrl.u32 %v3505, 7
        %v3507 = vsub.s32 0, %v3506
        %v3508 = vrot.slane %v3450, %v3507
        %v3510 = vmul.f32 %v3500, %v3508
        %v3511 = vmul.f32 %v3501, %v3508
        %v3512 = vmul.f32 %v3502, %v3508
        %v3513 = vmul.f32 %v3503, %v3508
        %v3515 = vlaneseq
        %v3516 = vshrl.u32 %v3515, 7
        %v3517 = vsub.s32 0, %v3516
        %v3518 = vrot.slane %v3451, %v3517
        %v3520 = vadd.f32 %v3510, %v3518
        %v3521 = vadd.f32 %v3511, %v3518
        %v3522 = vadd.f32 %v3512, %v3518
        %v3523 = vadd.f32 %v3513, %v3518
        %v3524 = vmul.f32 %v3520, %v647
        %v3525 = vmul.f32 %v3521, %v652
        %v3526 = vmul.f32 %v3522, %v657
        %v3527 = vmul.f32 %v3523, %v662
        %v3528 = vld [vmem:[%s16] sm:$0xff]
        %v3529 = vld [vmem:[%s16 + $0x8] sm:$0xff]
        %v3530 = vld [vmem:[%s16 + $0x10] sm:$0xff]
        %v3531 = vld [vmem:[%s16 + $0x18] sm:$0xff]
        %v3533 = vsel %vm723, %v3524, 0
        %v3536 = vsel %vm723, %v3525, 0
        %v3539 = vsel %vm723, %v3526, 0
        %v3542 = vsel %vm723, %v3527, 0
        %3544 = vmatprep.subr.mxu0 0.0
        %3545 = vmatpush1.msra.mxu0 0.0
        %3546 = vmatprep.subr.mxu0 0.0
        %3547 = vmatpush1.msra.mxu0 0.0
        %3548 = vmatprep.subr.mxu0 0.0
        %3549 = vmatpush1.msra.mxu0 0.0
        %3550 = vmatprep.subr.mxu0 0.0
        %3551 = vmatpush1.msra.mxu0 0.0
        %3552 = vmatprep.subr.mxu0 0.0
        %3553 = vmatpush1.msra.mxu0 0.0
        %3554 = vmatprep.subr.mxu0 0.0
        %3555 = vmatpush1.msra.mxu0 0.0
        %3556 = vmatprep.subr.mxu0 0.0
        %3557 = vmatpush1.msra.mxu0 0.0
        %3558 = vmatprep.subr.mxu0 0.0
        %3559 = vmatpush1.msra.mxu0 0.0
        %3560 = vmatprep.subr.mxu0 0.0
        %3561 = vmatpush1.msra.mxu0 0.0
        %3562 = vmatprep.subr.mxu0 0.0
        %3563 = vmatpush1.msra.mxu0 0.0
        %3564 = vmatprep.subr.mxu0 0.0
        %3565 = vmatpush1.msra.mxu0 0.0
        %3566 = vmatprep.subr.mxu0 0.0
        %3567 = vmatpush1.msra.mxu0 0.0
        %3568 = vmatprep.subr.mxu0 0.0
        %3569 = vmatpush1.msra.mxu0 %v3531
        %3570 = vmatprep.subr.mxu0 0.0
        %3571 = vmatpush1.msra.mxu0 %v3530
        %3572 = vmatprep.subr.mxu0 0.0
        %3573 = vmatpush1.msra.mxu0 %v3529
        %3574 = vmatprep.subr.mxu0 0.0
        %3575 = vmatpush1.msra.mxu0 %v3528
        %3576 = vmatprep.subr.mxu0 0.0
        %3577 = vmatpush2.msra.mxu0 0.0
        %3578 = vmatprep.subr.mxu0 0.0
        %3579 = vmatpush2.msra.mxu0 0.0
        %3580 = vmatprep.subr.mxu0 0.0
        %3581 = vmatpush2.msra.mxu0 0.0
        %3582 = vmatprep.subr.mxu0 0.0
        %3583 = vmatpush2.msra.mxu0 0.0
        %3584 = vmatprep.subr.mxu0 0.0
        %3585 = vmatpush2.msra.mxu0 0.0
        %3586 = vmatprep.subr.mxu0 0.0
        %3587 = vmatpush2.msra.mxu0 0.0
        %3588 = vmatprep.subr.mxu0 0.0
        %3589 = vmatpush2.msra.mxu0 0.0
        %3590 = vmatprep.subr.mxu0 0.0
        %3591 = vmatpush2.msra.mxu0 0.0
        %3592 = vmatprep.subr.mxu0 0.0
        %3593 = vmatpush2.msra.mxu0 0.0
        %3594 = vmatprep.subr.mxu0 0.0
        %3595 = vmatpush2.msra.mxu0 0.0
        %3596 = vmatprep.subr.mxu0 0.0
        %3597 = vmatpush2.msra.mxu0 0.0
        %3598 = vmatprep.subr.mxu0 0.0
        %3599 = vmatpush2.msra.mxu0 0.0
        %3600 = vmatprep.subr.mxu0 0.0
        %3601 = vmatpush2.msra.mxu0 0.0
        %3602 = vmatprep.subr.mxu0 0.0
        %3603 = vmatpush2.msra.mxu0 0.0
        %3604 = vmatprep.subr.mxu0 0.0
        %3605 = vmatpush2.msra.mxu0 0.0
        %3606 = vmatprep.subr.mxu0 0.0
        %3607 = vmatpush2.msra.mxu0 0.0
        %3608 = vmatprep.mubr.f32.mxu0 0.0
        %3609 = vmatmul.mubr.f32.gmra.mxu0 %v3533
        %v3610 = vpop.f32.mrf.mxu0
        %v3611 = vadd.f32 0.0, %v3610
        %v3612 = vpop.f32.mrf.mxu0
        %3613 = vmatprep.mubr.f32.mxu0 0.0
        %3614 = vmatmul.mubr.f32.gmra.mxu0 %v3536
        %v3615 = vpop.f32.mrf.mxu0
        %v3616 = vadd.f32 0.0, %v3615
        %v3617 = vpop.f32.mrf.mxu0
        %3618 = vmatprep.mubr.f32.mxu0 0.0
        %3619 = vmatmul.mubr.f32.gmra.mxu0 %v3539
        %v3620 = vpop.f32.mrf.mxu0
        %v3621 = vadd.f32 0.0, %v3620
        %v3622 = vpop.f32.mrf.mxu0
        %3623 = vmatprep.mubr.f32.mxu0 0.0
        %3624 = vmatmul.mubr.f32.gmra.mxu0 %v3542
        %v3625 = vpop.f32.mrf.mxu0
        %v3626 = vadd.f32 0.0, %v3625
        %v3627 = vpop.f32.mrf.mxu0
        %3628 = vdwg.mxu0
        %vm3629 = vcmp.gt.f32.partialorder %v3611, 0.0
        %vm3630 = vcmp.gt.f32.partialorder %v3616, 0.0
        %vm3631 = vcmp.gt.f32.partialorder %v3621, 0.0
        %vm3632 = vcmp.gt.f32.partialorder %v3626, 0.0
        %v3633 = vmul.f32 %v3611, 0.01
        %v3634 = vmul.f32 %v3616, 0.01
        %v3635 = vmul.f32 %v3621, 0.01
        %v3636 = vmul.f32 %v3626, 0.01
        %v3637 = vsel %vm3629, %v3611, %v3633
        %v3638 = vsel %vm3630, %v3616, %v3634
        %v3639 = vsel %vm3631, %v3621, %v3635
        %v3640 = vsel %vm3632, %v3626, %v3636
        %v3641 = vmul.f32 %v3637, %v647
        %v3642 = vmul.f32 %v3638, %v652
        %v3643 = vmul.f32 %v3639, %v657
        %v3644 = vmul.f32 %v3640, %v662
        %v3646 = vsel %vm723, %v3641, 0
        %v3649 = vsel %vm723, %v3642, 0
        %v3652 = vsel %vm723, %v3643, 0
        %v3655 = vsel %vm723, %v3644, 0
        %3657 = vmatprep.subr.mxu0 0.0
        %3658 = vmatpush1.msra.mxu0 0.0
        %3659 = vmatprep.subr.mxu0 0.0
        %3660 = vmatpush1.msra.mxu0 0.0
        %3661 = vmatprep.subr.mxu0 0.0
        %3662 = vmatpush1.msra.mxu0 0.0
        %3663 = vmatprep.subr.mxu0 0.0
        %3664 = vmatpush1.msra.mxu0 0.0
        %3665 = vmatprep.subr.mxu0 0.0
        %3666 = vmatpush1.msra.mxu0 0.0
        %3667 = vmatprep.subr.mxu0 0.0
        %3668 = vmatpush1.msra.mxu0 0.0
        %3669 = vmatprep.subr.mxu0 0.0
        %3670 = vmatpush1.msra.mxu0 0.0
        %3671 = vmatprep.subr.mxu0 0.0
        %3672 = vmatpush1.msra.mxu0 0.0
        %3673 = vmatprep.subr.mxu0 0.0
        %3674 = vmatpush1.msra.mxu0 0.0
        %3675 = vmatprep.subr.mxu0 0.0
        %3676 = vmatpush1.msra.mxu0 0.0
        %3677 = vmatprep.subr.mxu0 0.0
        %3678 = vmatpush1.msra.mxu0 0.0
        %3679 = vmatprep.subr.mxu0 0.0
        %3680 = vmatpush1.msra.mxu0 0.0
        %3681 = vmatprep.subr.mxu0 0.0
        %3682 = vmatpush1.msra.mxu0 %v3531
        %3683 = vmatprep.subr.mxu0 0.0
        %3684 = vmatpush1.msra.mxu0 %v3530
        %3685 = vmatprep.subr.mxu0 0.0
        %3686 = vmatpush1.msra.mxu0 %v3529
        %3687 = vmatprep.subr.mxu0 0.0
        %3688 = vmatpush1.msra.mxu0 %v3528
        %3689 = vmatprep.subr.mxu0 0.0
        %3690 = vmatpush2.msra.mxu0 0.0
        %3691 = vmatprep.subr.mxu0 0.0
        %3692 = vmatpush2.msra.mxu0 0.0
        %3693 = vmatprep.subr.mxu0 0.0
        %3694 = vmatpush2.msra.mxu0 0.0
        %3695 = vmatprep.subr.mxu0 0.0
        %3696 = vmatpush2.msra.mxu0 0.0
        %3697 = vmatprep.subr.mxu0 0.0
        %3698 = vmatpush2.msra.mxu0 0.0
        %3699 = vmatprep.subr.mxu0 0.0
        %3700 = vmatpush2.msra.mxu0 0.0
        %3701 = vmatprep.subr.mxu0 0.0
        %3702 = vmatpush2.msra.mxu0 0.0
        %3703 = vmatprep.subr.mxu0 0.0
        %3704 = vmatpush2.msra.mxu0 0.0
        %3705 = vmatprep.subr.mxu0 0.0
        %3706 = vmatpush2.msra.mxu0 0.0
        %3707 = vmatprep.subr.mxu0 0.0
        %3708 = vmatpush2.msra.mxu0 0.0
        %3709 = vmatprep.subr.mxu0 0.0
        %3710 = vmatpush2.msra.mxu0 0.0
        %3711 = vmatprep.subr.mxu0 0.0
        %3712 = vmatpush2.msra.mxu0 0.0
        %3713 = vmatprep.subr.mxu0 0.0
        %3714 = vmatpush2.msra.mxu0 0.0
        %3715 = vmatprep.subr.mxu0 0.0
        %3716 = vmatpush2.msra.mxu0 0.0
        %3717 = vmatprep.subr.mxu0 0.0
        %3718 = vmatpush2.msra.mxu0 0.0
        %3719 = vmatprep.subr.mxu0 0.0
        %3720 = vmatpush2.msra.mxu0 0.0
        %3721 = vmatprep.mubr.f32.mxu0 0.0
        %3722 = vmatmul.mubr.f32.gmra.mxu0 %v3646
        %v3723 = vpop.f32.mrf.mxu0
        %v3724 = vadd.f32 0.0, %v3723
        %v3725 = vpop.f32.mrf.mxu0
        %3726 = vmatprep.mubr.f32.mxu0 0.0
        %3727 = vmatmul.mubr.f32.gmra.mxu0 %v3649
        %v3728 = vpop.f32.mrf.mxu0
        %v3729 = vadd.f32 0.0, %v3728
        %v3730 = vpop.f32.mrf.mxu0
        %3731 = vmatprep.mubr.f32.mxu0 0.0
        %3732 = vmatmul.mubr.f32.gmra.mxu0 %v3652
        %v3733 = vpop.f32.mrf.mxu0
        %v3734 = vadd.f32 0.0, %v3733
        %v3735 = vpop.f32.mrf.mxu0
        %3736 = vmatprep.mubr.f32.mxu0 0.0
        %3737 = vmatmul.mubr.f32.gmra.mxu0 %v3655
        %v3738 = vpop.f32.mrf.mxu0
        %v3739 = vadd.f32 0.0, %v3738
        %v3740 = vpop.f32.mrf.mxu0
        %3741 = vdwg.mxu0
        %v3742 = vmul.f32 %v3724, %v647
        %v3743 = vmul.f32 %v3729, %v652
        %v3744 = vmul.f32 %v3734, %v657
        %v3745 = vmul.f32 %v3739, %v662
        %v3746 = vmul.f32 %v3742, 0.9625
        %v3747 = vmul.f32 %v3743, 0.9625
        %v3748 = vmul.f32 %v3744, 0.9625
        %v3749 = vmul.f32 %v3745, 0.9625
        %v3750 = vadd.f32 %v3446, %v3746
        %v3751 = vadd.f32 %v3447, %v3747
        %v3752 = vadd.f32 %v3448, %v3748
        %v3753 = vadd.f32 %v3449, %v3749
        %3754 = vst.msk [vmem:[%s626] sm:$0xff] %vm723, %v3750
        %3755 = vst.msk [vmem:[%s626 + $0x8] sm:$0xff] %vm723, %v3751
        %3756 = vst.msk [vmem:[%s626 + $0x10] sm:$0xff] %vm723, %v3752
        %3757 = vst.msk [vmem:[%s626 + $0x18] sm:$0xff] %vm723, %v3753
        %s3758 = smul.u32 4, %s32
        %p3759 = scmp.lt.s32.totalorder %s3758, 7
        %s3760 = scalar_select %p3759, %s3758, 7
        %s3761 = smul.addr %s3760, 8
        %s3762 = scalar_lea.vmem %s17, %s3761
        // Predicated region
        $region97: #{tpu_custom_call.1} parent=87 // pred_check
          %p3763 = pneg %p422
        $region98: #{tpu_custom_call.1} parent=87 // pred_check_branch
          %3765 = sbr.rel (%p3763) target = $region100
        $region99: #{tpu_custom_call.1} parent=87 // pred_region
          %s3766 = smul.u32 4, %s32
        $region100: #{tpu_custom_call.1} parent=87 // pred_fallthru
          _
      $region88: #{tpu_custom_call.1} parent=5 // pred_fallthru
        _
      %p3767 = scmp.le.s32.totalorder 2, %s27
      // Predicated region
      $region101: #{tpu_custom_call.1} parent=5 // pred_check
        %p3768 = pneg %p3767
      $region102: #{tpu_custom_call.1} parent=5 // pred_check_branch
        %3770 = sbr.rel (%p3768) target = $region104
      $region103: #{tpu_custom_call.1} parent=5 // pred_region
        %s3771 = ssub.s32 %s27, 2
        // Predicated region
        $region105: #{tpu_custom_call.1} parent=103 // pred_check
          %p3772 = pneg %p428
        $region106: #{tpu_custom_call.1} parent=103 // pred_check_branch
          %3774 = sbr.rel (%p3772) target = $region108
        $region107: #{tpu_custom_call.1} parent=103 // pred_region
          %s3775 = smul.u32 4, %s33
          %p3776 = scmp.lt.s32.totalorder %s3775, 7
          %s3777 = scalar_select %p3776, %s3775, 7
          %s3778 = smul.addr %s3777, 8
          %s3779 = scalar_lea.vmem %s17, %s3778
        $region108: #{tpu_custom_call.1} parent=103 // pred_fallthru
          _
      $region104: #{tpu_custom_call.1} parent=5 // pred_fallthru
        _
    $region6: #{tpu_custom_call.1} parent=1 // loop_footer
      %s31 = sadd.s32 1, %s27
    $region7: #{tpu_custom_call.1} parent=1 // loop_footer_branch
      %26 = sbr.rel target = $region3
    $region8: #{tpu_custom_call.1} parent=1 // loop_exit
      _
    %3780 = vsyncpa [#allocation4], 1
    %s3781 = scalar_lea.sflag [#allocation4], 1
    %3782 = vsyncpa %s3781, 1
    %3783 = vsyncpa [#allocation6], 1

</llo_original>
